<compile_context>
chip_gen: v7x
topology: tpu7x:2x2x1
jax: 0.10.0
libtpu: 0.0.40
codegen_flags: <defaults>
</compile_context>

<pallas_src>
import functools

import jax
import jax.numpy as jnp
import numpy as np
from jax import lax
from jax.experimental import pallas as pl
from jax.experimental.pallas import tpu as pltpu  # noqa: F401 (not needed: single-step, default VMEM specs)

MASK_BIAS = -1e30  # additive cross-batch mask; exp(MASK_BIAS - max) underflows to exactly 0.0


# ---------------------------------------------------------------------------
# Fused kernel: ONE invocation == whole batch, all heads.
# ---------------------------------------------------------------------------
def _fused_attention_kernel(x_ref, wqkv_ref, wout_ref, bout_ref, bias_ref, o_ref, *,
                            heads, dim_head, scale):
    """x_ref: (B*N, dim); wqkv_ref: (dim, 3*inner); wout_ref: (inner, dim);
    bout_ref: (1, dim); bias_ref: (B*N, B*N) block-diagonal additive mask;
    o_ref: (B*N, dim).  inner = heads * dim_head."""
    inner = heads * dim_head
    f32 = jnp.float32
    prec = lax.Precision.HIGHEST   # full-f32 MXU accuracy -> tight reference check

    # ---- QKV projection: single MXU matmul over the whole batch.
    qkv = jnp.dot(x_ref[...], wqkv_ref[...],
                  preferred_element_type=f32, precision=prec)      # (BN, 3*inner)

    # Slice q/k/v once at the vreg-aligned 64-lane boundaries; scale the
    # (BN, inner) q block instead of every (BN, BN) logit tile.
    q_all = qkv[:, :inner] * scale
    k_all = qkv[:, inner:2 * inner]
    v_all = qkv[:, 2 * inner:3 * inner]
    bias = bias_ref[...]                                           # (BN, BN)

    # Per-head attention, batch folded onto the sublane axis. Cross-batch
    # logits are pushed to -1e30 so their softmax weights are exactly 0 --
    # bit-equivalent to per-batch attention, with half the MXU pushes.
    head_outs = []
    for h in range(heads):   # heads == 4: static loop == fori_loop(unroll=True)
        lo = h * dim_head
        q = q_all[:, lo:lo + dim_head]
        k = k_all[:, lo:lo + dim_head]
        v = v_all[:, lo:lo + dim_head]

        # q @ k^T as a contraction over the last dims (no materialized transpose).
        dots = lax.dot_general(q, k, (((1,), (1,)), ((), ())),
                               preferred_element_type=f32, precision=prec)
        dots = dots + bias                                         # (BN, BN)

        # Numerically-stable softmax, all f32 (v5e has no bf16 VPU/EUP).
        m = jnp.max(dots, axis=-1, keepdims=True)
        p = jnp.exp(dots - m)
        attn = p / jnp.sum(p, axis=-1, keepdims=True)              # exact divide

        head_outs.append(jnp.dot(attn, v, preferred_element_type=f32,
                                 precision=prec))                  # (BN, dh)

    # 'b h n d -> b n (h d)' == lane-axis concat; output projection is then ONE
    # (BN, inner) @ (inner, dim) matmul instead of `heads` accumulated ones.
    out_all = jnp.concatenate(head_outs, axis=-1)                  # (BN, inner)
    y = jnp.dot(out_all, wout_ref[...], preferred_element_type=f32,
                precision=prec)
    o_ref[...] = (y + bout_ref[...].astype(f32)).astype(o_ref.dtype)


# ---------------------------------------------------------------------------
# Wrapper
# ---------------------------------------------------------------------------
def attention_forward(x, w_qkv, w_out, b_out, *, heads, dim_head):
    B, N, dim = x.shape
    inner = heads * dim_head
    assert w_qkv.shape == (dim, 3 * inner)
    assert w_out.shape == (inner, dim)
    assert b_out.shape == (dim,)
    scale = float(dim_head) ** -0.5
    dtype = x.dtype
    BN = B * N

    # Fold the batch into the row (sublane) axis -> single-step kernel.
    x2d = x.reshape(BN, dim)

    # Additive block-diagonal mask: 0 within a batch element, -1e30 across.
    batch_ids = jnp.arange(BN, dtype=jnp.int32) // N
    same = batch_ids[:, None] == batch_ids[None, :]
    attn_bias = jnp.where(same, 0.0, MASK_BIAS).astype(jnp.float32)

    itemsize = jnp.dtype(dtype).itemsize
    flops = (2 * BN * dim * 3 * inner            # QKV projection
             + 2 * heads * BN * BN * dim_head    # q @ k^T (batch-folded)
             + 2 * heads * BN * BN * dim_head    # attn @ v
             + 2 * BN * inner * dim)             # output projection
    # Weights / bias / mask are DMA'd exactly once (single step).
    bytes_accessed = (itemsize * (x2d.size + w_qkv.size + w_out.size + b_out.size)
                      + 4 * attn_bias.size
                      + itemsize * BN * dim)
    cost = pl.CostEstimate(flops=int(flops),
                           transcendentals=int(heads * BN * BN),
                           bytes_accessed=int(bytes_accessed))

    kernel = functools.partial(_fused_attention_kernel,
                               heads=heads, dim_head=dim_head, scale=scale)

    y2d = pl.pallas_call(
        kernel,
        out_shape=jax.ShapeDtypeStruct((BN, dim), dtype),
        cost_estimate=cost,
    )(x2d, w_qkv, w_out, b_out.reshape(1, dim), attn_bias)

    return y2d.reshape(B, N, dim)


# ---------------------------------------------------------------------------
# Pure-JAX reference for verification
# ---------------------------------------------------------------------------
def attention_reference(x, w_qkv, w_out, b_out, *, heads, dim_head):
    prec = lax.Precision.HIGHEST
    B, N, dim = x.shape
    inner = heads * dim_head
    scale = float(dim_head) ** -0.5
    qkv = jnp.matmul(x, w_qkv, precision=prec)
    q, k, v = jnp.split(qkv, 3, axis=-1)
    reshape = lambda t: t.reshape(B, N, heads, dim_head).transpose(0, 2, 1, 3)
    q, k, v = map(reshape, (q, k, v))
    dots = jnp.einsum("bhid,bhjd->bhij", q, k, precision=prec) * scale
    attn = jax.nn.softmax(dots, axis=-1)
    out = jnp.einsum("bhij,bhjd->bhid", attn, v, precision=prec)
    out = out.transpose(0, 2, 1, 3).reshape(B, N, inner)
    return jnp.matmul(out, w_out, precision=prec) + b_out


# ---------------------------------------------------------------------------
if __name__ == "__main__":
    # Small shapes consistent with the module: dim=32, heads=4, dim_head=16
    B, N, DIM = 2, 8, 32
    HEADS, DIM_HEAD = 4, 16
    INNER = HEADS * DIM_HEAD

    key = jax.random.PRNGKey(0)
    kx, kqkv, kout, kb = jax.random.split(key, 4)

    x = jax.random.normal(kx, (B, N, DIM), dtype=jnp.float32)
    # Deterministic parameter init (Linear weights stored as (in, out)).
    w_qkv = jax.random.normal(kqkv, (DIM, 3 * INNER), dtype=jnp.float32) * (DIM ** -0.5)
    w_out = jax.random.normal(kout, (INNER, DIM), dtype=jnp.float32) * (INNER ** -0.5)
    b_out = jax.random.normal(kb, (DIM,), dtype=jnp.float32) * 0.01

    y = attention_forward(x, w_qkv, w_out, b_out, heads=HEADS, dim_head=DIM_HEAD)
    y = jax.block_until_ready(y)

    y_ref = attention_reference(x, w_qkv, w_out, b_out, heads=HEADS, dim_head=DIM_HEAD)
    # Exact softmax divide + full-f32 matmuls -> tight tolerance again.
    np.testing.assert_allclose(np.asarray(y), np.asarray(y_ref), rtol=1e-4, atol=1e-4)

    print("KERNEL_OK")
</pallas_src>

<mosaic_0001>
module attributes {stable_mosaic.version = 11 : i64} {
  func.func @_fused_attention_kernel(%arg0: memref<16x32xf32, #tpu.memory_space<vmem>>, %arg1: memref<32x192xf32, #tpu.memory_space<vmem>>, %arg2: memref<64x32xf32, #tpu.memory_space<vmem>>, %arg3: memref<1x32xf32, #tpu.memory_space<vmem>>, %arg4: memref<16x16xf32, #tpu.memory_space<vmem>>, %arg5: memref<16x32xf32, #tpu.memory_space<vmem>>) attributes {dimension_semantics = [], scalar_prefetch = 0 : i64, scratch_operands = 0 : i64, tpu.core_type = #tpu.core_type<tc>} {
    %c0 = arith.constant 0 : index
    %c0_0 = arith.constant 0 : index
    %0 = vector.load %arg0[%c0, %c0_0] : memref<16x32xf32, #tpu.memory_space<vmem>>, vector<16x32xf32>
    %c0_1 = arith.constant 0 : index
    %c0_2 = arith.constant 0 : index
    %1 = vector.load %arg1[%c0_1, %c0_2] : memref<32x192xf32, #tpu.memory_space<vmem>>, vector<32x192xf32>
    %cst = arith.constant dense<0.000000e+00> : vector<16x192xf32>
    %2 = tpu.matmul %0, %1, %cst {dimension_numbers = #tpu.dot_dimension_numbers<[1], [0], [0], [1], [0, 0, 1, 1], [], []>, precision = #tpu.contract_precision<fp32>} : vector<16x32xf32>, vector<32x192xf32>, vector<16x192xf32> -> vector<16x192xf32>
    %3 = vector.extract_strided_slice %2 {offsets = [0, 0], sizes = [16, 64], strides = [1, 1]} : vector<16x192xf32> to vector<16x64xf32>
    %cst_3 = arith.constant 2.500000e-01 : f32
    %4 = vector.broadcast %cst_3 : f32 to vector<16x64xf32>
    %5 = arith.mulf %3, %4 : vector<16x64xf32>
    %6 = vector.extract_strided_slice %2 {offsets = [0, 64], sizes = [16, 64], strides = [1, 1]} : vector<16x192xf32> to vector<16x64xf32>
    %7 = vector.extract_strided_slice %2 {offsets = [0, 128], sizes = [16, 64], strides = [1, 1]} : vector<16x192xf32> to vector<16x64xf32>
    %c0_4 = arith.constant 0 : index
    %c0_5 = arith.constant 0 : index
    %8 = vector.load %arg4[%c0_4, %c0_5] : memref<16x16xf32, #tpu.memory_space<vmem>>, vector<16x16xf32>
    %9 = vector.extract_strided_slice %5 {offsets = [0, 0], sizes = [16, 16], strides = [1, 1]} : vector<16x64xf32> to vector<16x16xf32>
    %10 = vector.extract_strided_slice %6 {offsets = [0, 0], sizes = [16, 16], strides = [1, 1]} : vector<16x64xf32> to vector<16x16xf32>
    %11 = vector.extract_strided_slice %7 {offsets = [0, 0], sizes = [16, 16], strides = [1, 1]} : vector<16x64xf32> to vector<16x16xf32>
    %cst_6 = arith.constant dense<0.000000e+00> : vector<16x16xf32>
    %12 = tpu.matmul %9, %10, %cst_6 {dimension_numbers = #tpu.dot_dimension_numbers<[1], [1], [0], [0], [0, 0, 1, 0], [], []>, precision = #tpu.contract_precision<fp32>} : vector<16x16xf32>, vector<16x16xf32>, vector<16x16xf32> -> vector<16x16xf32>
    %13 = arith.addf %12, %8 : vector<16x16xf32>
    %cst_7 = arith.constant dense<0xFF800000> : vector<16xf32>
    %14 = vector.multi_reduction <maximumf>, %13, %cst_7 [1] : vector<16x16xf32> to vector<16xf32>
    %15 = vector.shape_cast %14 : vector<16xf32> to vector<16x1xf32>
    %16 = vector.broadcast %15 : vector<16x1xf32> to vector<16x16xf32>
    %17 = arith.subf %13, %16 : vector<16x16xf32>
    %18 = math.exp %17 : vector<16x16xf32>
    %cst_8 = arith.constant dense<0.000000e+00> : vector<16xf32>
    %19 = vector.multi_reduction <add>, %18, %cst_8 [1] : vector<16x16xf32> to vector<16xf32>
    %20 = vector.shape_cast %19 : vector<16xf32> to vector<16x1xf32>
    %21 = vector.broadcast %20 : vector<16x1xf32> to vector<16x16xf32>
    %22 = arith.divf %18, %21 : vector<16x16xf32>
    %cst_9 = arith.constant dense<0.000000e+00> : vector<16x16xf32>
    %23 = tpu.matmul %22, %11, %cst_9 {dimension_numbers = #tpu.dot_dimension_numbers<[1], [0], [0], [1], [0, 0, 1, 1], [], []>, precision = #tpu.contract_precision<fp32>} : vector<16x16xf32>, vector<16x16xf32>, vector<16x16xf32> -> vector<16x16xf32>
    %24 = vector.extract_strided_slice %5 {offsets = [0, 16], sizes = [16, 16], strides = [1, 1]} : vector<16x64xf32> to vector<16x16xf32>
    %25 = vector.extract_strided_slice %6 {offsets = [0, 16], sizes = [16, 16], strides = [1, 1]} : vector<16x64xf32> to vector<16x16xf32>
    %26 = vector.extract_strided_slice %7 {offsets = [0, 16], sizes = [16, 16], strides = [1, 1]} : vector<16x64xf32> to vector<16x16xf32>
    %cst_10 = arith.constant dense<0.000000e+00> : vector<16x16xf32>
    %27 = tpu.matmul %24, %25, %cst_10 {dimension_numbers = #tpu.dot_dimension_numbers<[1], [1], [0], [0], [0, 0, 1, 0], [], []>, precision = #tpu.contract_precision<fp32>} : vector<16x16xf32>, vector<16x16xf32>, vector<16x16xf32> -> vector<16x16xf32>
    %28 = arith.addf %27, %8 : vector<16x16xf32>
    %cst_11 = arith.constant dense<0xFF800000> : vector<16xf32>
    %29 = vector.multi_reduction <maximumf>, %28, %cst_11 [1] : vector<16x16xf32> to vector<16xf32>
    %30 = vector.shape_cast %29 : vector<16xf32> to vector<16x1xf32>
    %31 = vector.broadcast %30 : vector<16x1xf32> to vector<16x16xf32>
    %32 = arith.subf %28, %31 : vector<16x16xf32>
    %33 = math.exp %32 : vector<16x16xf32>
    %cst_12 = arith.constant dense<0.000000e+00> : vector<16xf32>
    %34 = vector.multi_reduction <add>, %33, %cst_12 [1] : vector<16x16xf32> to vector<16xf32>
    %35 = vector.shape_cast %34 : vector<16xf32> to vector<16x1xf32>
    %36 = vector.broadcast %35 : vector<16x1xf32> to vector<16x16xf32>
    %37 = arith.divf %33, %36 : vector<16x16xf32>
    %cst_13 = arith.constant dense<0.000000e+00> : vector<16x16xf32>
    %38 = tpu.matmul %37, %26, %cst_13 {dimension_numbers = #tpu.dot_dimension_numbers<[1], [0], [0], [1], [0, 0, 1, 1], [], []>, precision = #tpu.contract_precision<fp32>} : vector<16x16xf32>, vector<16x16xf32>, vector<16x16xf32> -> vector<16x16xf32>
    %39 = vector.extract_strided_slice %5 {offsets = [0, 32], sizes = [16, 16], strides = [1, 1]} : vector<16x64xf32> to vector<16x16xf32>
    %40 = vector.extract_strided_slice %6 {offsets = [0, 32], sizes = [16, 16], strides = [1, 1]} : vector<16x64xf32> to vector<16x16xf32>
    %41 = vector.extract_strided_slice %7 {offsets = [0, 32], sizes = [16, 16], strides = [1, 1]} : vector<16x64xf32> to vector<16x16xf32>
    %cst_14 = arith.constant dense<0.000000e+00> : vector<16x16xf32>
    %42 = tpu.matmul %39, %40, %cst_14 {dimension_numbers = #tpu.dot_dimension_numbers<[1], [1], [0], [0], [0, 0, 1, 0], [], []>, precision = #tpu.contract_precision<fp32>} : vector<16x16xf32>, vector<16x16xf32>, vector<16x16xf32> -> vector<16x16xf32>
    %43 = arith.addf %42, %8 : vector<16x16xf32>
    %cst_15 = arith.constant dense<0xFF800000> : vector<16xf32>
    %44 = vector.multi_reduction <maximumf>, %43, %cst_15 [1] : vector<16x16xf32> to vector<16xf32>
    %45 = vector.shape_cast %44 : vector<16xf32> to vector<16x1xf32>
    %46 = vector.broadcast %45 : vector<16x1xf32> to vector<16x16xf32>
    %47 = arith.subf %43, %46 : vector<16x16xf32>
    %48 = math.exp %47 : vector<16x16xf32>
    %cst_16 = arith.constant dense<0.000000e+00> : vector<16xf32>
    %49 = vector.multi_reduction <add>, %48, %cst_16 [1] : vector<16x16xf32> to vector<16xf32>
    %50 = vector.shape_cast %49 : vector<16xf32> to vector<16x1xf32>
    %51 = vector.broadcast %50 : vector<16x1xf32> to vector<16x16xf32>
    %52 = arith.divf %48, %51 : vector<16x16xf32>
    %cst_17 = arith.constant dense<0.000000e+00> : vector<16x16xf32>
    %53 = tpu.matmul %52, %41, %cst_17 {dimension_numbers = #tpu.dot_dimension_numbers<[1], [0], [0], [1], [0, 0, 1, 1], [], []>, precision = #tpu.contract_precision<fp32>} : vector<16x16xf32>, vector<16x16xf32>, vector<16x16xf32> -> vector<16x16xf32>
    %54 = vector.extract_strided_slice %5 {offsets = [0, 48], sizes = [16, 16], strides = [1, 1]} : vector<16x64xf32> to vector<16x16xf32>
    %55 = vector.extract_strided_slice %6 {offsets = [0, 48], sizes = [16, 16], strides = [1, 1]} : vector<16x64xf32> to vector<16x16xf32>
    %56 = vector.extract_strided_slice %7 {offsets = [0, 48], sizes = [16, 16], strides = [1, 1]} : vector<16x64xf32> to vector<16x16xf32>
    %cst_18 = arith.constant dense<0.000000e+00> : vector<16x16xf32>
    %57 = tpu.matmul %54, %55, %cst_18 {dimension_numbers = #tpu.dot_dimension_numbers<[1], [1], [0], [0], [0, 0, 1, 0], [], []>, precision = #tpu.contract_precision<fp32>} : vector<16x16xf32>, vector<16x16xf32>, vector<16x16xf32> -> vector<16x16xf32>
    %58 = arith.addf %57, %8 : vector<16x16xf32>
    %cst_19 = arith.constant dense<0xFF800000> : vector<16xf32>
    %59 = vector.multi_reduction <maximumf>, %58, %cst_19 [1] : vector<16x16xf32> to vector<16xf32>
    %60 = vector.shape_cast %59 : vector<16xf32> to vector<16x1xf32>
    %61 = vector.broadcast %60 : vector<16x1xf32> to vector<16x16xf32>
    %62 = arith.subf %58, %61 : vector<16x16xf32>
    %63 = math.exp %62 : vector<16x16xf32>
    %cst_20 = arith.constant dense<0.000000e+00> : vector<16xf32>
    %64 = vector.multi_reduction <add>, %63, %cst_20 [1] : vector<16x16xf32> to vector<16xf32>
    %65 = vector.shape_cast %64 : vector<16xf32> to vector<16x1xf32>
    %66 = vector.broadcast %65 : vector<16x1xf32> to vector<16x16xf32>
    %67 = arith.divf %63, %66 : vector<16x16xf32>
    %cst_21 = arith.constant dense<0.000000e+00> : vector<16x16xf32>
    %68 = tpu.matmul %67, %56, %cst_21 {dimension_numbers = #tpu.dot_dimension_numbers<[1], [0], [0], [1], [0, 0, 1, 1], [], []>, precision = #tpu.contract_precision<fp32>} : vector<16x16xf32>, vector<16x16xf32>, vector<16x16xf32> -> vector<16x16xf32>
    %69 = tpu.concatenate %23, %38, %53, %68 in 1 : vector<16x16xf32>, vector<16x16xf32>, vector<16x16xf32>, vector<16x16xf32> -> vector<16x64xf32>
    %c0_22 = arith.constant 0 : index
    %c0_23 = arith.constant 0 : index
    %70 = vector.load %arg2[%c0_22, %c0_23] : memref<64x32xf32, #tpu.memory_space<vmem>>, vector<64x32xf32>
    %cst_24 = arith.constant dense<0.000000e+00> : vector<16x32xf32>
    %71 = tpu.matmul %69, %70, %cst_24 {dimension_numbers = #tpu.dot_dimension_numbers<[1], [0], [0], [1], [0, 0, 1, 1], [], []>, precision = #tpu.contract_precision<fp32>} : vector<16x64xf32>, vector<64x32xf32>, vector<16x32xf32> -> vector<16x32xf32>
    %c0_25 = arith.constant 0 : index
    %c0_26 = arith.constant 0 : index
    %72 = vector.load %arg3[%c0_25, %c0_26] : memref<1x32xf32, #tpu.memory_space<vmem>>, vector<1x32xf32>
    %73 = vector.broadcast %72 : vector<1x32xf32> to vector<16x32xf32>
    %74 = arith.addf %71, %73 : vector<16x32xf32>
    %c0_27 = arith.constant 0 : index
    %c0_28 = arith.constant 0 : index
    %75 = vector.load %arg5[%c0_27, %c0_28] : memref<16x32xf32, #tpu.memory_space<vmem>>, vector<16x32xf32>
    tpu.vector_store %arg5[%c0_27, %c0_28], %74 {strides = array<i32>} : memref<16x32xf32, #tpu.memory_space<vmem>>, vector<16x32xf32>,
    return
  }
}

</mosaic_0001>

<llo_original>
// kernel: tpu_custom_call.1
$region0: #{tpu_custom_call.1}
  #allocation0 [shape = 'u32[]', space=smem, size = 0x4, offset = 0x4, fixed_abs, tag = 'smem constant byte address 0x4 - core index']
  #allocation1 [shape = 'u32[144,128]{1,0:T(1,128)}', space=vmem, size = 0x12000, scoped, tag = 'internal scratch']
  %s0 = inlined_call_operand.vmem [shape: f32[16,32], index: 0, kind: input, shape index: {}]
  %s1 = inlined_call_operand.vmem [shape: f32[32,192], index: 1, kind: input, shape index: {}]
  %s2 = inlined_call_operand.vmem [shape: f32[64,32], index: 2, kind: input, shape index: {}]
  %s3 = inlined_call_operand.vmem [shape: f32[1,32], index: 3, kind: input, shape index: {}]
  %s4 = inlined_call_operand.vmem [shape: f32[16,16], index: 4, kind: input, shape index: {}]
  %s5 = inlined_call_operand.hbm [shape: f32[16,32], index: 5, kind: output, shape index: {}]
  %s6 = sld [smem:[#allocation0]]
  $region30: #{tpu_custom_call.1} parent=0
    _
  %s8 = ssub.s32 1, %s6
  %s9 = scalar_select 0, %s8, %s6
  $region1: #{tpu_custom_call.1} parent=0
    #allocation2 [shape = 'u8[8192]{0}', space=vmem, size = 0x2000, scoped, tag = 'output window, operand 0, single buffered']
    #allocation3 [shape = 's32[1]{0}', space=sflag, size = 0x4, scoped, tag = 'scoped memory for tpu_custom_call.1']
    %10 = vsyncpa [#allocation3], 0
    // Predicated region
    $region2: #{tpu_custom_call.1} parent=1 // pred_check
      _
    $region3: #{tpu_custom_call.1} parent=1 // pred_check_branch
      %12 = sbr.rel (0) target = $region5
    $region4: #{tpu_custom_call.1} parent=1 // pred_region
      _
    $region5: #{tpu_custom_call.1} parent=1 // pred_fallthru
      _
    // Predicated region
    $region6: #{tpu_custom_call.1} parent=1 // pred_check
      _
    $region7: #{tpu_custom_call.1} parent=1 // pred_check_branch
      %14 = sbr.rel (0) target = $region9
    $region8: #{tpu_custom_call.1} parent=1 // pred_region
      _
    $region9: #{tpu_custom_call.1} parent=1 // pred_fallthru
      _
    // Predicated region
    $region10: #{tpu_custom_call.1} parent=1 // pred_check
      _
    $region11: #{tpu_custom_call.1} parent=1 // pred_check_branch
      %16 = sbr.rel (0) target = $region13
    $region12: #{tpu_custom_call.1} parent=1 // pred_region
      _
    $region13: #{tpu_custom_call.1} parent=1 // pred_fallthru
      _
    // Predicated region
    $region14: #{tpu_custom_call.1} parent=1 // pred_check
      _
    $region15: #{tpu_custom_call.1} parent=1 // pred_check_branch
      %18 = sbr.rel (0) target = $region17
    $region16: #{tpu_custom_call.1} parent=1 // pred_region
      _
    $region17: #{tpu_custom_call.1} parent=1 // pred_fallthru
      _
    // Predicated region
    $region18: #{tpu_custom_call.1} parent=1 // pred_check
      _
    $region19: #{tpu_custom_call.1} parent=1 // pred_check_branch
      %20 = sbr.rel (0) target = $region21
    $region20: #{tpu_custom_call.1} parent=1 // pred_region
      _
    $region21: #{tpu_custom_call.1} parent=1 // pred_fallthru
      _
    %v21 = vld [vmem:[%s0] sm:$0xff]
    %v22 = vld [vmem:[%s0 + $0x8] sm:$0xff]
    %v23 = vld [vmem:[%s1] sm:$0xff]
    %v24 = vld [vmem:[%s1 + $0x8] sm:$0xff]
    %v25 = vld [vmem:[%s1 + $0x10] sm:$0xff]
    %v26 = vld [vmem:[%s1 + $0x18] sm:$0xff]
    %v27 = vld [vmem:[%s1 + $0x20] sm:$0xff]
    %v28 = vld [vmem:[%s1 + $0x28] sm:$0xff]
    %v29 = vld [vmem:[%s1 + $0x30] sm:$0xff]
    %v30 = vld [vmem:[%s1 + $0x38] sm:$0xff]
    %vm31 = vcmask 261120
    %v33 = vsel %vm31, %v21, 0
    %v36 = vsel %vm31, %v22, 0
    %v38 = vand.u32 %v24, 4294901760
    %39 = vmatprep.subr.mxu0 %v38
    %v40 = vand.u32 %v23, 4294901760
    %41 = vmatpush1.msra.mxu0 %v40
    %v42 = vand.u32 %v26, 4294901760
    %43 = vmatprep.subr.mxu0 %v42
    %v44 = vand.u32 %v25, 4294901760
    %45 = vmatpush1.msra.mxu0 %v44
    %v46 = vand.u32 %v28, 4294901760
    %47 = vmatprep.subr.mxu0 %v46
    %v48 = vand.u32 %v27, 4294901760
    %49 = vmatpush1.msra.mxu0 %v48
    %v50 = vand.u32 %v30, 4294901760
    %51 = vmatprep.subr.mxu0 %v50
    %v52 = vand.u32 %v29, 4294901760
    %53 = vmatpush1.msra.mxu0 %v52
    %54 = vmatprep.subr.mxu0 0.0
    %55 = vmatpush1.msra.mxu0 0.0
    %56 = vmatprep.subr.mxu0 0.0
    %57 = vmatpush1.msra.mxu0 0.0
    %58 = vmatprep.subr.mxu0 0.0
    %59 = vmatpush1.msra.mxu0 0.0
    %60 = vmatprep.subr.mxu0 0.0
    %61 = vmatpush1.msra.mxu0 0.0
    %62 = vmatprep.subr.mxu0 0.0
    %63 = vmatpush1.msra.mxu0 0.0
    %64 = vmatprep.subr.mxu0 0.0
    %65 = vmatpush1.msra.mxu0 0.0
    %66 = vmatprep.subr.mxu0 0.0
    %67 = vmatpush1.msra.mxu0 0.0
    %68 = vmatprep.subr.mxu0 0.0
    %69 = vmatpush1.msra.mxu0 0.0
    %70 = vmatprep.subr.mxu0 0.0
    %71 = vmatpush1.msra.mxu0 0.0
    %72 = vmatprep.subr.mxu0 0.0
    %73 = vmatpush1.msra.mxu0 0.0
    %74 = vmatprep.subr.mxu0 0.0
    %75 = vmatpush1.msra.mxu0 0.0
    %76 = vmatprep.subr.mxu0 0.0
    %77 = vmatpush1.msra.mxu0 0.0
    %78 = vmatprep.subr.mxu0 0.0
    %79 = vmatpush1.msra.mxu0 0.0
    %80 = vmatprep.subr.mxu0 0.0
    %81 = vmatpush1.msra.mxu0 0.0
    %82 = vmatprep.subr.mxu0 0.0
    %83 = vmatpush1.msra.mxu0 0.0
    %84 = vmatprep.subr.mxu0 0.0
    %85 = vmatpush1.msra.mxu0 0.0
    %86 = vmatprep.subr.mxu0 0.0
    %87 = vmatpush1.msra.mxu0 0.0
    %88 = vmatprep.subr.mxu0 0.0
    %89 = vmatpush1.msra.mxu0 0.0
    %90 = vmatprep.subr.mxu0 0.0
    %91 = vmatpush1.msra.mxu0 0.0
    %92 = vmatprep.subr.mxu0 0.0
    %93 = vmatpush1.msra.mxu0 0.0
    %94 = vmatprep.subr.mxu0 0.0
    %95 = vmatpush1.msra.mxu0 0.0
    %96 = vmatprep.subr.mxu0 0.0
    %97 = vmatpush1.msra.mxu0 0.0
    %98 = vmatprep.subr.mxu0 0.0
    %99 = vmatpush1.msra.mxu0 0.0
    %100 = vmatprep.subr.mxu0 0.0
    %101 = vmatpush1.msra.mxu0 0.0
    %102 = vmatprep.subr.mxu0 0.0
    %103 = vmatpush1.msra.mxu0 0.0
    %104 = vmatprep.subr.mxu0 0.0
    %105 = vmatpush1.msra.mxu0 0.0
    %106 = vmatprep.subr.mxu0 0.0
    %107 = vmatpush1.msra.mxu0 0.0
    %108 = vmatprep.subr.mxu0 0.0
    %109 = vmatpush1.msra.mxu0 0.0
    %110 = vmatprep.mubr.f32.mxu0 0.0
    %v111 = vand.u32 %v33, 4294901760
    %v112 = vsub.f32 %v33, %v111
    %v113 = vand.u32 %v112, 4294901760
    %v114 = vsub.f32 %v112, %v113
    %v115 = vand.u32 %v114, 4294901760
    %116 = vmatmul.mubr.f32.gmra.mrb[0].mxu0 %v115
    %v117 = vpop.f32.mrb[0].mxu0
    %v118 = vadd.f32 0.0, %v117
    %v119 = vpop.f32.mrb[0].mxu0
    %v120 = vadd.f32 0.0, %v119
    %121 = vmatprep.mubr.f32.mxu0 0.0
    %v122 = vand.u32 %v36, 4294901760
    %v123 = vsub.f32 %v36, %v122
    %v124 = vand.u32 %v123, 4294901760
    %v125 = vsub.f32 %v123, %v124
    %v126 = vand.u32 %v125, 4294901760
    %127 = vmatmul.mubr.f32.gmra.mrb[0].mxu0 %v126
    %v128 = vpop.f32.mrb[0].mxu0
    %v129 = vadd.f32 0.0, %v128
    %v130 = vpop.f32.mrb[0].mxu0
    %v131 = vadd.f32 0.0, %v130
    %132 = vdwg.mxu0
    %v133 = vand.u32 %v24, 4294901760
    %v134 = vsub.f32 %v24, %v133
    %v135 = vand.u32 %v134, 4294901760
    %v136 = vsub.f32 %v134, %v135
    %v137 = vand.u32 %v136, 4294901760
    %138 = vmatprep.subr.mxu0 %v137
    %v139 = vand.u32 %v23, 4294901760
    %v140 = vsub.f32 %v23, %v139
    %v141 = vand.u32 %v140, 4294901760
    %v142 = vsub.f32 %v140, %v141
    %v143 = vand.u32 %v142, 4294901760
    %144 = vmatpush1.msra.mxu0 %v143
    %v145 = vand.u32 %v26, 4294901760
    %v146 = vsub.f32 %v26, %v145
    %v147 = vand.u32 %v146, 4294901760
    %v148 = vsub.f32 %v146, %v147
    %v149 = vand.u32 %v148, 4294901760
    %150 = vmatprep.subr.mxu0 %v149
    %v151 = vand.u32 %v25, 4294901760
    %v152 = vsub.f32 %v25, %v151
    %v153 = vand.u32 %v152, 4294901760
    %v154 = vsub.f32 %v152, %v153
    %v155 = vand.u32 %v154, 4294901760
    %156 = vmatpush1.msra.mxu0 %v155
    %v157 = vand.u32 %v28, 4294901760
    %v158 = vsub.f32 %v28, %v157
    %v159 = vand.u32 %v158, 4294901760
    %v160 = vsub.f32 %v158, %v159
    %v161 = vand.u32 %v160, 4294901760
    %162 = vmatprep.subr.mxu0 %v161
    %v163 = vand.u32 %v27, 4294901760
    %v164 = vsub.f32 %v27, %v163
    %v165 = vand.u32 %v164, 4294901760
    %v166 = vsub.f32 %v164, %v165
    %v167 = vand.u32 %v166, 4294901760
    %168 = vmatpush1.msra.mxu0 %v167
    %v169 = vand.u32 %v30, 4294901760
    %v170 = vsub.f32 %v30, %v169
    %v171 = vand.u32 %v170, 4294901760
    %v172 = vsub.f32 %v170, %v171
    %v173 = vand.u32 %v172, 4294901760
    %174 = vmatprep.subr.mxu0 %v173
    %v175 = vand.u32 %v29, 4294901760
    %v176 = vsub.f32 %v29, %v175
    %v177 = vand.u32 %v176, 4294901760
    %v178 = vsub.f32 %v176, %v177
    %v179 = vand.u32 %v178, 4294901760
    %180 = vmatpush1.msra.mxu0 %v179
    %181 = vmatprep.subr.mxu0 0.0
    %182 = vmatpush1.msra.mxu0 0.0
    %183 = vmatprep.subr.mxu0 0.0
    %184 = vmatpush1.msra.mxu0 0.0
    %185 = vmatprep.subr.mxu0 0.0
    %186 = vmatpush1.msra.mxu0 0.0
    %187 = vmatprep.subr.mxu0 0.0
    %188 = vmatpush1.msra.mxu0 0.0
    %189 = vmatprep.subr.mxu0 0.0
    %190 = vmatpush1.msra.mxu0 0.0
    %191 = vmatprep.subr.mxu0 0.0
    %192 = vmatpush1.msra.mxu0 0.0
    %193 = vmatprep.subr.mxu0 0.0
    %194 = vmatpush1.msra.mxu0 0.0
    %195 = vmatprep.subr.mxu0 0.0
    %196 = vmatpush1.msra.mxu0 0.0
    %197 = vmatprep.subr.mxu0 0.0
    %198 = vmatpush1.msra.mxu0 0.0
    %199 = vmatprep.subr.mxu0 0.0
    %200 = vmatpush1.msra.mxu0 0.0
    %201 = vmatprep.subr.mxu0 0.0
    %202 = vmatpush1.msra.mxu0 0.0
    %203 = vmatprep.subr.mxu0 0.0
    %204 = vmatpush1.msra.mxu0 0.0
    %205 = vmatprep.subr.mxu0 0.0
    %206 = vmatpush1.msra.mxu0 0.0
    %207 = vmatprep.subr.mxu0 0.0
    %208 = vmatpush1.msra.mxu0 0.0
    %209 = vmatprep.subr.mxu0 0.0
    %210 = vmatpush1.msra.mxu0 0.0
    %211 = vmatprep.subr.mxu0 0.0
    %212 = vmatpush1.msra.mxu0 0.0
    %213 = vmatprep.subr.mxu0 0.0
    %214 = vmatpush1.msra.mxu0 0.0
    %215 = vmatprep.subr.mxu0 0.0
    %216 = vmatpush1.msra.mxu0 0.0
    %217 = vmatprep.subr.mxu0 0.0
    %218 = vmatpush1.msra.mxu0 0.0
    %219 = vmatprep.subr.mxu0 0.0
    %220 = vmatpush1.msra.mxu0 0.0
    %221 = vmatprep.subr.mxu0 0.0
    %222 = vmatpush1.msra.mxu0 0.0
    %223 = vmatprep.subr.mxu0 0.0
    %224 = vmatpush1.msra.mxu0 0.0
    %225 = vmatprep.subr.mxu0 0.0
    %226 = vmatpush1.msra.mxu0 0.0
    %227 = vmatprep.subr.mxu0 0.0
    %228 = vmatpush1.msra.mxu0 0.0
    %229 = vmatprep.subr.mxu0 0.0
    %230 = vmatpush1.msra.mxu0 0.0
    %231 = vmatprep.subr.mxu0 0.0
    %232 = vmatpush1.msra.mxu0 0.0
    %233 = vmatprep.subr.mxu0 0.0
    %234 = vmatpush1.msra.mxu0 0.0
    %235 = vmatprep.subr.mxu0 0.0
    %236 = vmatpush1.msra.mxu0 0.0
    %237 = vmatprep.mubr.f32.mxu0 0.0
    %v238 = vand.u32 %v33, 4294901760
    %239 = vmatmul.mubr.f32.gmra.mrb[0].mxu0 %v238
    %v240 = vpop.f32.mrb[0].mxu0
    %v241 = vadd.f32 %v118, %v240
    %v242 = vpop.f32.mrb[0].mxu0
    %v243 = vadd.f32 %v120, %v242
    %244 = vmatprep.mubr.f32.mxu0 0.0
    %v245 = vand.u32 %v36, 4294901760
    %246 = vmatmul.mubr.f32.gmra.mrb[0].mxu0 %v245
    %v247 = vpop.f32.mrb[0].mxu0
    %v248 = vadd.f32 %v129, %v247
    %v249 = vpop.f32.mrb[0].mxu0
    %v250 = vadd.f32 %v131, %v249
    %251 = vdwg.mxu0
    %v252 = vand.u32 %v24, 4294901760
    %v253 = vsub.f32 %v24, %v252
    %254 = vmatprep.subr.mxu0 %v253
    %v255 = vand.u32 %v23, 4294901760
    %v256 = vsub.f32 %v23, %v255
    %257 = vmatpush1.msra.mxu0 %v256
    %v258 = vand.u32 %v26, 4294901760
    %v259 = vsub.f32 %v26, %v258
    %260 = vmatprep.subr.mxu0 %v259
    %v261 = vand.u32 %v25, 4294901760
    %v262 = vsub.f32 %v25, %v261
    %263 = vmatpush1.msra.mxu0 %v262
    %v264 = vand.u32 %v28, 4294901760
    %v265 = vsub.f32 %v28, %v264
    %266 = vmatprep.subr.mxu0 %v265
    %v267 = vand.u32 %v27, 4294901760
    %v268 = vsub.f32 %v27, %v267
    %269 = vmatpush1.msra.mxu0 %v268
    %v270 = vand.u32 %v30, 4294901760
    %v271 = vsub.f32 %v30, %v270
    %272 = vmatprep.subr.mxu0 %v271
    %v273 = vand.u32 %v29, 4294901760
    %v274 = vsub.f32 %v29, %v273
    %275 = vmatpush1.msra.mxu0 %v274
    %276 = vmatprep.subr.mxu0 0.0
    %277 = vmatpush1.msra.mxu0 0.0
    %278 = vmatprep.subr.mxu0 0.0
    %279 = vmatpush1.msra.mxu0 0.0
    %280 = vmatprep.subr.mxu0 0.0
    %281 = vmatpush1.msra.mxu0 0.0
    %282 = vmatprep.subr.mxu0 0.0
    %283 = vmatpush1.msra.mxu0 0.0
    %284 = vmatprep.subr.mxu0 0.0
    %285 = vmatpush1.msra.mxu0 0.0
    %286 = vmatprep.subr.mxu0 0.0
    %287 = vmatpush1.msra.mxu0 0.0
    %288 = vmatprep.subr.mxu0 0.0
    %289 = vmatpush1.msra.mxu0 0.0
    %290 = vmatprep.subr.mxu0 0.0
    %291 = vmatpush1.msra.mxu0 0.0
    %292 = vmatprep.subr.mxu0 0.0
    %293 = vmatpush1.msra.mxu0 0.0
    %294 = vmatprep.subr.mxu0 0.0
    %295 = vmatpush1.msra.mxu0 0.0
    %296 = vmatprep.subr.mxu0 0.0
    %297 = vmatpush1.msra.mxu0 0.0
    %298 = vmatprep.subr.mxu0 0.0
    %299 = vmatpush1.msra.mxu0 0.0
    %300 = vmatprep.subr.mxu0 0.0
    %301 = vmatpush1.msra.mxu0 0.0
    %302 = vmatprep.subr.mxu0 0.0
    %303 = vmatpush1.msra.mxu0 0.0
    %304 = vmatprep.subr.mxu0 0.0
    %305 = vmatpush1.msra.mxu0 0.0
    %306 = vmatprep.subr.mxu0 0.0
    %307 = vmatpush1.msra.mxu0 0.0
    %308 = vmatprep.subr.mxu0 0.0
    %309 = vmatpush1.msra.mxu0 0.0
    %310 = vmatprep.subr.mxu0 0.0
    %311 = vmatpush1.msra.mxu0 0.0
    %312 = vmatprep.subr.mxu0 0.0
    %313 = vmatpush1.msra.mxu0 0.0
    %314 = vmatprep.subr.mxu0 0.0
    %315 = vmatpush1.msra.mxu0 0.0
    %316 = vmatprep.subr.mxu0 0.0
    %317 = vmatpush1.msra.mxu0 0.0
    %318 = vmatprep.subr.mxu0 0.0
    %319 = vmatpush1.msra.mxu0 0.0
    %320 = vmatprep.subr.mxu0 0.0
    %321 = vmatpush1.msra.mxu0 0.0
    %322 = vmatprep.subr.mxu0 0.0
    %323 = vmatpush1.msra.mxu0 0.0
    %324 = vmatprep.subr.mxu0 0.0
    %325 = vmatpush1.msra.mxu0 0.0
    %326 = vmatprep.subr.mxu0 0.0
    %327 = vmatpush1.msra.mxu0 0.0
    %328 = vmatprep.subr.mxu0 0.0
    %329 = vmatpush1.msra.mxu0 0.0
    %330 = vmatprep.subr.mxu0 0.0
    %331 = vmatpush1.msra.mxu0 0.0
    %332 = vmatprep.mubr.f32.mxu0 0.0
    %v333 = vand.u32 %v33, 4294901760
    %v334 = vsub.f32 %v33, %v333
    %335 = vmatmul.mubr.f32.gmra.mrb[0].mxu0 %v334
    %v336 = vpop.f32.mrb[0].mxu0
    %v337 = vadd.f32 %v241, %v336
    %v338 = vpop.f32.mrb[0].mxu0
    %v339 = vadd.f32 %v243, %v338
    %340 = vmatprep.mubr.f32.mxu0 0.0
    %v341 = vand.u32 %v36, 4294901760
    %v342 = vsub.f32 %v36, %v341
    %343 = vmatmul.mubr.f32.gmra.mrb[0].mxu0 %v342
    %v344 = vpop.f32.mrb[0].mxu0
    %v345 = vadd.f32 %v248, %v344
    %v346 = vpop.f32.mrb[0].mxu0
    %v347 = vadd.f32 %v250, %v346
    %348 = vdwg.mxu0
    %v349 = vand.u32 %v24, 4294901760
    %350 = vmatprep.subr.mxu0 %v349
    %v351 = vand.u32 %v23, 4294901760
    %352 = vmatpush1.msra.mxu0 %v351
    %v353 = vand.u32 %v26, 4294901760
    %354 = vmatprep.subr.mxu0 %v353
    %v355 = vand.u32 %v25, 4294901760
    %356 = vmatpush1.msra.mxu0 %v355
    %v357 = vand.u32 %v28, 4294901760
    %358 = vmatprep.subr.mxu0 %v357
    %v359 = vand.u32 %v27, 4294901760
    %360 = vmatpush1.msra.mxu0 %v359
    %v361 = vand.u32 %v30, 4294901760
    %362 = vmatprep.subr.mxu0 %v361
    %v363 = vand.u32 %v29, 4294901760
    %364 = vmatpush1.msra.mxu0 %v363
    %365 = vmatprep.subr.mxu0 0.0
    %366 = vmatpush1.msra.mxu0 0.0
    %367 = vmatprep.subr.mxu0 0.0
    %368 = vmatpush1.msra.mxu0 0.0
    %369 = vmatprep.subr.mxu0 0.0
    %370 = vmatpush1.msra.mxu0 0.0
    %371 = vmatprep.subr.mxu0 0.0
    %372 = vmatpush1.msra.mxu0 0.0
    %373 = vmatprep.subr.mxu0 0.0
    %374 = vmatpush1.msra.mxu0 0.0
    %375 = vmatprep.subr.mxu0 0.0
    %376 = vmatpush1.msra.mxu0 0.0
    %377 = vmatprep.subr.mxu0 0.0
    %378 = vmatpush1.msra.mxu0 0.0
    %379 = vmatprep.subr.mxu0 0.0
    %380 = vmatpush1.msra.mxu0 0.0
    %381 = vmatprep.subr.mxu0 0.0
    %382 = vmatpush1.msra.mxu0 0.0
    %383 = vmatprep.subr.mxu0 0.0
    %384 = vmatpush1.msra.mxu0 0.0
    %385 = vmatprep.subr.mxu0 0.0
    %386 = vmatpush1.msra.mxu0 0.0
    %387 = vmatprep.subr.mxu0 0.0
    %388 = vmatpush1.msra.mxu0 0.0
    %389 = vmatprep.subr.mxu0 0.0
    %390 = vmatpush1.msra.mxu0 0.0
    %391 = vmatprep.subr.mxu0 0.0
    %392 = vmatpush1.msra.mxu0 0.0
    %393 = vmatprep.subr.mxu0 0.0
    %394 = vmatpush1.msra.mxu0 0.0
    %395 = vmatprep.subr.mxu0 0.0
    %396 = vmatpush1.msra.mxu0 0.0
    %397 = vmatprep.subr.mxu0 0.0
    %398 = vmatpush1.msra.mxu0 0.0
    %399 = vmatprep.subr.mxu0 0.0
    %400 = vmatpush1.msra.mxu0 0.0
    %401 = vmatprep.subr.mxu0 0.0
    %402 = vmatpush1.msra.mxu0 0.0
    %403 = vmatprep.subr.mxu0 0.0
    %404 = vmatpush1.msra.mxu0 0.0
    %405 = vmatprep.subr.mxu0 0.0
    %406 = vmatpush1.msra.mxu0 0.0
    %407 = vmatprep.subr.mxu0 0.0
    %408 = vmatpush1.msra.mxu0 0.0
    %409 = vmatprep.subr.mxu0 0.0
    %410 = vmatpush1.msra.mxu0 0.0
    %411 = vmatprep.subr.mxu0 0.0
    %412 = vmatpush1.msra.mxu0 0.0
    %413 = vmatprep.subr.mxu0 0.0
    %414 = vmatpush1.msra.mxu0 0.0
    %415 = vmatprep.subr.mxu0 0.0
    %416 = vmatpush1.msra.mxu0 0.0
    %417 = vmatprep.subr.mxu0 0.0
    %418 = vmatpush1.msra.mxu0 0.0
    %419 = vmatprep.subr.mxu0 0.0
    %420 = vmatpush1.msra.mxu0 0.0
    %421 = vmatprep.mubr.f32.mxu0 0.0
    %v422 = vand.u32 %v33, 4294901760
    %v423 = vsub.f32 %v33, %v422
    %v424 = vand.u32 %v423, 4294901760
    %425 = vmatmul.mubr.f32.gmra.mrb[0].mxu0 %v424
    %v426 = vpop.f32.mrb[0].mxu0
    %v427 = vadd.f32 %v337, %v426
    %v428 = vpop.f32.mrb[0].mxu0
    %v429 = vadd.f32 %v339, %v428
    %430 = vmatprep.mubr.f32.mxu0 0.0
    %v431 = vand.u32 %v36, 4294901760
    %v432 = vsub.f32 %v36, %v431
    %v433 = vand.u32 %v432, 4294901760
    %434 = vmatmul.mubr.f32.gmra.mrb[0].mxu0 %v433
    %v435 = vpop.f32.mrb[0].mxu0
    %v436 = vadd.f32 %v345, %v435
    %v437 = vpop.f32.mrb[0].mxu0
    %v438 = vadd.f32 %v347, %v437
    %439 = vdwg.mxu0
    %v440 = vand.u32 %v24, 4294901760
    %v441 = vsub.f32 %v24, %v440
    %v442 = vand.u32 %v441, 4294901760
    %443 = vmatprep.subr.mxu0 %v442
    %v444 = vand.u32 %v23, 4294901760
    %v445 = vsub.f32 %v23, %v444
    %v446 = vand.u32 %v445, 4294901760
    %447 = vmatpush1.msra.mxu0 %v446
    %v448 = vand.u32 %v26, 4294901760
    %v449 = vsub.f32 %v26, %v448
    %v450 = vand.u32 %v449, 4294901760
    %451 = vmatprep.subr.mxu0 %v450
    %v452 = vand.u32 %v25, 4294901760
    %v453 = vsub.f32 %v25, %v452
    %v454 = vand.u32 %v453, 4294901760
    %455 = vmatpush1.msra.mxu0 %v454
    %v456 = vand.u32 %v28, 4294901760
    %v457 = vsub.f32 %v28, %v456
    %v458 = vand.u32 %v457, 4294901760
    %459 = vmatprep.subr.mxu0 %v458
    %v460 = vand.u32 %v27, 4294901760
    %v461 = vsub.f32 %v27, %v460
    %v462 = vand.u32 %v461, 4294901760
    %463 = vmatpush1.msra.mxu0 %v462
    %v464 = vand.u32 %v30, 4294901760
    %v465 = vsub.f32 %v30, %v464
    %v466 = vand.u32 %v465, 4294901760
    %467 = vmatprep.subr.mxu0 %v466
    %v468 = vand.u32 %v29, 4294901760
    %v469 = vsub.f32 %v29, %v468
    %v470 = vand.u32 %v469, 4294901760
    %471 = vmatpush1.msra.mxu0 %v470
    %472 = vmatprep.subr.mxu0 0.0
    %473 = vmatpush1.msra.mxu0 0.0
    %474 = vmatprep.subr.mxu0 0.0
    %475 = vmatpush1.msra.mxu0 0.0
    %476 = vmatprep.subr.mxu0 0.0
    %477 = vmatpush1.msra.mxu0 0.0
    %478 = vmatprep.subr.mxu0 0.0
    %479 = vmatpush1.msra.mxu0 0.0
    %480 = vmatprep.subr.mxu0 0.0
    %481 = vmatpush1.msra.mxu0 0.0
    %482 = vmatprep.subr.mxu0 0.0
    %483 = vmatpush1.msra.mxu0 0.0
    %484 = vmatprep.subr.mxu0 0.0
    %485 = vmatpush1.msra.mxu0 0.0
    %486 = vmatprep.subr.mxu0 0.0
    %487 = vmatpush1.msra.mxu0 0.0
    %488 = vmatprep.subr.mxu0 0.0
    %489 = vmatpush1.msra.mxu0 0.0
    %490 = vmatprep.subr.mxu0 0.0
    %491 = vmatpush1.msra.mxu0 0.0
    %492 = vmatprep.subr.mxu0 0.0
    %493 = vmatpush1.msra.mxu0 0.0
    %494 = vmatprep.subr.mxu0 0.0
    %495 = vmatpush1.msra.mxu0 0.0
    %496 = vmatprep.subr.mxu0 0.0
    %497 = vmatpush1.msra.mxu0 0.0
    %498 = vmatprep.subr.mxu0 0.0
    %499 = vmatpush1.msra.mxu0 0.0
    %500 = vmatprep.subr.mxu0 0.0
    %501 = vmatpush1.msra.mxu0 0.0
    %502 = vmatprep.subr.mxu0 0.0
    %503 = vmatpush1.msra.mxu0 0.0
    %504 = vmatprep.subr.mxu0 0.0
    %505 = vmatpush1.msra.mxu0 0.0
    %506 = vmatprep.subr.mxu0 0.0
    %507 = vmatpush1.msra.mxu0 0.0
    %508 = vmatprep.subr.mxu0 0.0
    %509 = vmatpush1.msra.mxu0 0.0
    %510 = vmatprep.subr.mxu0 0.0
    %511 = vmatpush1.msra.mxu0 0.0
    %512 = vmatprep.subr.mxu0 0.0
    %513 = vmatpush1.msra.mxu0 0.0
    %514 = vmatprep.subr.mxu0 0.0
    %515 = vmatpush1.msra.mxu0 0.0
    %516 = vmatprep.subr.mxu0 0.0
    %517 = vmatpush1.msra.mxu0 0.0
    %518 = vmatprep.subr.mxu0 0.0
    %519 = vmatpush1.msra.mxu0 0.0
    %520 = vmatprep.subr.mxu0 0.0
    %521 = vmatpush1.msra.mxu0 0.0
    %522 = vmatprep.subr.mxu0 0.0
    %523 = vmatpush1.msra.mxu0 0.0
    %524 = vmatprep.subr.mxu0 0.0
    %525 = vmatpush1.msra.mxu0 0.0
    %526 = vmatprep.subr.mxu0 0.0
    %527 = vmatpush1.msra.mxu0 0.0
    %528 = vmatprep.mubr.f32.mxu0 0.0
    %v529 = vand.u32 %v33, 4294901760
    %530 = vmatmul.mubr.f32.gmra.mrb[0].mxu0 %v529
    %v531 = vpop.f32.mrb[0].mxu0
    %v532 = vadd.f32 %v427, %v531
    %v533 = vpop.f32.mrb[0].mxu0
    %v534 = vadd.f32 %v429, %v533
    %535 = vmatprep.mubr.f32.mxu0 0.0
    %v536 = vand.u32 %v36, 4294901760
    %537 = vmatmul.mubr.f32.gmra.mrb[0].mxu0 %v536
    %v538 = vpop.f32.mrb[0].mxu0
    %v539 = vadd.f32 %v436, %v538
    %v540 = vpop.f32.mrb[0].mxu0
    %v541 = vadd.f32 %v438, %v540
    %542 = vdwg.mxu0
    %v543 = vand.u32 %v24, 4294901760
    %544 = vmatprep.subr.mxu0 %v543
    %v545 = vand.u32 %v23, 4294901760
    %546 = vmatpush1.msra.mxu0 %v545
    %v547 = vand.u32 %v26, 4294901760
    %548 = vmatprep.subr.mxu0 %v547
    %v549 = vand.u32 %v25, 4294901760
    %550 = vmatpush1.msra.mxu0 %v549
    %v551 = vand.u32 %v28, 4294901760
    %552 = vmatprep.subr.mxu0 %v551
    %v553 = vand.u32 %v27, 4294901760
    %554 = vmatpush1.msra.mxu0 %v553
    %v555 = vand.u32 %v30, 4294901760
    %556 = vmatprep.subr.mxu0 %v555
    %v557 = vand.u32 %v29, 4294901760
    %558 = vmatpush1.msra.mxu0 %v557
    %559 = vmatprep.subr.mxu0 0.0
    %560 = vmatpush1.msra.mxu0 0.0
    %561 = vmatprep.subr.mxu0 0.0
    %562 = vmatpush1.msra.mxu0 0.0
    %563 = vmatprep.subr.mxu0 0.0
    %564 = vmatpush1.msra.mxu0 0.0
    %565 = vmatprep.subr.mxu0 0.0
    %566 = vmatpush1.msra.mxu0 0.0
    %567 = vmatprep.subr.mxu0 0.0
    %568 = vmatpush1.msra.mxu0 0.0
    %569 = vmatprep.subr.mxu0 0.0
    %570 = vmatpush1.msra.mxu0 0.0
    %571 = vmatprep.subr.mxu0 0.0
    %572 = vmatpush1.msra.mxu0 0.0
    %573 = vmatprep.subr.mxu0 0.0
    %574 = vmatpush1.msra.mxu0 0.0
    %575 = vmatprep.subr.mxu0 0.0
    %576 = vmatpush1.msra.mxu0 0.0
    %577 = vmatprep.subr.mxu0 0.0
    %578 = vmatpush1.msra.mxu0 0.0
    %579 = vmatprep.subr.mxu0 0.0
    %580 = vmatpush1.msra.mxu0 0.0
    %581 = vmatprep.subr.mxu0 0.0
    %582 = vmatpush1.msra.mxu0 0.0
    %583 = vmatprep.subr.mxu0 0.0
    %584 = vmatpush1.msra.mxu0 0.0
    %585 = vmatprep.subr.mxu0 0.0
    %586 = vmatpush1.msra.mxu0 0.0
    %587 = vmatprep.subr.mxu0 0.0
    %588 = vmatpush1.msra.mxu0 0.0
    %589 = vmatprep.subr.mxu0 0.0
    %590 = vmatpush1.msra.mxu0 0.0
    %591 = vmatprep.subr.mxu0 0.0
    %592 = vmatpush1.msra.mxu0 0.0
    %593 = vmatprep.subr.mxu0 0.0
    %594 = vmatpush1.msra.mxu0 0.0
    %595 = vmatprep.subr.mxu0 0.0
    %596 = vmatpush1.msra.mxu0 0.0
    %597 = vmatprep.subr.mxu0 0.0
    %598 = vmatpush1.msra.mxu0 0.0
    %599 = vmatprep.subr.mxu0 0.0
    %600 = vmatpush1.msra.mxu0 0.0
    %601 = vmatprep.subr.mxu0 0.0
    %602 = vmatpush1.msra.mxu0 0.0
    %603 = vmatprep.subr.mxu0 0.0
    %604 = vmatpush1.msra.mxu0 0.0
    %605 = vmatprep.subr.mxu0 0.0
    %606 = vmatpush1.msra.mxu0 0.0
    %607 = vmatprep.subr.mxu0 0.0
    %608 = vmatpush1.msra.mxu0 0.0
    %609 = vmatprep.subr.mxu0 0.0
    %610 = vmatpush1.msra.mxu0 0.0
    %611 = vmatprep.subr.mxu0 0.0
    %612 = vmatpush1.msra.mxu0 0.0
    %613 = vmatprep.subr.mxu0 0.0
    %614 = vmatpush1.msra.mxu0 0.0
    %615 = vmatprep.mubr.f32.mxu0 0.0
    %v616 = vand.u32 %v33, 4294901760
    %617 = vmatmul.mubr.f32.gmra.mrb[0].mxu0 %v616
    %v618 = vpop.f32.mrb[0].mxu0
    %v619 = vadd.f32 %v532, %v618
    %v620 = vpop.f32.mrb[0].mxu0
    %v621 = vadd.f32 %v534, %v620
    %622 = vmatprep.mubr.f32.mxu0 0.0
    %v623 = vand.u32 %v36, 4294901760
    %624 = vmatmul.mubr.f32.gmra.mrb[0].mxu0 %v623
    %v625 = vpop.f32.mrb[0].mxu0
    %v626 = vadd.f32 %v539, %v625
    %v627 = vpop.f32.mrb[0].mxu0
    %v628 = vadd.f32 %v541, %v627
    %629 = vdwg.mxu0
    %v630 = vmul.f32 %v619, 0.25
    %v631 = vmul.f32 %v626, 0.25
    %v632 = vld [vmem:[%s4] sm:$0xff]
    %v633 = vld [vmem:[%s4 + $0x8] sm:$0xff]
    %636 = vrot.lane.b32.xlu0 %v619, 64
    %v637 = vpop.permute.xlu0 %636
    %638 = vrot.lane.b32.xlu0 %v626, 64
    %v639 = vpop.permute.xlu0 %638
    %vm640 = vcmask 130048
    %v642 = vsel %vm640, %v630, 0
    %v645 = vsel %vm640, %v631, 0
    %v647 = vsel %vm640, %v637, 0
    %v649 = vsel %vm640, %v639, 0
    %651 = vmatprep.subr.mxu0 0.0
    %v652 = vand.u32 %v647, 4294901760
    %653 = vmatpush1.xpose.msra.mxu0 %v652
    %654 = vmatprep.subr.mxu0 0.0
    %v655 = vand.u32 %v649, 4294901760
    %656 = vmatpush1.xpose.msra.mxu0 %v655
    %657 = vmatprep.subr.mxu0 0.0
    %658 = vmatpush1.xpose.msra.mxu0 0.0
    %659 = vmatprep.subr.mxu0 0.0
    %660 = vmatpush1.xpose.msra.mxu0 0.0
    %661 = vmatprep.subr.mxu0 0.0
    %662 = vmatpush1.xpose.msra.mxu0 0.0
    %663 = vmatprep.subr.mxu0 0.0
    %664 = vmatpush1.xpose.msra.mxu0 0.0
    %665 = vmatprep.subr.mxu0 0.0
    %666 = vmatpush1.xpose.msra.mxu0 0.0
    %667 = vmatprep.subr.mxu0 0.0
    %668 = vmatpush1.xpose.msra.mxu0 0.0
    %669 = vmatprep.subr.mxu0 0.0
    %670 = vmatpush1.xpose.msra.mxu0 0.0
    %671 = vmatprep.subr.mxu0 0.0
    %672 = vmatpush1.xpose.msra.mxu0 0.0
    %673 = vmatprep.subr.mxu0 0.0
    %674 = vmatpush1.xpose.msra.mxu0 0.0
    %675 = vmatprep.subr.mxu0 0.0
    %676 = vmatpush1.xpose.msra.mxu0 0.0
    %677 = vmatprep.subr.mxu0 0.0
    %678 = vmatpush1.xpose.msra.mxu0 0.0
    %679 = vmatprep.subr.mxu0 0.0
    %680 = vmatpush1.xpose.msra.mxu0 0.0
    %681 = vmatprep.subr.mxu0 0.0
    %682 = vmatpush1.xpose.msra.mxu0 0.0
    %683 = vmatprep.subr.mxu0 0.0
    %684 = vmatpush1.xpose.msra.mxu0 0.0
    %685 = vmatprep.subr.mxu0 0.0
    %686 = vmatpush1.xpose.msra.mxu0 0.0
    %687 = vmatprep.subr.mxu0 0.0
    %688 = vmatpush1.xpose.msra.mxu0 0.0
    %689 = vmatprep.subr.mxu0 0.0
    %690 = vmatpush1.xpose.msra.mxu0 0.0
    %691 = vmatprep.subr.mxu0 0.0
    %692 = vmatpush1.xpose.msra.mxu0 0.0
    %693 = vmatprep.subr.mxu0 0.0
    %694 = vmatpush1.xpose.msra.mxu0 0.0
    %695 = vmatprep.subr.mxu0 0.0
    %696 = vmatpush1.xpose.msra.mxu0 0.0
    %697 = vmatprep.subr.mxu0 0.0
    %698 = vmatpush1.xpose.msra.mxu0 0.0
    %699 = vmatprep.subr.mxu0 0.0
    %700 = vmatpush1.xpose.msra.mxu0 0.0
    %701 = vmatprep.subr.mxu0 0.0
    %702 = vmatpush1.xpose.msra.mxu0 0.0
    %703 = vmatprep.subr.mxu0 0.0
    %704 = vmatpush1.xpose.msra.mxu0 0.0
    %705 = vmatprep.subr.mxu0 0.0
    %706 = vmatpush1.xpose.msra.mxu0 0.0
    %707 = vmatprep.subr.mxu0 0.0
    %708 = vmatpush1.xpose.msra.mxu0 0.0
    %709 = vmatprep.subr.mxu0 0.0
    %710 = vmatpush1.xpose.msra.mxu0 0.0
    %711 = vmatprep.subr.mxu0 0.0
    %712 = vmatpush1.xpose.msra.mxu0 0.0
    %713 = vmatprep.subr.mxu0 0.0
    %714 = vmatpush1.xpose.msra.mxu0 0.0
    %715 = vmatprep.subr.mxu0 0.0
    %716 = vmatpush1.xpose.msra.mxu0 0.0
    %717 = vmatprep.mubr.f32.mxu0 0.0
    %v718 = vand.u32 %v642, 4294901760
    %v719 = vsub.f32 %v642, %v718
    %v720 = vand.u32 %v719, 4294901760
    %v721 = vsub.f32 %v719, %v720
    %v722 = vand.u32 %v721, 4294901760
    %723 = vmatmul.mubr.f32.gmra.mrb[0].mxu0 %v722
    %v724 = vpop.f32.mrb[0].mxu0
    %v725 = vadd.f32 %v632, %v724
    %v726 = vpop.f32.mrb[0].mxu0
    %727 = vmatprep.mubr.f32.mxu0 0.0
    %v728 = vand.u32 %v645, 4294901760
    %v729 = vsub.f32 %v645, %v728
    %v730 = vand.u32 %v729, 4294901760
    %v731 = vsub.f32 %v729, %v730
    %v732 = vand.u32 %v731, 4294901760
    %733 = vmatmul.mubr.f32.gmra.mrb[0].mxu0 %v732
    %v734 = vpop.f32.mrb[0].mxu0
    %v735 = vadd.f32 %v633, %v734
    %v736 = vpop.f32.mrb[0].mxu0
    %737 = vdwg.mxu0
    %738 = vmatprep.subr.mxu0 0.0
    %v739 = vand.u32 %v647, 4294901760
    %v740 = vsub.f32 %v647, %v739
    %v741 = vand.u32 %v740, 4294901760
    %v742 = vsub.f32 %v740, %v741
    %v743 = vand.u32 %v742, 4294901760
    %744 = vmatpush1.xpose.msra.mxu0 %v743
    %745 = vmatprep.subr.mxu0 0.0
    %v746 = vand.u32 %v649, 4294901760
    %v747 = vsub.f32 %v649, %v746
    %v748 = vand.u32 %v747, 4294901760
    %v749 = vsub.f32 %v747, %v748
    %v750 = vand.u32 %v749, 4294901760
    %751 = vmatpush1.xpose.msra.mxu0 %v750
    %752 = vmatprep.subr.mxu0 0.0
    %753 = vmatpush1.xpose.msra.mxu0 0.0
    %754 = vmatprep.subr.mxu0 0.0
    %755 = vmatpush1.xpose.msra.mxu0 0.0
    %756 = vmatprep.subr.mxu0 0.0
    %757 = vmatpush1.xpose.msra.mxu0 0.0
    %758 = vmatprep.subr.mxu0 0.0
    %759 = vmatpush1.xpose.msra.mxu0 0.0
    %760 = vmatprep.subr.mxu0 0.0
    %761 = vmatpush1.xpose.msra.mxu0 0.0
    %762 = vmatprep.subr.mxu0 0.0
    %763 = vmatpush1.xpose.msra.mxu0 0.0
    %764 = vmatprep.subr.mxu0 0.0
    %765 = vmatpush1.xpose.msra.mxu0 0.0
    %766 = vmatprep.subr.mxu0 0.0
    %767 = vmatpush1.xpose.msra.mxu0 0.0
    %768 = vmatprep.subr.mxu0 0.0
    %769 = vmatpush1.xpose.msra.mxu0 0.0
    %770 = vmatprep.subr.mxu0 0.0
    %771 = vmatpush1.xpose.msra.mxu0 0.0
    %772 = vmatprep.subr.mxu0 0.0
    %773 = vmatpush1.xpose.msra.mxu0 0.0
    %774 = vmatprep.subr.mxu0 0.0
    %775 = vmatpush1.xpose.msra.mxu0 0.0
    %776 = vmatprep.subr.mxu0 0.0
    %777 = vmatpush1.xpose.msra.mxu0 0.0
    %778 = vmatprep.subr.mxu0 0.0
    %779 = vmatpush1.xpose.msra.mxu0 0.0
    %780 = vmatprep.subr.mxu0 0.0
    %781 = vmatpush1.xpose.msra.mxu0 0.0
    %782 = vmatprep.subr.mxu0 0.0
    %783 = vmatpush1.xpose.msra.mxu0 0.0
    %784 = vmatprep.subr.mxu0 0.0
    %785 = vmatpush1.xpose.msra.mxu0 0.0
    %786 = vmatprep.subr.mxu0 0.0
    %787 = vmatpush1.xpose.msra.mxu0 0.0
    %788 = vmatprep.subr.mxu0 0.0
    %789 = vmatpush1.xpose.msra.mxu0 0.0
    %790 = vmatprep.subr.mxu0 0.0
    %791 = vmatpush1.xpose.msra.mxu0 0.0
    %792 = vmatprep.subr.mxu0 0.0
    %793 = vmatpush1.xpose.msra.mxu0 0.0
    %794 = vmatprep.subr.mxu0 0.0
    %795 = vmatpush1.xpose.msra.mxu0 0.0
    %796 = vmatprep.subr.mxu0 0.0
    %797 = vmatpush1.xpose.msra.mxu0 0.0
    %798 = vmatprep.subr.mxu0 0.0
    %799 = vmatpush1.xpose.msra.mxu0 0.0
    %800 = vmatprep.subr.mxu0 0.0
    %801 = vmatpush1.xpose.msra.mxu0 0.0
    %802 = vmatprep.subr.mxu0 0.0
    %803 = vmatpush1.xpose.msra.mxu0 0.0
    %804 = vmatprep.subr.mxu0 0.0
    %805 = vmatpush1.xpose.msra.mxu0 0.0
    %806 = vmatprep.subr.mxu0 0.0
    %807 = vmatpush1.xpose.msra.mxu0 0.0
    %808 = vmatprep.subr.mxu0 0.0
    %809 = vmatpush1.xpose.msra.mxu0 0.0
    %810 = vmatprep.subr.mxu0 0.0
    %811 = vmatpush1.xpose.msra.mxu0 0.0
    %812 = vmatprep.mubr.f32.mxu0 0.0
    %v813 = vand.u32 %v642, 4294901760
    %814 = vmatmul.mubr.f32.gmra.mrb[0].mxu0 %v813
    %v815 = vpop.f32.mrb[0].mxu0
    %v816 = vadd.f32 %v725, %v815
    %v817 = vpop.f32.mrb[0].mxu0
    %818 = vmatprep.mubr.f32.mxu0 0.0
    %v819 = vand.u32 %v645, 4294901760
    %820 = vmatmul.mubr.f32.gmra.mrb[0].mxu0 %v819
    %v821 = vpop.f32.mrb[0].mxu0
    %v822 = vadd.f32 %v735, %v821
    %v823 = vpop.f32.mrb[0].mxu0
    %824 = vdwg.mxu0
    %825 = vmatprep.subr.mxu0 0.0
    %v826 = vand.u32 %v647, 4294901760
    %v827 = vsub.f32 %v647, %v826
    %828 = vmatpush1.xpose.msra.mxu0 %v827
    %829 = vmatprep.subr.mxu0 0.0
    %v830 = vand.u32 %v649, 4294901760
    %v831 = vsub.f32 %v649, %v830
    %832 = vmatpush1.xpose.msra.mxu0 %v831
    %833 = vmatprep.subr.mxu0 0.0
    %834 = vmatpush1.xpose.msra.mxu0 0.0
    %835 = vmatprep.subr.mxu0 0.0
    %836 = vmatpush1.xpose.msra.mxu0 0.0
    %837 = vmatprep.subr.mxu0 0.0
    %838 = vmatpush1.xpose.msra.mxu0 0.0
    %839 = vmatprep.subr.mxu0 0.0
    %840 = vmatpush1.xpose.msra.mxu0 0.0
    %841 = vmatprep.subr.mxu0 0.0
    %842 = vmatpush1.xpose.msra.mxu0 0.0
    %843 = vmatprep.subr.mxu0 0.0
    %844 = vmatpush1.xpose.msra.mxu0 0.0
    %845 = vmatprep.subr.mxu0 0.0
    %846 = vmatpush1.xpose.msra.mxu0 0.0
    %847 = vmatprep.subr.mxu0 0.0
    %848 = vmatpush1.xpose.msra.mxu0 0.0
    %849 = vmatprep.subr.mxu0 0.0
    %850 = vmatpush1.xpose.msra.mxu0 0.0
    %851 = vmatprep.subr.mxu0 0.0
    %852 = vmatpush1.xpose.msra.mxu0 0.0
    %853 = vmatprep.subr.mxu0 0.0
    %854 = vmatpush1.xpose.msra.mxu0 0.0
    %855 = vmatprep.subr.mxu0 0.0
    %856 = vmatpush1.xpose.msra.mxu0 0.0
    %857 = vmatprep.subr.mxu0 0.0
    %858 = vmatpush1.xpose.msra.mxu0 0.0
    %859 = vmatprep.subr.mxu0 0.0
    %860 = vmatpush1.xpose.msra.mxu0 0.0
    %861 = vmatprep.subr.mxu0 0.0
    %862 = vmatpush1.xpose.msra.mxu0 0.0
    %863 = vmatprep.subr.mxu0 0.0
    %864 = vmatpush1.xpose.msra.mxu0 0.0
    %865 = vmatprep.subr.mxu0 0.0
    %866 = vmatpush1.xpose.msra.mxu0 0.0
    %867 = vmatprep.subr.mxu0 0.0
    %868 = vmatpush1.xpose.msra.mxu0 0.0
    %869 = vmatprep.subr.mxu0 0.0
    %870 = vmatpush1.xpose.msra.mxu0 0.0
    %871 = vmatprep.subr.mxu0 0.0
    %872 = vmatpush1.xpose.msra.mxu0 0.0
    %873 = vmatprep.subr.mxu0 0.0
    %874 = vmatpush1.xpose.msra.mxu0 0.0
    %875 = vmatprep.subr.mxu0 0.0
    %876 = vmatpush1.xpose.msra.mxu0 0.0
    %877 = vmatprep.subr.mxu0 0.0
    %878 = vmatpush1.xpose.msra.mxu0 0.0
    %879 = vmatprep.subr.mxu0 0.0
    %880 = vmatpush1.xpose.msra.mxu0 0.0
    %881 = vmatprep.subr.mxu0 0.0
    %882 = vmatpush1.xpose.msra.mxu0 0.0
    %883 = vmatprep.subr.mxu0 0.0
    %884 = vmatpush1.xpose.msra.mxu0 0.0
    %885 = vmatprep.subr.mxu0 0.0
    %886 = vmatpush1.xpose.msra.mxu0 0.0
    %887 = vmatprep.subr.mxu0 0.0
    %888 = vmatpush1.xpose.msra.mxu0 0.0
    %889 = vmatprep.subr.mxu0 0.0
    %890 = vmatpush1.xpose.msra.mxu0 0.0
    %891 = vmatprep.subr.mxu0 0.0
    %892 = vmatpush1.xpose.msra.mxu0 0.0
    %893 = vmatprep.mubr.f32.mxu0 0.0
    %v894 = vand.u32 %v642, 4294901760
    %v895 = vsub.f32 %v642, %v894
    %896 = vmatmul.mubr.f32.gmra.mrb[0].mxu0 %v895
    %v897 = vpop.f32.mrb[0].mxu0
    %v898 = vadd.f32 %v816, %v897
    %v899 = vpop.f32.mrb[0].mxu0
    %900 = vmatprep.mubr.f32.mxu0 0.0
    %v901 = vand.u32 %v645, 4294901760
    %v902 = vsub.f32 %v645, %v901
    %903 = vmatmul.mubr.f32.gmra.mrb[0].mxu0 %v902
    %v904 = vpop.f32.mrb[0].mxu0
    %v905 = vadd.f32 %v822, %v904
    %v906 = vpop.f32.mrb[0].mxu0
    %907 = vdwg.mxu0
    %908 = vmatprep.subr.mxu0 0.0
    %v909 = vand.u32 %v647, 4294901760
    %910 = vmatpush1.xpose.msra.mxu0 %v909
    %911 = vmatprep.subr.mxu0 0.0
    %v912 = vand.u32 %v649, 4294901760
    %913 = vmatpush1.xpose.msra.mxu0 %v912
    %914 = vmatprep.subr.mxu0 0.0
    %915 = vmatpush1.xpose.msra.mxu0 0.0
    %916 = vmatprep.subr.mxu0 0.0
    %917 = vmatpush1.xpose.msra.mxu0 0.0
    %918 = vmatprep.subr.mxu0 0.0
    %919 = vmatpush1.xpose.msra.mxu0 0.0
    %920 = vmatprep.subr.mxu0 0.0
    %921 = vmatpush1.xpose.msra.mxu0 0.0
    %922 = vmatprep.subr.mxu0 0.0
    %923 = vmatpush1.xpose.msra.mxu0 0.0
    %924 = vmatprep.subr.mxu0 0.0
    %925 = vmatpush1.xpose.msra.mxu0 0.0
    %926 = vmatprep.subr.mxu0 0.0
    %927 = vmatpush1.xpose.msra.mxu0 0.0
    %928 = vmatprep.subr.mxu0 0.0
    %929 = vmatpush1.xpose.msra.mxu0 0.0
    %930 = vmatprep.subr.mxu0 0.0
    %931 = vmatpush1.xpose.msra.mxu0 0.0
    %932 = vmatprep.subr.mxu0 0.0
    %933 = vmatpush1.xpose.msra.mxu0 0.0
    %934 = vmatprep.subr.mxu0 0.0
    %935 = vmatpush1.xpose.msra.mxu0 0.0
    %936 = vmatprep.subr.mxu0 0.0
    %937 = vmatpush1.xpose.msra.mxu0 0.0
    %938 = vmatprep.subr.mxu0 0.0
    %939 = vmatpush1.xpose.msra.mxu0 0.0
    %940 = vmatprep.subr.mxu0 0.0
    %941 = vmatpush1.xpose.msra.mxu0 0.0
    %942 = vmatprep.subr.mxu0 0.0
    %943 = vmatpush1.xpose.msra.mxu0 0.0
    %944 = vmatprep.subr.mxu0 0.0
    %945 = vmatpush1.xpose.msra.mxu0 0.0
    %946 = vmatprep.subr.mxu0 0.0
    %947 = vmatpush1.xpose.msra.mxu0 0.0
    %948 = vmatprep.subr.mxu0 0.0
    %949 = vmatpush1.xpose.msra.mxu0 0.0
    %950 = vmatprep.subr.mxu0 0.0
    %951 = vmatpush1.xpose.msra.mxu0 0.0
    %952 = vmatprep.subr.mxu0 0.0
    %953 = vmatpush1.xpose.msra.mxu0 0.0
    %954 = vmatprep.subr.mxu0 0.0
    %955 = vmatpush1.xpose.msra.mxu0 0.0
    %956 = vmatprep.subr.mxu0 0.0
    %957 = vmatpush1.xpose.msra.mxu0 0.0
    %958 = vmatprep.subr.mxu0 0.0
    %959 = vmatpush1.xpose.msra.mxu0 0.0
    %960 = vmatprep.subr.mxu0 0.0
    %961 = vmatpush1.xpose.msra.mxu0 0.0
    %962 = vmatprep.subr.mxu0 0.0
    %963 = vmatpush1.xpose.msra.mxu0 0.0
    %964 = vmatprep.subr.mxu0 0.0
    %965 = vmatpush1.xpose.msra.mxu0 0.0
    %966 = vmatprep.subr.mxu0 0.0
    %967 = vmatpush1.xpose.msra.mxu0 0.0
    %968 = vmatprep.subr.mxu0 0.0
    %969 = vmatpush1.xpose.msra.mxu0 0.0
    %970 = vmatprep.subr.mxu0 0.0
    %971 = vmatpush1.xpose.msra.mxu0 0.0
    %972 = vmatprep.subr.mxu0 0.0
    %973 = vmatpush1.xpose.msra.mxu0 0.0
    %974 = vmatprep.mubr.f32.mxu0 0.0
    %v975 = vand.u32 %v642, 4294901760
    %v976 = vsub.f32 %v642, %v975
    %v977 = vand.u32 %v976, 4294901760
    %978 = vmatmul.mubr.f32.gmra.mrb[0].mxu0 %v977
    %v979 = vpop.f32.mrb[0].mxu0
    %v980 = vadd.f32 %v898, %v979
    %v981 = vpop.f32.mrb[0].mxu0
    %982 = vmatprep.mubr.f32.mxu0 0.0
    %v983 = vand.u32 %v645, 4294901760
    %v984 = vsub.f32 %v645, %v983
    %v985 = vand.u32 %v984, 4294901760
    %986 = vmatmul.mubr.f32.gmra.mrb[0].mxu0 %v985
    %v987 = vpop.f32.mrb[0].mxu0
    %v988 = vadd.f32 %v905, %v987
    %v989 = vpop.f32.mrb[0].mxu0
    %990 = vdwg.mxu0
    %991 = vmatprep.subr.mxu0 0.0
    %v992 = vand.u32 %v647, 4294901760
    %v993 = vsub.f32 %v647, %v992
    %v994 = vand.u32 %v993, 4294901760
    %995 = vmatpush1.xpose.msra.mxu0 %v994
    %996 = vmatprep.subr.mxu0 0.0
    %v997 = vand.u32 %v649, 4294901760
    %v998 = vsub.f32 %v649, %v997
    %v999 = vand.u32 %v998, 4294901760
    %1000 = vmatpush1.xpose.msra.mxu0 %v999
    %1001 = vmatprep.subr.mxu0 0.0
    %1002 = vmatpush1.xpose.msra.mxu0 0.0
    %1003 = vmatprep.subr.mxu0 0.0
    %1004 = vmatpush1.xpose.msra.mxu0 0.0
    %1005 = vmatprep.subr.mxu0 0.0
    %1006 = vmatpush1.xpose.msra.mxu0 0.0
    %1007 = vmatprep.subr.mxu0 0.0
    %1008 = vmatpush1.xpose.msra.mxu0 0.0
    %1009 = vmatprep.subr.mxu0 0.0
    %1010 = vmatpush1.xpose.msra.mxu0 0.0
    %1011 = vmatprep.subr.mxu0 0.0
    %1012 = vmatpush1.xpose.msra.mxu0 0.0
    %1013 = vmatprep.subr.mxu0 0.0
    %1014 = vmatpush1.xpose.msra.mxu0 0.0
    %1015 = vmatprep.subr.mxu0 0.0
    %1016 = vmatpush1.xpose.msra.mxu0 0.0
    %1017 = vmatprep.subr.mxu0 0.0
    %1018 = vmatpush1.xpose.msra.mxu0 0.0
    %1019 = vmatprep.subr.mxu0 0.0
    %1020 = vmatpush1.xpose.msra.mxu0 0.0
    %1021 = vmatprep.subr.mxu0 0.0
    %1022 = vmatpush1.xpose.msra.mxu0 0.0
    %1023 = vmatprep.subr.mxu0 0.0
    %1024 = vmatpush1.xpose.msra.mxu0 0.0
    %1025 = vmatprep.subr.mxu0 0.0
    %1026 = vmatpush1.xpose.msra.mxu0 0.0
    %1027 = vmatprep.subr.mxu0 0.0
    %1028 = vmatpush1.xpose.msra.mxu0 0.0
    %1029 = vmatprep.subr.mxu0 0.0
    %1030 = vmatpush1.xpose.msra.mxu0 0.0
    %1031 = vmatprep.subr.mxu0 0.0
    %1032 = vmatpush1.xpose.msra.mxu0 0.0
    %1033 = vmatprep.subr.mxu0 0.0
    %1034 = vmatpush1.xpose.msra.mxu0 0.0
    %1035 = vmatprep.subr.mxu0 0.0
    %1036 = vmatpush1.xpose.msra.mxu0 0.0
    %1037 = vmatprep.subr.mxu0 0.0
    %1038 = vmatpush1.xpose.msra.mxu0 0.0
    %1039 = vmatprep.subr.mxu0 0.0
    %1040 = vmatpush1.xpose.msra.mxu0 0.0
    %1041 = vmatprep.subr.mxu0 0.0
    %1042 = vmatpush1.xpose.msra.mxu0 0.0
    %1043 = vmatprep.subr.mxu0 0.0
    %1044 = vmatpush1.xpose.msra.mxu0 0.0
    %1045 = vmatprep.subr.mxu0 0.0
    %1046 = vmatpush1.xpose.msra.mxu0 0.0
    %1047 = vmatprep.subr.mxu0 0.0
    %1048 = vmatpush1.xpose.msra.mxu0 0.0
    %1049 = vmatprep.subr.mxu0 0.0
    %1050 = vmatpush1.xpose.msra.mxu0 0.0
    %1051 = vmatprep.subr.mxu0 0.0
    %1052 = vmatpush1.xpose.msra.mxu0 0.0
    %1053 = vmatprep.subr.mxu0 0.0
    %1054 = vmatpush1.xpose.msra.mxu0 0.0
    %1055 = vmatprep.subr.mxu0 0.0
    %1056 = vmatpush1.xpose.msra.mxu0 0.0
    %1057 = vmatprep.subr.mxu0 0.0
    %1058 = vmatpush1.xpose.msra.mxu0 0.0
    %1059 = vmatprep.subr.mxu0 0.0
    %1060 = vmatpush1.xpose.msra.mxu0 0.0
    %1061 = vmatprep.mubr.f32.mxu0 0.0
    %v1062 = vand.u32 %v642, 4294901760
    %1063 = vmatmul.mubr.f32.gmra.mrb[0].mxu0 %v1062
    %v1064 = vpop.f32.mrb[0].mxu0
    %v1065 = vadd.f32 %v980, %v1064
    %v1066 = vpop.f32.mrb[0].mxu0
    %1067 = vmatprep.mubr.f32.mxu0 0.0
    %v1068 = vand.u32 %v645, 4294901760
    %1069 = vmatmul.mubr.f32.gmra.mrb[0].mxu0 %v1068
    %v1070 = vpop.f32.mrb[0].mxu0
    %v1071 = vadd.f32 %v988, %v1070
    %v1072 = vpop.f32.mrb[0].mxu0
    %1073 = vdwg.mxu0
    %1074 = vmatprep.subr.mxu0 0.0
    %v1075 = vand.u32 %v647, 4294901760
    %1076 = vmatpush1.xpose.msra.mxu0 %v1075
    %1077 = vmatprep.subr.mxu0 0.0
    %v1078 = vand.u32 %v649, 4294901760
    %1079 = vmatpush1.xpose.msra.mxu0 %v1078
    %1080 = vmatprep.subr.mxu0 0.0
    %1081 = vmatpush1.xpose.msra.mxu0 0.0
    %1082 = vmatprep.subr.mxu0 0.0
    %1083 = vmatpush1.xpose.msra.mxu0 0.0
    %1084 = vmatprep.subr.mxu0 0.0
    %1085 = vmatpush1.xpose.msra.mxu0 0.0
    %1086 = vmatprep.subr.mxu0 0.0
    %1087 = vmatpush1.xpose.msra.mxu0 0.0
    %1088 = vmatprep.subr.mxu0 0.0
    %1089 = vmatpush1.xpose.msra.mxu0 0.0
    %1090 = vmatprep.subr.mxu0 0.0
    %1091 = vmatpush1.xpose.msra.mxu0 0.0
    %1092 = vmatprep.subr.mxu0 0.0
    %1093 = vmatpush1.xpose.msra.mxu0 0.0
    %1094 = vmatprep.subr.mxu0 0.0
    %1095 = vmatpush1.xpose.msra.mxu0 0.0
    %1096 = vmatprep.subr.mxu0 0.0
    %1097 = vmatpush1.xpose.msra.mxu0 0.0
    %1098 = vmatprep.subr.mxu0 0.0
    %1099 = vmatpush1.xpose.msra.mxu0 0.0
    %1100 = vmatprep.subr.mxu0 0.0
    %1101 = vmatpush1.xpose.msra.mxu0 0.0
    %1102 = vmatprep.subr.mxu0 0.0
    %1103 = vmatpush1.xpose.msra.mxu0 0.0
    %1104 = vmatprep.subr.mxu0 0.0
    %1105 = vmatpush1.xpose.msra.mxu0 0.0
    %1106 = vmatprep.subr.mxu0 0.0
    %1107 = vmatpush1.xpose.msra.mxu0 0.0
    %1108 = vmatprep.subr.mxu0 0.0
    %1109 = vmatpush1.xpose.msra.mxu0 0.0
    %1110 = vmatprep.subr.mxu0 0.0
    %1111 = vmatpush1.xpose.msra.mxu0 0.0
    %1112 = vmatprep.subr.mxu0 0.0
    %1113 = vmatpush1.xpose.msra.mxu0 0.0
    %1114 = vmatprep.subr.mxu0 0.0
    %1115 = vmatpush1.xpose.msra.mxu0 0.0
    %1116 = vmatprep.subr.mxu0 0.0
    %1117 = vmatpush1.xpose.msra.mxu0 0.0
    %1118 = vmatprep.subr.mxu0 0.0
    %1119 = vmatpush1.xpose.msra.mxu0 0.0
    %1120 = vmatprep.subr.mxu0 0.0
    %1121 = vmatpush1.xpose.msra.mxu0 0.0
    %1122 = vmatprep.subr.mxu0 0.0
    %1123 = vmatpush1.xpose.msra.mxu0 0.0
    %1124 = vmatprep.subr.mxu0 0.0
    %1125 = vmatpush1.xpose.msra.mxu0 0.0
    %1126 = vmatprep.subr.mxu0 0.0
    %1127 = vmatpush1.xpose.msra.mxu0 0.0
    %1128 = vmatprep.subr.mxu0 0.0
    %1129 = vmatpush1.xpose.msra.mxu0 0.0
    %1130 = vmatprep.subr.mxu0 0.0
    %1131 = vmatpush1.xpose.msra.mxu0 0.0
    %1132 = vmatprep.subr.mxu0 0.0
    %1133 = vmatpush1.xpose.msra.mxu0 0.0
    %1134 = vmatprep.subr.mxu0 0.0
    %1135 = vmatpush1.xpose.msra.mxu0 0.0
    %1136 = vmatprep.subr.mxu0 0.0
    %1137 = vmatpush1.xpose.msra.mxu0 0.0
    %1138 = vmatprep.subr.mxu0 0.0
    %1139 = vmatpush1.xpose.msra.mxu0 0.0
    %1140 = vmatprep.mubr.f32.mxu0 0.0
    %v1141 = vand.u32 %v642, 4294901760
    %1142 = vmatmul.mubr.f32.gmra.mrb[0].mxu0 %v1141
    %v1143 = vpop.f32.mrb[0].mxu0
    %v1144 = vadd.f32 %v1065, %v1143
    %v1145 = vpop.f32.mrb[0].mxu0
    %1146 = vmatprep.mubr.f32.mxu0 0.0
    %v1147 = vand.u32 %v645, 4294901760
    %1148 = vmatmul.mubr.f32.gmra.mrb[0].mxu0 %v1147
    %v1149 = vpop.f32.mrb[0].mxu0
    %v1150 = vadd.f32 %v1071, %v1149
    %v1151 = vpop.f32.mrb[0].mxu0
    %1152 = vdwg.mxu0
    %v1153 = vsel %vm640, %v1144, -inf
    %1154 = vmax.xlane.f32.xlu0 %v1153
    %v1155 = vpop.xlane.xlu0 %1154
    %v1156 = vsel %vm640, %v1150, -inf
    %1157 = vmax.xlane.f32.xlu0 %v1156
    %v1158 = vpop.xlane.xlu0 %1157
    %v1159 = vsub.f32 %v1144, %v1155
    %v1160 = vsub.f32 %v1150, %v1158
    %v1161 = vmul.f32 %v1159, 1.442695
    %v1162 = vpow.pop %v1161
    %v1163 = vmul.f32 %v1160, 1.442695
    %v1164 = vpow.pop %v1163
    %v1165 = vsel %vm640, %v1162, 0.0
    %1166 = vadd.xlane.f32.xlu0 %v1165
    %v1167 = vpop.xlane.xlu0 %1166
    %v1168 = vsel %vm640, %v1164, 0.0
    %1169 = vadd.xlane.f32.xlu0 %v1168
    %v1170 = vpop.xlane.xlu0 %1169
    %v1171 = vrcp.pop %v1167
    %v1172 = vmul.f32 %v1162, %v1171
    %v1173 = vrcp.pop %v1170
    %v1174 = vmul.f32 %v1164, %v1173
    %v1176 = vsel %vm640, %v1172, 0
    %v1179 = vsel %vm640, %v1174, 0
    %1181 = vmatprep.subr.mxu0 0.0
    %v1182 = vand.u32 %v621, 4294901760
    %1183 = vmatpush1.msra.mxu0 %v1182
    %1184 = vmatprep.subr.mxu0 0.0
    %v1185 = vand.u32 %v628, 4294901760
    %1186 = vmatpush1.msra.mxu0 %v1185
    %1187 = vmatprep.subr.mxu0 0.0
    %1188 = vmatpush1.msra.mxu0 0.0
    %1189 = vmatprep.subr.mxu0 0.0
    %1190 = vmatpush1.msra.mxu0 0.0
    %1191 = vmatprep.subr.mxu0 0.0
    %1192 = vmatpush1.msra.mxu0 0.0
    %1193 = vmatprep.subr.mxu0 0.0
    %1194 = vmatpush1.msra.mxu0 0.0
    %1195 = vmatprep.subr.mxu0 0.0
    %1196 = vmatpush1.msra.mxu0 0.0
    %1197 = vmatprep.subr.mxu0 0.0
    %1198 = vmatpush1.msra.mxu0 0.0
    %1199 = vmatprep.subr.mxu0 0.0
    %1200 = vmatpush1.msra.mxu0 0.0
    %1201 = vmatprep.subr.mxu0 0.0
    %1202 = vmatpush1.msra.mxu0 0.0
    %1203 = vmatprep.subr.mxu0 0.0
    %1204 = vmatpush1.msra.mxu0 0.0
    %1205 = vmatprep.subr.mxu0 0.0
    %1206 = vmatpush1.msra.mxu0 0.0
    %1207 = vmatprep.subr.mxu0 0.0
    %1208 = vmatpush1.msra.mxu0 0.0
    %1209 = vmatprep.subr.mxu0 0.0
    %1210 = vmatpush1.msra.mxu0 0.0
    %1211 = vmatprep.subr.mxu0 0.0
    %1212 = vmatpush1.msra.mxu0 0.0
    %1213 = vmatprep.subr.mxu0 0.0
    %1214 = vmatpush1.msra.mxu0 0.0
    %1215 = vmatprep.subr.mxu0 0.0
    %1216 = vmatpush1.msra.mxu0 0.0
    %1217 = vmatprep.subr.mxu0 0.0
    %1218 = vmatpush1.msra.mxu0 0.0
    %1219 = vmatprep.subr.mxu0 0.0
    %1220 = vmatpush1.msra.mxu0 0.0
    %1221 = vmatprep.subr.mxu0 0.0
    %1222 = vmatpush1.msra.mxu0 0.0
    %1223 = vmatprep.subr.mxu0 0.0
    %1224 = vmatpush1.msra.mxu0 0.0
    %1225 = vmatprep.subr.mxu0 0.0
    %1226 = vmatpush1.msra.mxu0 0.0
    %1227 = vmatprep.subr.mxu0 0.0
    %1228 = vmatpush1.msra.mxu0 0.0
    %1229 = vmatprep.subr.mxu0 0.0
    %1230 = vmatpush1.msra.mxu0 0.0
    %1231 = vmatprep.subr.mxu0 0.0
    %1232 = vmatpush1.msra.mxu0 0.0
    %1233 = vmatprep.subr.mxu0 0.0
    %1234 = vmatpush1.msra.mxu0 0.0
    %1235 = vmatprep.subr.mxu0 0.0
    %1236 = vmatpush1.msra.mxu0 0.0
    %1237 = vmatprep.subr.mxu0 0.0
    %1238 = vmatpush1.msra.mxu0 0.0
    %1239 = vmatprep.subr.mxu0 0.0
    %1240 = vmatpush1.msra.mxu0 0.0
    %1241 = vmatprep.subr.mxu0 0.0
    %1242 = vmatpush1.msra.mxu0 0.0
    %1243 = vmatprep.subr.mxu0 0.0
    %1244 = vmatpush1.msra.mxu0 0.0
    %1245 = vmatprep.subr.mxu0 0.0
    %1246 = vmatpush1.msra.mxu0 0.0
    %1247 = vmatprep.mubr.f32.mxu0 0.0
    %v1248 = vand.u32 %v1176, 4294901760
    %v1249 = vsub.f32 %v1176, %v1248
    %v1250 = vand.u32 %v1249, 4294901760
    %v1251 = vsub.f32 %v1249, %v1250
    %v1252 = vand.u32 %v1251, 4294901760
    %1253 = vmatmul.mubr.f32.gmra.mrb[0].mxu0 %v1252
    %v1254 = vpop.f32.mrb[0].mxu0
    %v1255 = vadd.f32 0.0, %v1254
    %v1256 = vpop.f32.mrb[0].mxu0
    %1257 = vmatprep.mubr.f32.mxu0 0.0
    %v1258 = vand.u32 %v1179, 4294901760
    %v1259 = vsub.f32 %v1179, %v1258
    %v1260 = vand.u32 %v1259, 4294901760
    %v1261 = vsub.f32 %v1259, %v1260
    %v1262 = vand.u32 %v1261, 4294901760
    %1263 = vmatmul.mubr.f32.gmra.mrb[0].mxu0 %v1262
    %v1264 = vpop.f32.mrb[0].mxu0
    %v1265 = vadd.f32 0.0, %v1264
    %v1266 = vpop.f32.mrb[0].mxu0
    %1267 = vdwg.mxu0
    %1268 = vmatprep.subr.mxu0 0.0
    %v1269 = vand.u32 %v621, 4294901760
    %v1270 = vsub.f32 %v621, %v1269
    %v1271 = vand.u32 %v1270, 4294901760
    %v1272 = vsub.f32 %v1270, %v1271
    %v1273 = vand.u32 %v1272, 4294901760
    %1274 = vmatpush1.msra.mxu0 %v1273
    %1275 = vmatprep.subr.mxu0 0.0
    %v1276 = vand.u32 %v628, 4294901760
    %v1277 = vsub.f32 %v628, %v1276
    %v1278 = vand.u32 %v1277, 4294901760
    %v1279 = vsub.f32 %v1277, %v1278
    %v1280 = vand.u32 %v1279, 4294901760
    %1281 = vmatpush1.msra.mxu0 %v1280
    %1282 = vmatprep.subr.mxu0 0.0
    %1283 = vmatpush1.msra.mxu0 0.0
    %1284 = vmatprep.subr.mxu0 0.0
    %1285 = vmatpush1.msra.mxu0 0.0
    %1286 = vmatprep.subr.mxu0 0.0
    %1287 = vmatpush1.msra.mxu0 0.0
    %1288 = vmatprep.subr.mxu0 0.0
    %1289 = vmatpush1.msra.mxu0 0.0
    %1290 = vmatprep.subr.mxu0 0.0
    %1291 = vmatpush1.msra.mxu0 0.0
    %1292 = vmatprep.subr.mxu0 0.0
    %1293 = vmatpush1.msra.mxu0 0.0
    %1294 = vmatprep.subr.mxu0 0.0
    %1295 = vmatpush1.msra.mxu0 0.0
    %1296 = vmatprep.subr.mxu0 0.0
    %1297 = vmatpush1.msra.mxu0 0.0
    %1298 = vmatprep.subr.mxu0 0.0
    %1299 = vmatpush1.msra.mxu0 0.0
    %1300 = vmatprep.subr.mxu0 0.0
    %1301 = vmatpush1.msra.mxu0 0.0
    %1302 = vmatprep.subr.mxu0 0.0
    %1303 = vmatpush1.msra.mxu0 0.0
    %1304 = vmatprep.subr.mxu0 0.0
    %1305 = vmatpush1.msra.mxu0 0.0
    %1306 = vmatprep.subr.mxu0 0.0
    %1307 = vmatpush1.msra.mxu0 0.0
    %1308 = vmatprep.subr.mxu0 0.0
    %1309 = vmatpush1.msra.mxu0 0.0
    %1310 = vmatprep.subr.mxu0 0.0
    %1311 = vmatpush1.msra.mxu0 0.0
    %1312 = vmatprep.subr.mxu0 0.0
    %1313 = vmatpush1.msra.mxu0 0.0
    %1314 = vmatprep.subr.mxu0 0.0
    %1315 = vmatpush1.msra.mxu0 0.0
    %1316 = vmatprep.subr.mxu0 0.0
    %1317 = vmatpush1.msra.mxu0 0.0
    %1318 = vmatprep.subr.mxu0 0.0
    %1319 = vmatpush1.msra.mxu0 0.0
    %1320 = vmatprep.subr.mxu0 0.0
    %1321 = vmatpush1.msra.mxu0 0.0
    %1322 = vmatprep.subr.mxu0 0.0
    %1323 = vmatpush1.msra.mxu0 0.0
    %1324 = vmatprep.subr.mxu0 0.0
    %1325 = vmatpush1.msra.mxu0 0.0
    %1326 = vmatprep.subr.mxu0 0.0
    %1327 = vmatpush1.msra.mxu0 0.0
    %1328 = vmatprep.subr.mxu0 0.0
    %1329 = vmatpush1.msra.mxu0 0.0
    %1330 = vmatprep.subr.mxu0 0.0
    %1331 = vmatpush1.msra.mxu0 0.0
    %1332 = vmatprep.subr.mxu0 0.0
    %1333 = vmatpush1.msra.mxu0 0.0
    %1334 = vmatprep.subr.mxu0 0.0
    %1335 = vmatpush1.msra.mxu0 0.0
    %1336 = vmatprep.subr.mxu0 0.0
    %1337 = vmatpush1.msra.mxu0 0.0
    %1338 = vmatprep.subr.mxu0 0.0
    %1339 = vmatpush1.msra.mxu0 0.0
    %1340 = vmatprep.subr.mxu0 0.0
    %1341 = vmatpush1.msra.mxu0 0.0
    %1342 = vmatprep.mubr.f32.mxu0 0.0
    %v1343 = vand.u32 %v1176, 4294901760
    %1344 = vmatmul.mubr.f32.gmra.mrb[0].mxu0 %v1343
    %v1345 = vpop.f32.mrb[0].mxu0
    %v1346 = vadd.f32 %v1255, %v1345
    %v1347 = vpop.f32.mrb[0].mxu0
    %1348 = vmatprep.mubr.f32.mxu0 0.0
    %v1349 = vand.u32 %v1179, 4294901760
    %1350 = vmatmul.mubr.f32.gmra.mrb[0].mxu0 %v1349
    %v1351 = vpop.f32.mrb[0].mxu0
    %v1352 = vadd.f32 %v1265, %v1351
    %v1353 = vpop.f32.mrb[0].mxu0
    %1354 = vdwg.mxu0
    %1355 = vmatprep.subr.mxu0 0.0
    %v1356 = vand.u32 %v621, 4294901760
    %v1357 = vsub.f32 %v621, %v1356
    %1358 = vmatpush1.msra.mxu0 %v1357
    %1359 = vmatprep.subr.mxu0 0.0
    %v1360 = vand.u32 %v628, 4294901760
    %v1361 = vsub.f32 %v628, %v1360
    %1362 = vmatpush1.msra.mxu0 %v1361
    %1363 = vmatprep.subr.mxu0 0.0
    %1364 = vmatpush1.msra.mxu0 0.0
    %1365 = vmatprep.subr.mxu0 0.0
    %1366 = vmatpush1.msra.mxu0 0.0
    %1367 = vmatprep.subr.mxu0 0.0
    %1368 = vmatpush1.msra.mxu0 0.0
    %1369 = vmatprep.subr.mxu0 0.0
    %1370 = vmatpush1.msra.mxu0 0.0
    %1371 = vmatprep.subr.mxu0 0.0
    %1372 = vmatpush1.msra.mxu0 0.0
    %1373 = vmatprep.subr.mxu0 0.0
    %1374 = vmatpush1.msra.mxu0 0.0
    %1375 = vmatprep.subr.mxu0 0.0
    %1376 = vmatpush1.msra.mxu0 0.0
    %1377 = vmatprep.subr.mxu0 0.0
    %1378 = vmatpush1.msra.mxu0 0.0
    %1379 = vmatprep.subr.mxu0 0.0
    %1380 = vmatpush1.msra.mxu0 0.0
    %1381 = vmatprep.subr.mxu0 0.0
    %1382 = vmatpush1.msra.mxu0 0.0
    %1383 = vmatprep.subr.mxu0 0.0
    %1384 = vmatpush1.msra.mxu0 0.0
    %1385 = vmatprep.subr.mxu0 0.0
    %1386 = vmatpush1.msra.mxu0 0.0
    %1387 = vmatprep.subr.mxu0 0.0
    %1388 = vmatpush1.msra.mxu0 0.0
    %1389 = vmatprep.subr.mxu0 0.0
    %1390 = vmatpush1.msra.mxu0 0.0
    %1391 = vmatprep.subr.mxu0 0.0
    %1392 = vmatpush1.msra.mxu0 0.0
    %1393 = vmatprep.subr.mxu0 0.0
    %1394 = vmatpush1.msra.mxu0 0.0
    %1395 = vmatprep.subr.mxu0 0.0
    %1396 = vmatpush1.msra.mxu0 0.0
    %1397 = vmatprep.subr.mxu0 0.0
    %1398 = vmatpush1.msra.mxu0 0.0
    %1399 = vmatprep.subr.mxu0 0.0
    %1400 = vmatpush1.msra.mxu0 0.0
    %1401 = vmatprep.subr.mxu0 0.0
    %1402 = vmatpush1.msra.mxu0 0.0
    %1403 = vmatprep.subr.mxu0 0.0
    %1404 = vmatpush1.msra.mxu0 0.0
    %1405 = vmatprep.subr.mxu0 0.0
    %1406 = vmatpush1.msra.mxu0 0.0
    %1407 = vmatprep.subr.mxu0 0.0
    %1408 = vmatpush1.msra.mxu0 0.0
    %1409 = vmatprep.subr.mxu0 0.0
    %1410 = vmatpush1.msra.mxu0 0.0
    %1411 = vmatprep.subr.mxu0 0.0
    %1412 = vmatpush1.msra.mxu0 0.0
    %1413 = vmatprep.subr.mxu0 0.0
    %1414 = vmatpush1.msra.mxu0 0.0
    %1415 = vmatprep.subr.mxu0 0.0
    %1416 = vmatpush1.msra.mxu0 0.0
    %1417 = vmatprep.subr.mxu0 0.0
    %1418 = vmatpush1.msra.mxu0 0.0
    %1419 = vmatprep.subr.mxu0 0.0
    %1420 = vmatpush1.msra.mxu0 0.0
    %1421 = vmatprep.subr.mxu0 0.0
    %1422 = vmatpush1.msra.mxu0 0.0
    %1423 = vmatprep.mubr.f32.mxu0 0.0
    %v1424 = vand.u32 %v1176, 4294901760
    %v1425 = vsub.f32 %v1176, %v1424
    %1426 = vmatmul.mubr.f32.gmra.mrb[0].mxu0 %v1425
    %v1427 = vpop.f32.mrb[0].mxu0
    %v1428 = vadd.f32 %v1346, %v1427
    %v1429 = vpop.f32.mrb[0].mxu0
    %1430 = vmatprep.mubr.f32.mxu0 0.0
    %v1431 = vand.u32 %v1179, 4294901760
    %v1432 = vsub.f32 %v1179, %v1431
    %1433 = vmatmul.mubr.f32.gmra.mrb[0].mxu0 %v1432
    %v1434 = vpop.f32.mrb[0].mxu0
    %v1435 = vadd.f32 %v1352, %v1434
    %v1436 = vpop.f32.mrb[0].mxu0
    %1437 = vdwg.mxu0
    %1438 = vmatprep.subr.mxu0 0.0
    %v1439 = vand.u32 %v621, 4294901760
    %1440 = vmatpush1.msra.mxu0 %v1439
    %1441 = vmatprep.subr.mxu0 0.0
    %v1442 = vand.u32 %v628, 4294901760
    %1443 = vmatpush1.msra.mxu0 %v1442
    %1444 = vmatprep.subr.mxu0 0.0
    %1445 = vmatpush1.msra.mxu0 0.0
    %1446 = vmatprep.subr.mxu0 0.0
    %1447 = vmatpush1.msra.mxu0 0.0
    %1448 = vmatprep.subr.mxu0 0.0
    %1449 = vmatpush1.msra.mxu0 0.0
    %1450 = vmatprep.subr.mxu0 0.0
    %1451 = vmatpush1.msra.mxu0 0.0
    %1452 = vmatprep.subr.mxu0 0.0
    %1453 = vmatpush1.msra.mxu0 0.0
    %1454 = vmatprep.subr.mxu0 0.0
    %1455 = vmatpush1.msra.mxu0 0.0
    %1456 = vmatprep.subr.mxu0 0.0
    %1457 = vmatpush1.msra.mxu0 0.0
    %1458 = vmatprep.subr.mxu0 0.0
    %1459 = vmatpush1.msra.mxu0 0.0
    %1460 = vmatprep.subr.mxu0 0.0
    %1461 = vmatpush1.msra.mxu0 0.0
    %1462 = vmatprep.subr.mxu0 0.0
    %1463 = vmatpush1.msra.mxu0 0.0
    %1464 = vmatprep.subr.mxu0 0.0
    %1465 = vmatpush1.msra.mxu0 0.0
    %1466 = vmatprep.subr.mxu0 0.0
    %1467 = vmatpush1.msra.mxu0 0.0
    %1468 = vmatprep.subr.mxu0 0.0
    %1469 = vmatpush1.msra.mxu0 0.0
    %1470 = vmatprep.subr.mxu0 0.0
    %1471 = vmatpush1.msra.mxu0 0.0
    %1472 = vmatprep.subr.mxu0 0.0
    %1473 = vmatpush1.msra.mxu0 0.0
    %1474 = vmatprep.subr.mxu0 0.0
    %1475 = vmatpush1.msra.mxu0 0.0
    %1476 = vmatprep.subr.mxu0 0.0
    %1477 = vmatpush1.msra.mxu0 0.0
    %1478 = vmatprep.subr.mxu0 0.0
    %1479 = vmatpush1.msra.mxu0 0.0
    %1480 = vmatprep.subr.mxu0 0.0
    %1481 = vmatpush1.msra.mxu0 0.0
    %1482 = vmatprep.subr.mxu0 0.0
    %1483 = vmatpush1.msra.mxu0 0.0
    %1484 = vmatprep.subr.mxu0 0.0
    %1485 = vmatpush1.msra.mxu0 0.0
    %1486 = vmatprep.subr.mxu0 0.0
    %1487 = vmatpush1.msra.mxu0 0.0
    %1488 = vmatprep.subr.mxu0 0.0
    %1489 = vmatpush1.msra.mxu0 0.0
    %1490 = vmatprep.subr.mxu0 0.0
    %1491 = vmatpush1.msra.mxu0 0.0
    %1492 = vmatprep.subr.mxu0 0.0
    %1493 = vmatpush1.msra.mxu0 0.0
    %1494 = vmatprep.subr.mxu0 0.0
    %1495 = vmatpush1.msra.mxu0 0.0
    %1496 = vmatprep.subr.mxu0 0.0
    %1497 = vmatpush1.msra.mxu0 0.0
    %1498 = vmatprep.subr.mxu0 0.0
    %1499 = vmatpush1.msra.mxu0 0.0
    %1500 = vmatprep.subr.mxu0 0.0
    %1501 = vmatpush1.msra.mxu0 0.0
    %1502 = vmatprep.subr.mxu0 0.0
    %1503 = vmatpush1.msra.mxu0 0.0
    %1504 = vmatprep.mubr.f32.mxu0 0.0
    %v1505 = vand.u32 %v1176, 4294901760
    %v1506 = vsub.f32 %v1176, %v1505
    %v1507 = vand.u32 %v1506, 4294901760
    %1508 = vmatmul.mubr.f32.gmra.mrb[0].mxu0 %v1507
    %v1509 = vpop.f32.mrb[0].mxu0
    %v1510 = vadd.f32 %v1428, %v1509
    %v1511 = vpop.f32.mrb[0].mxu0
    %1512 = vmatprep.mubr.f32.mxu0 0.0
    %v1513 = vand.u32 %v1179, 4294901760
    %v1514 = vsub.f32 %v1179, %v1513
    %v1515 = vand.u32 %v1514, 4294901760
    %1516 = vmatmul.mubr.f32.gmra.mrb[0].mxu0 %v1515
    %v1517 = vpop.f32.mrb[0].mxu0
    %v1518 = vadd.f32 %v1435, %v1517
    %v1519 = vpop.f32.mrb[0].mxu0
    %1520 = vdwg.mxu0
    %1521 = vmatprep.subr.mxu0 0.0
    %v1522 = vand.u32 %v621, 4294901760
    %v1523 = vsub.f32 %v621, %v1522
    %v1524 = vand.u32 %v1523, 4294901760
    %1525 = vmatpush1.msra.mxu0 %v1524
    %1526 = vmatprep.subr.mxu0 0.0
    %v1527 = vand.u32 %v628, 4294901760
    %v1528 = vsub.f32 %v628, %v1527
    %v1529 = vand.u32 %v1528, 4294901760
    %1530 = vmatpush1.msra.mxu0 %v1529
    %1531 = vmatprep.subr.mxu0 0.0
    %1532 = vmatpush1.msra.mxu0 0.0
    %1533 = vmatprep.subr.mxu0 0.0
    %1534 = vmatpush1.msra.mxu0 0.0
    %1535 = vmatprep.subr.mxu0 0.0
    %1536 = vmatpush1.msra.mxu0 0.0
    %1537 = vmatprep.subr.mxu0 0.0
    %1538 = vmatpush1.msra.mxu0 0.0
    %1539 = vmatprep.subr.mxu0 0.0
    %1540 = vmatpush1.msra.mxu0 0.0
    %1541 = vmatprep.subr.mxu0 0.0
    %1542 = vmatpush1.msra.mxu0 0.0
    %1543 = vmatprep.subr.mxu0 0.0
    %1544 = vmatpush1.msra.mxu0 0.0
    %1545 = vmatprep.subr.mxu0 0.0
    %1546 = vmatpush1.msra.mxu0 0.0
    %1547 = vmatprep.subr.mxu0 0.0
    %1548 = vmatpush1.msra.mxu0 0.0
    %1549 = vmatprep.subr.mxu0 0.0
    %1550 = vmatpush1.msra.mxu0 0.0
    %1551 = vmatprep.subr.mxu0 0.0
    %1552 = vmatpush1.msra.mxu0 0.0
    %1553 = vmatprep.subr.mxu0 0.0
    %1554 = vmatpush1.msra.mxu0 0.0
    %1555 = vmatprep.subr.mxu0 0.0
    %1556 = vmatpush1.msra.mxu0 0.0
    %1557 = vmatprep.subr.mxu0 0.0
    %1558 = vmatpush1.msra.mxu0 0.0
    %1559 = vmatprep.subr.mxu0 0.0
    %1560 = vmatpush1.msra.mxu0 0.0
    %1561 = vmatprep.subr.mxu0 0.0
    %1562 = vmatpush1.msra.mxu0 0.0
    %1563 = vmatprep.subr.mxu0 0.0
    %1564 = vmatpush1.msra.mxu0 0.0
    %1565 = vmatprep.subr.mxu0 0.0
    %1566 = vmatpush1.msra.mxu0 0.0
    %1567 = vmatprep.subr.mxu0 0.0
    %1568 = vmatpush1.msra.mxu0 0.0
    %1569 = vmatprep.subr.mxu0 0.0
    %1570 = vmatpush1.msra.mxu0 0.0
    %1571 = vmatprep.subr.mxu0 0.0
    %1572 = vmatpush1.msra.mxu0 0.0
    %1573 = vmatprep.subr.mxu0 0.0
    %1574 = vmatpush1.msra.mxu0 0.0
    %1575 = vmatprep.subr.mxu0 0.0
    %1576 = vmatpush1.msra.mxu0 0.0
    %1577 = vmatprep.subr.mxu0 0.0
    %1578 = vmatpush1.msra.mxu0 0.0
    %1579 = vmatprep.subr.mxu0 0.0
    %1580 = vmatpush1.msra.mxu0 0.0
    %1581 = vmatprep.subr.mxu0 0.0
    %1582 = vmatpush1.msra.mxu0 0.0
    %1583 = vmatprep.subr.mxu0 0.0
    %1584 = vmatpush1.msra.mxu0 0.0
    %1585 = vmatprep.subr.mxu0 0.0
    %1586 = vmatpush1.msra.mxu0 0.0
    %1587 = vmatprep.subr.mxu0 0.0
    %1588 = vmatpush1.msra.mxu0 0.0
    %1589 = vmatprep.subr.mxu0 0.0
    %1590 = vmatpush1.msra.mxu0 0.0
    %1591 = vmatprep.mubr.f32.mxu0 0.0
    %v1592 = vand.u32 %v1176, 4294901760
    %1593 = vmatmul.mubr.f32.gmra.mrb[0].mxu0 %v1592
    %v1594 = vpop.f32.mrb[0].mxu0
    %v1595 = vadd.f32 %v1510, %v1594
    %v1596 = vpop.f32.mrb[0].mxu0
    %1597 = vmatprep.mubr.f32.mxu0 0.0
    %v1598 = vand.u32 %v1179, 4294901760
    %1599 = vmatmul.mubr.f32.gmra.mrb[0].mxu0 %v1598
    %v1600 = vpop.f32.mrb[0].mxu0
    %v1601 = vadd.f32 %v1518, %v1600
    %v1602 = vpop.f32.mrb[0].mxu0
    %1603 = vdwg.mxu0
    %1604 = vmatprep.subr.mxu0 0.0
    %v1605 = vand.u32 %v621, 4294901760
    %1606 = vmatpush1.msra.mxu0 %v1605
    %1607 = vmatprep.subr.mxu0 0.0
    %v1608 = vand.u32 %v628, 4294901760
    %1609 = vmatpush1.msra.mxu0 %v1608
    %1610 = vmatprep.subr.mxu0 0.0
    %1611 = vmatpush1.msra.mxu0 0.0
    %1612 = vmatprep.subr.mxu0 0.0
    %1613 = vmatpush1.msra.mxu0 0.0
    %1614 = vmatprep.subr.mxu0 0.0
    %1615 = vmatpush1.msra.mxu0 0.0
    %1616 = vmatprep.subr.mxu0 0.0
    %1617 = vmatpush1.msra.mxu0 0.0
    %1618 = vmatprep.subr.mxu0 0.0
    %1619 = vmatpush1.msra.mxu0 0.0
    %1620 = vmatprep.subr.mxu0 0.0
    %1621 = vmatpush1.msra.mxu0 0.0
    %1622 = vmatprep.subr.mxu0 0.0
    %1623 = vmatpush1.msra.mxu0 0.0
    %1624 = vmatprep.subr.mxu0 0.0
    %1625 = vmatpush1.msra.mxu0 0.0
    %1626 = vmatprep.subr.mxu0 0.0
    %1627 = vmatpush1.msra.mxu0 0.0
    %1628 = vmatprep.subr.mxu0 0.0
    %1629 = vmatpush1.msra.mxu0 0.0
    %1630 = vmatprep.subr.mxu0 0.0
    %1631 = vmatpush1.msra.mxu0 0.0
    %1632 = vmatprep.subr.mxu0 0.0
    %1633 = vmatpush1.msra.mxu0 0.0
    %1634 = vmatprep.subr.mxu0 0.0
    %1635 = vmatpush1.msra.mxu0 0.0
    %1636 = vmatprep.subr.mxu0 0.0
    %1637 = vmatpush1.msra.mxu0 0.0
    %1638 = vmatprep.subr.mxu0 0.0
    %1639 = vmatpush1.msra.mxu0 0.0
    %1640 = vmatprep.subr.mxu0 0.0
    %1641 = vmatpush1.msra.mxu0 0.0
    %1642 = vmatprep.subr.mxu0 0.0
    %1643 = vmatpush1.msra.mxu0 0.0
    %1644 = vmatprep.subr.mxu0 0.0
    %1645 = vmatpush1.msra.mxu0 0.0
    %1646 = vmatprep.subr.mxu0 0.0
    %1647 = vmatpush1.msra.mxu0 0.0
    %1648 = vmatprep.subr.mxu0 0.0
    %1649 = vmatpush1.msra.mxu0 0.0
    %1650 = vmatprep.subr.mxu0 0.0
    %1651 = vmatpush1.msra.mxu0 0.0
    %1652 = vmatprep.subr.mxu0 0.0
    %1653 = vmatpush1.msra.mxu0 0.0
    %1654 = vmatprep.subr.mxu0 0.0
    %1655 = vmatpush1.msra.mxu0 0.0
    %1656 = vmatprep.subr.mxu0 0.0
    %1657 = vmatpush1.msra.mxu0 0.0
    %1658 = vmatprep.subr.mxu0 0.0
    %1659 = vmatpush1.msra.mxu0 0.0
    %1660 = vmatprep.subr.mxu0 0.0
    %1661 = vmatpush1.msra.mxu0 0.0
    %1662 = vmatprep.subr.mxu0 0.0
    %1663 = vmatpush1.msra.mxu0 0.0
    %1664 = vmatprep.subr.mxu0 0.0
    %1665 = vmatpush1.msra.mxu0 0.0
    %1666 = vmatprep.subr.mxu0 0.0
    %1667 = vmatpush1.msra.mxu0 0.0
    %1668 = vmatprep.subr.mxu0 0.0
    %1669 = vmatpush1.msra.mxu0 0.0
    %1670 = vmatprep.mubr.f32.mxu0 0.0
    %v1671 = vand.u32 %v1176, 4294901760
    %1672 = vmatmul.mubr.f32.gmra.mrb[0].mxu0 %v1671
    %v1673 = vpop.f32.mrb[0].mxu0
    %v1674 = vadd.f32 %v1595, %v1673
    %v1675 = vpop.f32.mrb[0].mxu0
    %1676 = vmatprep.mubr.f32.mxu0 0.0
    %v1677 = vand.u32 %v1179, 4294901760
    %1678 = vmatmul.mubr.f32.gmra.mrb[0].mxu0 %v1677
    %v1679 = vpop.f32.mrb[0].mxu0
    %v1680 = vadd.f32 %v1601, %v1679
    %v1681 = vpop.f32.mrb[0].mxu0
    %1682 = vdwg.mxu0
    %1683 = vrot.lane.b32.xlu0 %v630, 112
    %v1684 = vpop.permute.xlu0 %1683
    %1685 = vrot.lane.b32.xlu0 %v631, 112
    %v1686 = vpop.permute.xlu0 %1685
    %1687 = vrot.lane.b32.xlu0 %v619, 48
    %v1688 = vpop.permute.xlu0 %1687
    %1689 = vrot.lane.b32.xlu0 %v626, 48
    %v1690 = vpop.permute.xlu0 %1689
    %v1691 = vsel %vm640, %v1684, 0
    %v1693 = vsel %vm640, %v1686, 0
    %v1695 = vsel %vm640, %v1688, 0
    %v1697 = vsel %vm640, %v1690, 0
    %1699 = vmatprep.subr.mxu0 0.0
    %v1700 = vand.u32 %v1695, 4294901760
    %1701 = vmatpush1.xpose.msra.mxu0 %v1700
    %1702 = vmatprep.subr.mxu0 0.0
    %v1703 = vand.u32 %v1697, 4294901760
    %1704 = vmatpush1.xpose.msra.mxu0 %v1703
    %1705 = vmatprep.subr.mxu0 0.0
    %1706 = vmatpush1.xpose.msra.mxu0 0.0
    %1707 = vmatprep.subr.mxu0 0.0
    %1708 = vmatpush1.xpose.msra.mxu0 0.0
    %1709 = vmatprep.subr.mxu0 0.0
    %1710 = vmatpush1.xpose.msra.mxu0 0.0
    %1711 = vmatprep.subr.mxu0 0.0
    %1712 = vmatpush1.xpose.msra.mxu0 0.0
    %1713 = vmatprep.subr.mxu0 0.0
    %1714 = vmatpush1.xpose.msra.mxu0 0.0
    %1715 = vmatprep.subr.mxu0 0.0
    %1716 = vmatpush1.xpose.msra.mxu0 0.0
    %1717 = vmatprep.subr.mxu0 0.0
    %1718 = vmatpush1.xpose.msra.mxu0 0.0
    %1719 = vmatprep.subr.mxu0 0.0
    %1720 = vmatpush1.xpose.msra.mxu0 0.0
    %1721 = vmatprep.subr.mxu0 0.0
    %1722 = vmatpush1.xpose.msra.mxu0 0.0
    %1723 = vmatprep.subr.mxu0 0.0
    %1724 = vmatpush1.xpose.msra.mxu0 0.0
    %1725 = vmatprep.subr.mxu0 0.0
    %1726 = vmatpush1.xpose.msra.mxu0 0.0
    %1727 = vmatprep.subr.mxu0 0.0
    %1728 = vmatpush1.xpose.msra.mxu0 0.0
    %1729 = vmatprep.subr.mxu0 0.0
    %1730 = vmatpush1.xpose.msra.mxu0 0.0
    %1731 = vmatprep.subr.mxu0 0.0
    %1732 = vmatpush1.xpose.msra.mxu0 0.0
    %1733 = vmatprep.subr.mxu0 0.0
    %1734 = vmatpush1.xpose.msra.mxu0 0.0
    %1735 = vmatprep.subr.mxu0 0.0
    %1736 = vmatpush1.xpose.msra.mxu0 0.0
    %1737 = vmatprep.subr.mxu0 0.0
    %1738 = vmatpush1.xpose.msra.mxu0 0.0
    %1739 = vmatprep.subr.mxu0 0.0
    %1740 = vmatpush1.xpose.msra.mxu0 0.0
    %1741 = vmatprep.subr.mxu0 0.0
    %1742 = vmatpush1.xpose.msra.mxu0 0.0
    %1743 = vmatprep.subr.mxu0 0.0
    %1744 = vmatpush1.xpose.msra.mxu0 0.0
    %1745 = vmatprep.subr.mxu0 0.0
    %1746 = vmatpush1.xpose.msra.mxu0 0.0
    %1747 = vmatprep.subr.mxu0 0.0
    %1748 = vmatpush1.xpose.msra.mxu0 0.0
    %1749 = vmatprep.subr.mxu0 0.0
    %1750 = vmatpush1.xpose.msra.mxu0 0.0
    %1751 = vmatprep.subr.mxu0 0.0
    %1752 = vmatpush1.xpose.msra.mxu0 0.0
    %1753 = vmatprep.subr.mxu0 0.0
    %1754 = vmatpush1.xpose.msra.mxu0 0.0
    %1755 = vmatprep.subr.mxu0 0.0
    %1756 = vmatpush1.xpose.msra.mxu0 0.0
    %1757 = vmatprep.subr.mxu0 0.0
    %1758 = vmatpush1.xpose.msra.mxu0 0.0
    %1759 = vmatprep.subr.mxu0 0.0
    %1760 = vmatpush1.xpose.msra.mxu0 0.0
    %1761 = vmatprep.subr.mxu0 0.0
    %1762 = vmatpush1.xpose.msra.mxu0 0.0
    %1763 = vmatprep.subr.mxu0 0.0
    %1764 = vmatpush1.xpose.msra.mxu0 0.0
    %1765 = vmatprep.mubr.f32.mxu0 0.0
    %v1766 = vand.u32 %v1691, 4294901760
    %v1767 = vsub.f32 %v1691, %v1766
    %v1768 = vand.u32 %v1767, 4294901760
    %v1769 = vsub.f32 %v1767, %v1768
    %v1770 = vand.u32 %v1769, 4294901760
    %1771 = vmatmul.mubr.f32.gmra.mrb[0].mxu0 %v1770
    %v1772 = vpop.f32.mrb[0].mxu0
    %v1773 = vadd.f32 %v632, %v1772
    %v1774 = vpop.f32.mrb[0].mxu0
    %1775 = vmatprep.mubr.f32.mxu0 0.0
    %v1776 = vand.u32 %v1693, 4294901760
    %v1777 = vsub.f32 %v1693, %v1776
    %v1778 = vand.u32 %v1777, 4294901760
    %v1779 = vsub.f32 %v1777, %v1778
    %v1780 = vand.u32 %v1779, 4294901760
    %1781 = vmatmul.mubr.f32.gmra.mrb[0].mxu0 %v1780
    %v1782 = vpop.f32.mrb[0].mxu0
    %v1783 = vadd.f32 %v633, %v1782
    %v1784 = vpop.f32.mrb[0].mxu0
    %1785 = vdwg.mxu0
    %1786 = vmatprep.subr.mxu0 0.0
    %v1787 = vand.u32 %v1695, 4294901760
    %v1788 = vsub.f32 %v1695, %v1787
    %v1789 = vand.u32 %v1788, 4294901760
    %v1790 = vsub.f32 %v1788, %v1789
    %v1791 = vand.u32 %v1790, 4294901760
    %1792 = vmatpush1.xpose.msra.mxu0 %v1791
    %1793 = vmatprep.subr.mxu0 0.0
    %v1794 = vand.u32 %v1697, 4294901760
    %v1795 = vsub.f32 %v1697, %v1794
    %v1796 = vand.u32 %v1795, 4294901760
    %v1797 = vsub.f32 %v1795, %v1796
    %v1798 = vand.u32 %v1797, 4294901760
    %1799 = vmatpush1.xpose.msra.mxu0 %v1798
    %1800 = vmatprep.subr.mxu0 0.0
    %1801 = vmatpush1.xpose.msra.mxu0 0.0
    %1802 = vmatprep.subr.mxu0 0.0
    %1803 = vmatpush1.xpose.msra.mxu0 0.0
    %1804 = vmatprep.subr.mxu0 0.0
    %1805 = vmatpush1.xpose.msra.mxu0 0.0
    %1806 = vmatprep.subr.mxu0 0.0
    %1807 = vmatpush1.xpose.msra.mxu0 0.0
    %1808 = vmatprep.subr.mxu0 0.0
    %1809 = vmatpush1.xpose.msra.mxu0 0.0
    %1810 = vmatprep.subr.mxu0 0.0
    %1811 = vmatpush1.xpose.msra.mxu0 0.0
    %1812 = vmatprep.subr.mxu0 0.0
    %1813 = vmatpush1.xpose.msra.mxu0 0.0
    %1814 = vmatprep.subr.mxu0 0.0
    %1815 = vmatpush1.xpose.msra.mxu0 0.0
    %1816 = vmatprep.subr.mxu0 0.0
    %1817 = vmatpush1.xpose.msra.mxu0 0.0
    %1818 = vmatprep.subr.mxu0 0.0
    %1819 = vmatpush1.xpose.msra.mxu0 0.0
    %1820 = vmatprep.subr.mxu0 0.0
    %1821 = vmatpush1.xpose.msra.mxu0 0.0
    %1822 = vmatprep.subr.mxu0 0.0
    %1823 = vmatpush1.xpose.msra.mxu0 0.0
    %1824 = vmatprep.subr.mxu0 0.0
    %1825 = vmatpush1.xpose.msra.mxu0 0.0
    %1826 = vmatprep.subr.mxu0 0.0
    %1827 = vmatpush1.xpose.msra.mxu0 0.0
    %1828 = vmatprep.subr.mxu0 0.0
    %1829 = vmatpush1.xpose.msra.mxu0 0.0
    %1830 = vmatprep.subr.mxu0 0.0
    %1831 = vmatpush1.xpose.msra.mxu0 0.0
    %1832 = vmatprep.subr.mxu0 0.0
    %1833 = vmatpush1.xpose.msra.mxu0 0.0
    %1834 = vmatprep.subr.mxu0 0.0
    %1835 = vmatpush1.xpose.msra.mxu0 0.0
    %1836 = vmatprep.subr.mxu0 0.0
    %1837 = vmatpush1.xpose.msra.mxu0 0.0
    %1838 = vmatprep.subr.mxu0 0.0
    %1839 = vmatpush1.xpose.msra.mxu0 0.0
    %1840 = vmatprep.subr.mxu0 0.0
    %1841 = vmatpush1.xpose.msra.mxu0 0.0
    %1842 = vmatprep.subr.mxu0 0.0
    %1843 = vmatpush1.xpose.msra.mxu0 0.0
    %1844 = vmatprep.subr.mxu0 0.0
    %1845 = vmatpush1.xpose.msra.mxu0 0.0
    %1846 = vmatprep.subr.mxu0 0.0
    %1847 = vmatpush1.xpose.msra.mxu0 0.0
    %1848 = vmatprep.subr.mxu0 0.0
    %1849 = vmatpush1.xpose.msra.mxu0 0.0
    %1850 = vmatprep.subr.mxu0 0.0
    %1851 = vmatpush1.xpose.msra.mxu0 0.0
    %1852 = vmatprep.subr.mxu0 0.0
    %1853 = vmatpush1.xpose.msra.mxu0 0.0
    %1854 = vmatprep.subr.mxu0 0.0
    %1855 = vmatpush1.xpose.msra.mxu0 0.0
    %1856 = vmatprep.subr.mxu0 0.0
    %1857 = vmatpush1.xpose.msra.mxu0 0.0
    %1858 = vmatprep.subr.mxu0 0.0
    %1859 = vmatpush1.xpose.msra.mxu0 0.0
    %1860 = vmatprep.mubr.f32.mxu0 0.0
    %v1861 = vand.u32 %v1691, 4294901760
    %1862 = vmatmul.mubr.f32.gmra.mrb[0].mxu0 %v1861
    %v1863 = vpop.f32.mrb[0].mxu0
    %v1864 = vadd.f32 %v1773, %v1863
    %v1865 = vpop.f32.mrb[0].mxu0
    %1866 = vmatprep.mubr.f32.mxu0 0.0
    %v1867 = vand.u32 %v1693, 4294901760
    %1868 = vmatmul.mubr.f32.gmra.mrb[0].mxu0 %v1867
    %v1869 = vpop.f32.mrb[0].mxu0
    %v1870 = vadd.f32 %v1783, %v1869
    %v1871 = vpop.f32.mrb[0].mxu0
    %1872 = vdwg.mxu0
    %1873 = vmatprep.subr.mxu0 0.0
    %v1874 = vand.u32 %v1695, 4294901760
    %v1875 = vsub.f32 %v1695, %v1874
    %1876 = vmatpush1.xpose.msra.mxu0 %v1875
    %1877 = vmatprep.subr.mxu0 0.0
    %v1878 = vand.u32 %v1697, 4294901760
    %v1879 = vsub.f32 %v1697, %v1878
    %1880 = vmatpush1.xpose.msra.mxu0 %v1879
    %1881 = vmatprep.subr.mxu0 0.0
    %1882 = vmatpush1.xpose.msra.mxu0 0.0
    %1883 = vmatprep.subr.mxu0 0.0
    %1884 = vmatpush1.xpose.msra.mxu0 0.0
    %1885 = vmatprep.subr.mxu0 0.0
    %1886 = vmatpush1.xpose.msra.mxu0 0.0
    %1887 = vmatprep.subr.mxu0 0.0
    %1888 = vmatpush1.xpose.msra.mxu0 0.0
    %1889 = vmatprep.subr.mxu0 0.0
    %1890 = vmatpush1.xpose.msra.mxu0 0.0
    %1891 = vmatprep.subr.mxu0 0.0
    %1892 = vmatpush1.xpose.msra.mxu0 0.0
    %1893 = vmatprep.subr.mxu0 0.0
    %1894 = vmatpush1.xpose.msra.mxu0 0.0
    %1895 = vmatprep.subr.mxu0 0.0
    %1896 = vmatpush1.xpose.msra.mxu0 0.0
    %1897 = vmatprep.subr.mxu0 0.0
    %1898 = vmatpush1.xpose.msra.mxu0 0.0
    %1899 = vmatprep.subr.mxu0 0.0
    %1900 = vmatpush1.xpose.msra.mxu0 0.0
    %1901 = vmatprep.subr.mxu0 0.0
    %1902 = vmatpush1.xpose.msra.mxu0 0.0
    %1903 = vmatprep.subr.mxu0 0.0
    %1904 = vmatpush1.xpose.msra.mxu0 0.0
    %1905 = vmatprep.subr.mxu0 0.0
    %1906 = vmatpush1.xpose.msra.mxu0 0.0
    %1907 = vmatprep.subr.mxu0 0.0
    %1908 = vmatpush1.xpose.msra.mxu0 0.0
    %1909 = vmatprep.subr.mxu0 0.0
    %1910 = vmatpush1.xpose.msra.mxu0 0.0
    %1911 = vmatprep.subr.mxu0 0.0
    %1912 = vmatpush1.xpose.msra.mxu0 0.0
    %1913 = vmatprep.subr.mxu0 0.0
    %1914 = vmatpush1.xpose.msra.mxu0 0.0
    %1915 = vmatprep.subr.mxu0 0.0
    %1916 = vmatpush1.xpose.msra.mxu0 0.0
    %1917 = vmatprep.subr.mxu0 0.0
    %1918 = vmatpush1.xpose.msra.mxu0 0.0
    %1919 = vmatprep.subr.mxu0 0.0
    %1920 = vmatpush1.xpose.msra.mxu0 0.0
    %1921 = vmatprep.subr.mxu0 0.0
    %1922 = vmatpush1.xpose.msra.mxu0 0.0
    %1923 = vmatprep.subr.mxu0 0.0
    %1924 = vmatpush1.xpose.msra.mxu0 0.0
    %1925 = vmatprep.subr.mxu0 0.0
    %1926 = vmatpush1.xpose.msra.mxu0 0.0
    %1927 = vmatprep.subr.mxu0 0.0
    %1928 = vmatpush1.xpose.msra.mxu0 0.0
    %1929 = vmatprep.subr.mxu0 0.0
    %1930 = vmatpush1.xpose.msra.mxu0 0.0
    %1931 = vmatprep.subr.mxu0 0.0
    %1932 = vmatpush1.xpose.msra.mxu0 0.0
    %1933 = vmatprep.subr.mxu0 0.0
    %1934 = vmatpush1.xpose.msra.mxu0 0.0
    %1935 = vmatprep.subr.mxu0 0.0
    %1936 = vmatpush1.xpose.msra.mxu0 0.0
    %1937 = vmatprep.subr.mxu0 0.0
    %1938 = vmatpush1.xpose.msra.mxu0 0.0
    %1939 = vmatprep.subr.mxu0 0.0
    %1940 = vmatpush1.xpose.msra.mxu0 0.0
    %1941 = vmatprep.mubr.f32.mxu0 0.0
    %v1942 = vand.u32 %v1691, 4294901760
    %v1943 = vsub.f32 %v1691, %v1942
    %1944 = vmatmul.mubr.f32.gmra.mrb[0].mxu0 %v1943
    %v1945 = vpop.f32.mrb[0].mxu0
    %v1946 = vadd.f32 %v1864, %v1945
    %v1947 = vpop.f32.mrb[0].mxu0
    %1948 = vmatprep.mubr.f32.mxu0 0.0
    %v1949 = vand.u32 %v1693, 4294901760
    %v1950 = vsub.f32 %v1693, %v1949
    %1951 = vmatmul.mubr.f32.gmra.mrb[0].mxu0 %v1950
    %v1952 = vpop.f32.mrb[0].mxu0
    %v1953 = vadd.f32 %v1870, %v1952
    %v1954 = vpop.f32.mrb[0].mxu0
    %1955 = vdwg.mxu0
    %1956 = vmatprep.subr.mxu0 0.0
    %v1957 = vand.u32 %v1695, 4294901760
    %1958 = vmatpush1.xpose.msra.mxu0 %v1957
    %1959 = vmatprep.subr.mxu0 0.0
    %v1960 = vand.u32 %v1697, 4294901760
    %1961 = vmatpush1.xpose.msra.mxu0 %v1960
    %1962 = vmatprep.subr.mxu0 0.0
    %1963 = vmatpush1.xpose.msra.mxu0 0.0
    %1964 = vmatprep.subr.mxu0 0.0
    %1965 = vmatpush1.xpose.msra.mxu0 0.0
    %1966 = vmatprep.subr.mxu0 0.0
    %1967 = vmatpush1.xpose.msra.mxu0 0.0
    %1968 = vmatprep.subr.mxu0 0.0
    %1969 = vmatpush1.xpose.msra.mxu0 0.0
    %1970 = vmatprep.subr.mxu0 0.0
    %1971 = vmatpush1.xpose.msra.mxu0 0.0
    %1972 = vmatprep.subr.mxu0 0.0
    %1973 = vmatpush1.xpose.msra.mxu0 0.0
    %1974 = vmatprep.subr.mxu0 0.0
    %1975 = vmatpush1.xpose.msra.mxu0 0.0
    %1976 = vmatprep.subr.mxu0 0.0
    %1977 = vmatpush1.xpose.msra.mxu0 0.0
    %1978 = vmatprep.subr.mxu0 0.0
    %1979 = vmatpush1.xpose.msra.mxu0 0.0
    %1980 = vmatprep.subr.mxu0 0.0
    %1981 = vmatpush1.xpose.msra.mxu0 0.0
    %1982 = vmatprep.subr.mxu0 0.0
    %1983 = vmatpush1.xpose.msra.mxu0 0.0
    %1984 = vmatprep.subr.mxu0 0.0
    %1985 = vmatpush1.xpose.msra.mxu0 0.0
    %1986 = vmatprep.subr.mxu0 0.0
    %1987 = vmatpush1.xpose.msra.mxu0 0.0
    %1988 = vmatprep.subr.mxu0 0.0
    %1989 = vmatpush1.xpose.msra.mxu0 0.0
    %1990 = vmatprep.subr.mxu0 0.0
    %1991 = vmatpush1.xpose.msra.mxu0 0.0
    %1992 = vmatprep.subr.mxu0 0.0
    %1993 = vmatpush1.xpose.msra.mxu0 0.0
    %1994 = vmatprep.subr.mxu0 0.0
    %1995 = vmatpush1.xpose.msra.mxu0 0.0
    %1996 = vmatprep.subr.mxu0 0.0
    %1997 = vmatpush1.xpose.msra.mxu0 0.0
    %1998 = vmatprep.subr.mxu0 0.0
    %1999 = vmatpush1.xpose.msra.mxu0 0.0
    %2000 = vmatprep.subr.mxu0 0.0
    %2001 = vmatpush1.xpose.msra.mxu0 0.0
    %2002 = vmatprep.subr.mxu0 0.0
    %2003 = vmatpush1.xpose.msra.mxu0 0.0
    %2004 = vmatprep.subr.mxu0 0.0
    %2005 = vmatpush1.xpose.msra.mxu0 0.0
    %2006 = vmatprep.subr.mxu0 0.0
    %2007 = vmatpush1.xpose.msra.mxu0 0.0
    %2008 = vmatprep.subr.mxu0 0.0
    %2009 = vmatpush1.xpose.msra.mxu0 0.0
    %2010 = vmatprep.subr.mxu0 0.0
    %2011 = vmatpush1.xpose.msra.mxu0 0.0
    %2012 = vmatprep.subr.mxu0 0.0
    %2013 = vmatpush1.xpose.msra.mxu0 0.0
    %2014 = vmatprep.subr.mxu0 0.0
    %2015 = vmatpush1.xpose.msra.mxu0 0.0
    %2016 = vmatprep.subr.mxu0 0.0
    %2017 = vmatpush1.xpose.msra.mxu0 0.0
    %2018 = vmatprep.subr.mxu0 0.0
    %2019 = vmatpush1.xpose.msra.mxu0 0.0
    %2020 = vmatprep.subr.mxu0 0.0
    %2021 = vmatpush1.xpose.msra.mxu0 0.0
    %2022 = vmatprep.mubr.f32.mxu0 0.0
    %v2023 = vand.u32 %v1691, 4294901760
    %v2024 = vsub.f32 %v1691, %v2023
    %v2025 = vand.u32 %v2024, 4294901760
    %2026 = vmatmul.mubr.f32.gmra.mrb[0].mxu0 %v2025
    %v2027 = vpop.f32.mrb[0].mxu0
    %v2028 = vadd.f32 %v1946, %v2027
    %v2029 = vpop.f32.mrb[0].mxu0
    %2030 = vmatprep.mubr.f32.mxu0 0.0
    %v2031 = vand.u32 %v1693, 4294901760
    %v2032 = vsub.f32 %v1693, %v2031
    %v2033 = vand.u32 %v2032, 4294901760
    %2034 = vmatmul.mubr.f32.gmra.mrb[0].mxu0 %v2033
    %v2035 = vpop.f32.mrb[0].mxu0
    %v2036 = vadd.f32 %v1953, %v2035
    %v2037 = vpop.f32.mrb[0].mxu0
    %2038 = vdwg.mxu0
    %2039 = vmatprep.subr.mxu0 0.0
    %v2040 = vand.u32 %v1695, 4294901760
    %v2041 = vsub.f32 %v1695, %v2040
    %v2042 = vand.u32 %v2041, 4294901760
    %2043 = vmatpush1.xpose.msra.mxu0 %v2042
    %2044 = vmatprep.subr.mxu0 0.0
    %v2045 = vand.u32 %v1697, 4294901760
    %v2046 = vsub.f32 %v1697, %v2045
    %v2047 = vand.u32 %v2046, 4294901760
    %2048 = vmatpush1.xpose.msra.mxu0 %v2047
    %2049 = vmatprep.subr.mxu0 0.0
    %2050 = vmatpush1.xpose.msra.mxu0 0.0
    %2051 = vmatprep.subr.mxu0 0.0
    %2052 = vmatpush1.xpose.msra.mxu0 0.0
    %2053 = vmatprep.subr.mxu0 0.0
    %2054 = vmatpush1.xpose.msra.mxu0 0.0
    %2055 = vmatprep.subr.mxu0 0.0
    %2056 = vmatpush1.xpose.msra.mxu0 0.0
    %2057 = vmatprep.subr.mxu0 0.0
    %2058 = vmatpush1.xpose.msra.mxu0 0.0
    %2059 = vmatprep.subr.mxu0 0.0
    %2060 = vmatpush1.xpose.msra.mxu0 0.0
    %2061 = vmatprep.subr.mxu0 0.0
    %2062 = vmatpush1.xpose.msra.mxu0 0.0
    %2063 = vmatprep.subr.mxu0 0.0
    %2064 = vmatpush1.xpose.msra.mxu0 0.0
    %2065 = vmatprep.subr.mxu0 0.0
    %2066 = vmatpush1.xpose.msra.mxu0 0.0
    %2067 = vmatprep.subr.mxu0 0.0
    %2068 = vmatpush1.xpose.msra.mxu0 0.0
    %2069 = vmatprep.subr.mxu0 0.0
    %2070 = vmatpush1.xpose.msra.mxu0 0.0
    %2071 = vmatprep.subr.mxu0 0.0
    %2072 = vmatpush1.xpose.msra.mxu0 0.0
    %2073 = vmatprep.subr.mxu0 0.0
    %2074 = vmatpush1.xpose.msra.mxu0 0.0
    %2075 = vmatprep.subr.mxu0 0.0
    %2076 = vmatpush1.xpose.msra.mxu0 0.0
    %2077 = vmatprep.subr.mxu0 0.0
    %2078 = vmatpush1.xpose.msra.mxu0 0.0
    %2079 = vmatprep.subr.mxu0 0.0
    %2080 = vmatpush1.xpose.msra.mxu0 0.0
    %2081 = vmatprep.subr.mxu0 0.0
    %2082 = vmatpush1.xpose.msra.mxu0 0.0
    %2083 = vmatprep.subr.mxu0 0.0
    %2084 = vmatpush1.xpose.msra.mxu0 0.0
    %2085 = vmatprep.subr.mxu0 0.0
    %2086 = vmatpush1.xpose.msra.mxu0 0.0
    %2087 = vmatprep.subr.mxu0 0.0
    %2088 = vmatpush1.xpose.msra.mxu0 0.0
    %2089 = vmatprep.subr.mxu0 0.0
    %2090 = vmatpush1.xpose.msra.mxu0 0.0
    %2091 = vmatprep.subr.mxu0 0.0
    %2092 = vmatpush1.xpose.msra.mxu0 0.0
    %2093 = vmatprep.subr.mxu0 0.0
    %2094 = vmatpush1.xpose.msra.mxu0 0.0
    %2095 = vmatprep.subr.mxu0 0.0
    %2096 = vmatpush1.xpose.msra.mxu0 0.0
    %2097 = vmatprep.subr.mxu0 0.0
    %2098 = vmatpush1.xpose.msra.mxu0 0.0
    %2099 = vmatprep.subr.mxu0 0.0
    %2100 = vmatpush1.xpose.msra.mxu0 0.0
    %2101 = vmatprep.subr.mxu0 0.0
    %2102 = vmatpush1.xpose.msra.mxu0 0.0
    %2103 = vmatprep.subr.mxu0 0.0
    %2104 = vmatpush1.xpose.msra.mxu0 0.0
    %2105 = vmatprep.subr.mxu0 0.0
    %2106 = vmatpush1.xpose.msra.mxu0 0.0
    %2107 = vmatprep.subr.mxu0 0.0
    %2108 = vmatpush1.xpose.msra.mxu0 0.0
    %2109 = vmatprep.mubr.f32.mxu0 0.0
    %v2110 = vand.u32 %v1691, 4294901760
    %2111 = vmatmul.mubr.f32.gmra.mrb[0].mxu0 %v2110
    %v2112 = vpop.f32.mrb[0].mxu0
    %v2113 = vadd.f32 %v2028, %v2112
    %v2114 = vpop.f32.mrb[0].mxu0
    %2115 = vmatprep.mubr.f32.mxu0 0.0
    %v2116 = vand.u32 %v1693, 4294901760
    %2117 = vmatmul.mubr.f32.gmra.mrb[0].mxu0 %v2116
    %v2118 = vpop.f32.mrb[0].mxu0
    %v2119 = vadd.f32 %v2036, %v2118
    %v2120 = vpop.f32.mrb[0].mxu0
    %2121 = vdwg.mxu0
    %2122 = vmatprep.subr.mxu0 0.0
    %v2123 = vand.u32 %v1695, 4294901760
    %2124 = vmatpush1.xpose.msra.mxu0 %v2123
    %2125 = vmatprep.subr.mxu0 0.0
    %v2126 = vand.u32 %v1697, 4294901760
    %2127 = vmatpush1.xpose.msra.mxu0 %v2126
    %2128 = vmatprep.subr.mxu0 0.0
    %2129 = vmatpush1.xpose.msra.mxu0 0.0
    %2130 = vmatprep.subr.mxu0 0.0
    %2131 = vmatpush1.xpose.msra.mxu0 0.0
    %2132 = vmatprep.subr.mxu0 0.0
    %2133 = vmatpush1.xpose.msra.mxu0 0.0
    %2134 = vmatprep.subr.mxu0 0.0
    %2135 = vmatpush1.xpose.msra.mxu0 0.0
    %2136 = vmatprep.subr.mxu0 0.0
    %2137 = vmatpush1.xpose.msra.mxu0 0.0
    %2138 = vmatprep.subr.mxu0 0.0
    %2139 = vmatpush1.xpose.msra.mxu0 0.0
    %2140 = vmatprep.subr.mxu0 0.0
    %2141 = vmatpush1.xpose.msra.mxu0 0.0
    %2142 = vmatprep.subr.mxu0 0.0
    %2143 = vmatpush1.xpose.msra.mxu0 0.0
    %2144 = vmatprep.subr.mxu0 0.0
    %2145 = vmatpush1.xpose.msra.mxu0 0.0
    %2146 = vmatprep.subr.mxu0 0.0
    %2147 = vmatpush1.xpose.msra.mxu0 0.0
    %2148 = vmatprep.subr.mxu0 0.0
    %2149 = vmatpush1.xpose.msra.mxu0 0.0
    %2150 = vmatprep.subr.mxu0 0.0
    %2151 = vmatpush1.xpose.msra.mxu0 0.0
    %2152 = vmatprep.subr.mxu0 0.0
    %2153 = vmatpush1.xpose.msra.mxu0 0.0
    %2154 = vmatprep.subr.mxu0 0.0
    %2155 = vmatpush1.xpose.msra.mxu0 0.0
    %2156 = vmatprep.subr.mxu0 0.0
    %2157 = vmatpush1.xpose.msra.mxu0 0.0
    %2158 = vmatprep.subr.mxu0 0.0
    %2159 = vmatpush1.xpose.msra.mxu0 0.0
    %2160 = vmatprep.subr.mxu0 0.0
    %2161 = vmatpush1.xpose.msra.mxu0 0.0
    %2162 = vmatprep.subr.mxu0 0.0
    %2163 = vmatpush1.xpose.msra.mxu0 0.0
    %2164 = vmatprep.subr.mxu0 0.0
    %2165 = vmatpush1.xpose.msra.mxu0 0.0
    %2166 = vmatprep.subr.mxu0 0.0
    %2167 = vmatpush1.xpose.msra.mxu0 0.0
    %2168 = vmatprep.subr.mxu0 0.0
    %2169 = vmatpush1.xpose.msra.mxu0 0.0
    %2170 = vmatprep.subr.mxu0 0.0
    %2171 = vmatpush1.xpose.msra.mxu0 0.0
    %2172 = vmatprep.subr.mxu0 0.0
    %2173 = vmatpush1.xpose.msra.mxu0 0.0
    %2174 = vmatprep.subr.mxu0 0.0
    %2175 = vmatpush1.xpose.msra.mxu0 0.0
    %2176 = vmatprep.subr.mxu0 0.0
    %2177 = vmatpush1.xpose.msra.mxu0 0.0
    %2178 = vmatprep.subr.mxu0 0.0
    %2179 = vmatpush1.xpose.msra.mxu0 0.0
    %2180 = vmatprep.subr.mxu0 0.0
    %2181 = vmatpush1.xpose.msra.mxu0 0.0
    %2182 = vmatprep.subr.mxu0 0.0
    %2183 = vmatpush1.xpose.msra.mxu0 0.0
    %2184 = vmatprep.subr.mxu0 0.0
    %2185 = vmatpush1.xpose.msra.mxu0 0.0
    %2186 = vmatprep.subr.mxu0 0.0
    %2187 = vmatpush1.xpose.msra.mxu0 0.0
    %2188 = vmatprep.mubr.f32.mxu0 0.0
    %v2189 = vand.u32 %v1691, 4294901760
    %2190 = vmatmul.mubr.f32.gmra.mrb[0].mxu0 %v2189
    %v2191 = vpop.f32.mrb[0].mxu0
    %v2192 = vadd.f32 %v2113, %v2191
    %v2193 = vpop.f32.mrb[0].mxu0
    %2194 = vmatprep.mubr.f32.mxu0 0.0
    %v2195 = vand.u32 %v1693, 4294901760
    %2196 = vmatmul.mubr.f32.gmra.mrb[0].mxu0 %v2195
    %v2197 = vpop.f32.mrb[0].mxu0
    %v2198 = vadd.f32 %v2119, %v2197
    %v2199 = vpop.f32.mrb[0].mxu0
    %2200 = vdwg.mxu0
    %v2201 = vsel %vm640, %v2192, -inf
    %2202 = vmax.xlane.f32.xlu0 %v2201
    %v2203 = vpop.xlane.xlu0 %2202
    %v2204 = vsel %vm640, %v2198, -inf
    %2205 = vmax.xlane.f32.xlu0 %v2204
    %v2206 = vpop.xlane.xlu0 %2205
    %v2207 = vsub.f32 %v2192, %v2203
    %v2208 = vsub.f32 %v2198, %v2206
    %v2209 = vmul.f32 %v2207, 1.442695
    %v2210 = vpow.pop %v2209
    %v2211 = vmul.f32 %v2208, 1.442695
    %v2212 = vpow.pop %v2211
    %v2213 = vsel %vm640, %v2210, 0.0
    %2214 = vadd.xlane.f32.xlu0 %v2213
    %v2215 = vpop.xlane.xlu0 %2214
    %v2216 = vsel %vm640, %v2212, 0.0
    %2217 = vadd.xlane.f32.xlu0 %v2216
    %v2218 = vpop.xlane.xlu0 %2217
    %v2219 = vrcp.pop %v2215
    %v2220 = vmul.f32 %v2210, %v2219
    %v2221 = vrcp.pop %v2218
    %v2222 = vmul.f32 %v2212, %v2221
    %2225 = vrot.lane.b32.xlu0 %v621, 112
    %v2226 = vpop.permute.xlu0 %2225
    %2227 = vrot.lane.b32.xlu0 %v628, 112
    %v2228 = vpop.permute.xlu0 %2227
    %v2232 = vsel %vm640, %v2220, 0
    %v2235 = vsel %vm640, %v2222, 0
    %2237 = vmatprep.subr.mxu0 0.0
    %v2238 = vand.u32 %v2226, 4294901760
    %2239 = vmatpush1.msra.mxu0 %v2238
    %2240 = vmatprep.subr.mxu0 0.0
    %v2241 = vand.u32 %v2228, 4294901760
    %2242 = vmatpush1.msra.mxu0 %v2241
    %2243 = vmatprep.subr.mxu0 0.0
    %2244 = vmatpush1.msra.mxu0 0.0
    %2245 = vmatprep.subr.mxu0 0.0
    %2246 = vmatpush1.msra.mxu0 0.0
    %2247 = vmatprep.subr.mxu0 0.0
    %2248 = vmatpush1.msra.mxu0 0.0
    %2249 = vmatprep.subr.mxu0 0.0
    %2250 = vmatpush1.msra.mxu0 0.0
    %2251 = vmatprep.subr.mxu0 0.0
    %2252 = vmatpush1.msra.mxu0 0.0
    %2253 = vmatprep.subr.mxu0 0.0
    %2254 = vmatpush1.msra.mxu0 0.0
    %2255 = vmatprep.subr.mxu0 0.0
    %2256 = vmatpush1.msra.mxu0 0.0
    %2257 = vmatprep.subr.mxu0 0.0
    %2258 = vmatpush1.msra.mxu0 0.0
    %2259 = vmatprep.subr.mxu0 0.0
    %2260 = vmatpush1.msra.mxu0 0.0
    %2261 = vmatprep.subr.mxu0 0.0
    %2262 = vmatpush1.msra.mxu0 0.0
    %2263 = vmatprep.subr.mxu0 0.0
    %2264 = vmatpush1.msra.mxu0 0.0
    %2265 = vmatprep.subr.mxu0 0.0
    %2266 = vmatpush1.msra.mxu0 0.0
    %2267 = vmatprep.subr.mxu0 0.0
    %2268 = vmatpush1.msra.mxu0 0.0
    %2269 = vmatprep.subr.mxu0 0.0
    %2270 = vmatpush1.msra.mxu0 0.0
    %2271 = vmatprep.subr.mxu0 0.0
    %2272 = vmatpush1.msra.mxu0 0.0
    %2273 = vmatprep.subr.mxu0 0.0
    %2274 = vmatpush1.msra.mxu0 0.0
    %2275 = vmatprep.subr.mxu0 0.0
    %2276 = vmatpush1.msra.mxu0 0.0
    %2277 = vmatprep.subr.mxu0 0.0
    %2278 = vmatpush1.msra.mxu0 0.0
    %2279 = vmatprep.subr.mxu0 0.0
    %2280 = vmatpush1.msra.mxu0 0.0
    %2281 = vmatprep.subr.mxu0 0.0
    %2282 = vmatpush1.msra.mxu0 0.0
    %2283 = vmatprep.subr.mxu0 0.0
    %2284 = vmatpush1.msra.mxu0 0.0
    %2285 = vmatprep.subr.mxu0 0.0
    %2286 = vmatpush1.msra.mxu0 0.0
    %2287 = vmatprep.subr.mxu0 0.0
    %2288 = vmatpush1.msra.mxu0 0.0
    %2289 = vmatprep.subr.mxu0 0.0
    %2290 = vmatpush1.msra.mxu0 0.0
    %2291 = vmatprep.subr.mxu0 0.0
    %2292 = vmatpush1.msra.mxu0 0.0
    %2293 = vmatprep.subr.mxu0 0.0
    %2294 = vmatpush1.msra.mxu0 0.0
    %2295 = vmatprep.subr.mxu0 0.0
    %2296 = vmatpush1.msra.mxu0 0.0
    %2297 = vmatprep.subr.mxu0 0.0
    %2298 = vmatpush1.msra.mxu0 0.0
    %2299 = vmatprep.subr.mxu0 0.0
    %2300 = vmatpush1.msra.mxu0 0.0
    %2301 = vmatprep.subr.mxu0 0.0
    %2302 = vmatpush1.msra.mxu0 0.0
    %2303 = vmatprep.mubr.f32.mxu0 0.0
    %v2304 = vand.u32 %v2232, 4294901760
    %v2305 = vsub.f32 %v2232, %v2304
    %v2306 = vand.u32 %v2305, 4294901760
    %v2307 = vsub.f32 %v2305, %v2306
    %v2308 = vand.u32 %v2307, 4294901760
    %2309 = vmatmul.mubr.f32.gmra.mrb[0].mxu0 %v2308
    %v2310 = vpop.f32.mrb[0].mxu0
    %v2311 = vadd.f32 0.0, %v2310
    %v2312 = vpop.f32.mrb[0].mxu0
    %2313 = vmatprep.mubr.f32.mxu0 0.0
    %v2314 = vand.u32 %v2235, 4294901760
    %v2315 = vsub.f32 %v2235, %v2314
    %v2316 = vand.u32 %v2315, 4294901760
    %v2317 = vsub.f32 %v2315, %v2316
    %v2318 = vand.u32 %v2317, 4294901760
    %2319 = vmatmul.mubr.f32.gmra.mrb[0].mxu0 %v2318
    %v2320 = vpop.f32.mrb[0].mxu0
    %v2321 = vadd.f32 0.0, %v2320
    %v2322 = vpop.f32.mrb[0].mxu0
    %2323 = vdwg.mxu0
    %2324 = vmatprep.subr.mxu0 0.0
    %v2325 = vand.u32 %v2226, 4294901760
    %v2326 = vsub.f32 %v2226, %v2325
    %v2327 = vand.u32 %v2326, 4294901760
    %v2328 = vsub.f32 %v2326, %v2327
    %v2329 = vand.u32 %v2328, 4294901760
    %2330 = vmatpush1.msra.mxu0 %v2329
    %2331 = vmatprep.subr.mxu0 0.0
    %v2332 = vand.u32 %v2228, 4294901760
    %v2333 = vsub.f32 %v2228, %v2332
    %v2334 = vand.u32 %v2333, 4294901760
    %v2335 = vsub.f32 %v2333, %v2334
    %v2336 = vand.u32 %v2335, 4294901760
    %2337 = vmatpush1.msra.mxu0 %v2336
    %2338 = vmatprep.subr.mxu0 0.0
    %2339 = vmatpush1.msra.mxu0 0.0
    %2340 = vmatprep.subr.mxu0 0.0
    %2341 = vmatpush1.msra.mxu0 0.0
    %2342 = vmatprep.subr.mxu0 0.0
    %2343 = vmatpush1.msra.mxu0 0.0
    %2344 = vmatprep.subr.mxu0 0.0
    %2345 = vmatpush1.msra.mxu0 0.0
    %2346 = vmatprep.subr.mxu0 0.0
    %2347 = vmatpush1.msra.mxu0 0.0
    %2348 = vmatprep.subr.mxu0 0.0
    %2349 = vmatpush1.msra.mxu0 0.0
    %2350 = vmatprep.subr.mxu0 0.0
    %2351 = vmatpush1.msra.mxu0 0.0
    %2352 = vmatprep.subr.mxu0 0.0
    %2353 = vmatpush1.msra.mxu0 0.0
    %2354 = vmatprep.subr.mxu0 0.0
    %2355 = vmatpush1.msra.mxu0 0.0
    %2356 = vmatprep.subr.mxu0 0.0
    %2357 = vmatpush1.msra.mxu0 0.0
    %2358 = vmatprep.subr.mxu0 0.0
    %2359 = vmatpush1.msra.mxu0 0.0
    %2360 = vmatprep.subr.mxu0 0.0
    %2361 = vmatpush1.msra.mxu0 0.0
    %2362 = vmatprep.subr.mxu0 0.0
    %2363 = vmatpush1.msra.mxu0 0.0
    %2364 = vmatprep.subr.mxu0 0.0
    %2365 = vmatpush1.msra.mxu0 0.0
    %2366 = vmatprep.subr.mxu0 0.0
    %2367 = vmatpush1.msra.mxu0 0.0
    %2368 = vmatprep.subr.mxu0 0.0
    %2369 = vmatpush1.msra.mxu0 0.0
    %2370 = vmatprep.subr.mxu0 0.0
    %2371 = vmatpush1.msra.mxu0 0.0
    %2372 = vmatprep.subr.mxu0 0.0
    %2373 = vmatpush1.msra.mxu0 0.0
    %2374 = vmatprep.subr.mxu0 0.0
    %2375 = vmatpush1.msra.mxu0 0.0
    %2376 = vmatprep.subr.mxu0 0.0
    %2377 = vmatpush1.msra.mxu0 0.0
    %2378 = vmatprep.subr.mxu0 0.0
    %2379 = vmatpush1.msra.mxu0 0.0
    %2380 = vmatprep.subr.mxu0 0.0
    %2381 = vmatpush1.msra.mxu0 0.0
    %2382 = vmatprep.subr.mxu0 0.0
    %2383 = vmatpush1.msra.mxu0 0.0
    %2384 = vmatprep.subr.mxu0 0.0
    %2385 = vmatpush1.msra.mxu0 0.0
    %2386 = vmatprep.subr.mxu0 0.0
    %2387 = vmatpush1.msra.mxu0 0.0
    %2388 = vmatprep.subr.mxu0 0.0
    %2389 = vmatpush1.msra.mxu0 0.0
    %2390 = vmatprep.subr.mxu0 0.0
    %2391 = vmatpush1.msra.mxu0 0.0
    %2392 = vmatprep.subr.mxu0 0.0
    %2393 = vmatpush1.msra.mxu0 0.0
    %2394 = vmatprep.subr.mxu0 0.0
    %2395 = vmatpush1.msra.mxu0 0.0
    %2396 = vmatprep.subr.mxu0 0.0
    %2397 = vmatpush1.msra.mxu0 0.0
    %2398 = vmatprep.mubr.f32.mxu0 0.0
    %v2399 = vand.u32 %v2232, 4294901760
    %2400 = vmatmul.mubr.f32.gmra.mrb[0].mxu0 %v2399
    %v2401 = vpop.f32.mrb[0].mxu0
    %v2402 = vadd.f32 %v2311, %v2401
    %v2403 = vpop.f32.mrb[0].mxu0
    %2404 = vmatprep.mubr.f32.mxu0 0.0
    %v2405 = vand.u32 %v2235, 4294901760
    %2406 = vmatmul.mubr.f32.gmra.mrb[0].mxu0 %v2405
    %v2407 = vpop.f32.mrb[0].mxu0
    %v2408 = vadd.f32 %v2321, %v2407
    %v2409 = vpop.f32.mrb[0].mxu0
    %2410 = vdwg.mxu0
    %2411 = vmatprep.subr.mxu0 0.0
    %v2412 = vand.u32 %v2226, 4294901760
    %v2413 = vsub.f32 %v2226, %v2412
    %2414 = vmatpush1.msra.mxu0 %v2413
    %2415 = vmatprep.subr.mxu0 0.0
    %v2416 = vand.u32 %v2228, 4294901760
    %v2417 = vsub.f32 %v2228, %v2416
    %2418 = vmatpush1.msra.mxu0 %v2417
    %2419 = vmatprep.subr.mxu0 0.0
    %2420 = vmatpush1.msra.mxu0 0.0
    %2421 = vmatprep.subr.mxu0 0.0
    %2422 = vmatpush1.msra.mxu0 0.0
    %2423 = vmatprep.subr.mxu0 0.0
    %2424 = vmatpush1.msra.mxu0 0.0
    %2425 = vmatprep.subr.mxu0 0.0
    %2426 = vmatpush1.msra.mxu0 0.0
    %2427 = vmatprep.subr.mxu0 0.0
    %2428 = vmatpush1.msra.mxu0 0.0
    %2429 = vmatprep.subr.mxu0 0.0
    %2430 = vmatpush1.msra.mxu0 0.0
    %2431 = vmatprep.subr.mxu0 0.0
    %2432 = vmatpush1.msra.mxu0 0.0
    %2433 = vmatprep.subr.mxu0 0.0
    %2434 = vmatpush1.msra.mxu0 0.0
    %2435 = vmatprep.subr.mxu0 0.0
    %2436 = vmatpush1.msra.mxu0 0.0
    %2437 = vmatprep.subr.mxu0 0.0
    %2438 = vmatpush1.msra.mxu0 0.0
    %2439 = vmatprep.subr.mxu0 0.0
    %2440 = vmatpush1.msra.mxu0 0.0
    %2441 = vmatprep.subr.mxu0 0.0
    %2442 = vmatpush1.msra.mxu0 0.0
    %2443 = vmatprep.subr.mxu0 0.0
    %2444 = vmatpush1.msra.mxu0 0.0
    %2445 = vmatprep.subr.mxu0 0.0
    %2446 = vmatpush1.msra.mxu0 0.0
    %2447 = vmatprep.subr.mxu0 0.0
    %2448 = vmatpush1.msra.mxu0 0.0
    %2449 = vmatprep.subr.mxu0 0.0
    %2450 = vmatpush1.msra.mxu0 0.0
    %2451 = vmatprep.subr.mxu0 0.0
    %2452 = vmatpush1.msra.mxu0 0.0
    %2453 = vmatprep.subr.mxu0 0.0
    %2454 = vmatpush1.msra.mxu0 0.0
    %2455 = vmatprep.subr.mxu0 0.0
    %2456 = vmatpush1.msra.mxu0 0.0
    %2457 = vmatprep.subr.mxu0 0.0
    %2458 = vmatpush1.msra.mxu0 0.0
    %2459 = vmatprep.subr.mxu0 0.0
    %2460 = vmatpush1.msra.mxu0 0.0
    %2461 = vmatprep.subr.mxu0 0.0
    %2462 = vmatpush1.msra.mxu0 0.0
    %2463 = vmatprep.subr.mxu0 0.0
    %2464 = vmatpush1.msra.mxu0 0.0
    %2465 = vmatprep.subr.mxu0 0.0
    %2466 = vmatpush1.msra.mxu0 0.0
    %2467 = vmatprep.subr.mxu0 0.0
    %2468 = vmatpush1.msra.mxu0 0.0
    %2469 = vmatprep.subr.mxu0 0.0
    %2470 = vmatpush1.msra.mxu0 0.0
    %2471 = vmatprep.subr.mxu0 0.0
    %2472 = vmatpush1.msra.mxu0 0.0
    %2473 = vmatprep.subr.mxu0 0.0
    %2474 = vmatpush1.msra.mxu0 0.0
    %2475 = vmatprep.subr.mxu0 0.0
    %2476 = vmatpush1.msra.mxu0 0.0
    %2477 = vmatprep.subr.mxu0 0.0
    %2478 = vmatpush1.msra.mxu0 0.0
    %2479 = vmatprep.mubr.f32.mxu0 0.0
    %v2480 = vand.u32 %v2232, 4294901760
    %v2481 = vsub.f32 %v2232, %v2480
    %2482 = vmatmul.mubr.f32.gmra.mrb[0].mxu0 %v2481
    %v2483 = vpop.f32.mrb[0].mxu0
    %v2484 = vadd.f32 %v2402, %v2483
    %v2485 = vpop.f32.mrb[0].mxu0
    %2486 = vmatprep.mubr.f32.mxu0 0.0
    %v2487 = vand.u32 %v2235, 4294901760
    %v2488 = vsub.f32 %v2235, %v2487
    %2489 = vmatmul.mubr.f32.gmra.mrb[0].mxu0 %v2488
    %v2490 = vpop.f32.mrb[0].mxu0
    %v2491 = vadd.f32 %v2408, %v2490
    %v2492 = vpop.f32.mrb[0].mxu0
    %2493 = vdwg.mxu0
    %2494 = vmatprep.subr.mxu0 0.0
    %v2495 = vand.u32 %v2226, 4294901760
    %2496 = vmatpush1.msra.mxu0 %v2495
    %2497 = vmatprep.subr.mxu0 0.0
    %v2498 = vand.u32 %v2228, 4294901760
    %2499 = vmatpush1.msra.mxu0 %v2498
    %2500 = vmatprep.subr.mxu0 0.0
    %2501 = vmatpush1.msra.mxu0 0.0
    %2502 = vmatprep.subr.mxu0 0.0
    %2503 = vmatpush1.msra.mxu0 0.0
    %2504 = vmatprep.subr.mxu0 0.0
    %2505 = vmatpush1.msra.mxu0 0.0
    %2506 = vmatprep.subr.mxu0 0.0
    %2507 = vmatpush1.msra.mxu0 0.0
    %2508 = vmatprep.subr.mxu0 0.0
    %2509 = vmatpush1.msra.mxu0 0.0
    %2510 = vmatprep.subr.mxu0 0.0
    %2511 = vmatpush1.msra.mxu0 0.0
    %2512 = vmatprep.subr.mxu0 0.0
    %2513 = vmatpush1.msra.mxu0 0.0
    %2514 = vmatprep.subr.mxu0 0.0
    %2515 = vmatpush1.msra.mxu0 0.0
    %2516 = vmatprep.subr.mxu0 0.0
    %2517 = vmatpush1.msra.mxu0 0.0
    %2518 = vmatprep.subr.mxu0 0.0
    %2519 = vmatpush1.msra.mxu0 0.0
    %2520 = vmatprep.subr.mxu0 0.0
    %2521 = vmatpush1.msra.mxu0 0.0
    %2522 = vmatprep.subr.mxu0 0.0
    %2523 = vmatpush1.msra.mxu0 0.0
    %2524 = vmatprep.subr.mxu0 0.0
    %2525 = vmatpush1.msra.mxu0 0.0
    %2526 = vmatprep.subr.mxu0 0.0
    %2527 = vmatpush1.msra.mxu0 0.0
    %2528 = vmatprep.subr.mxu0 0.0
    %2529 = vmatpush1.msra.mxu0 0.0
    %2530 = vmatprep.subr.mxu0 0.0
    %2531 = vmatpush1.msra.mxu0 0.0
    %2532 = vmatprep.subr.mxu0 0.0
    %2533 = vmatpush1.msra.mxu0 0.0
    %2534 = vmatprep.subr.mxu0 0.0
    %2535 = vmatpush1.msra.mxu0 0.0
    %2536 = vmatprep.subr.mxu0 0.0
    %2537 = vmatpush1.msra.mxu0 0.0
    %2538 = vmatprep.subr.mxu0 0.0
    %2539 = vmatpush1.msra.mxu0 0.0
    %2540 = vmatprep.subr.mxu0 0.0
    %2541 = vmatpush1.msra.mxu0 0.0
    %2542 = vmatprep.subr.mxu0 0.0
    %2543 = vmatpush1.msra.mxu0 0.0
    %2544 = vmatprep.subr.mxu0 0.0
    %2545 = vmatpush1.msra.mxu0 0.0
    %2546 = vmatprep.subr.mxu0 0.0
    %2547 = vmatpush1.msra.mxu0 0.0
    %2548 = vmatprep.subr.mxu0 0.0
    %2549 = vmatpush1.msra.mxu0 0.0
    %2550 = vmatprep.subr.mxu0 0.0
    %2551 = vmatpush1.msra.mxu0 0.0
    %2552 = vmatprep.subr.mxu0 0.0
    %2553 = vmatpush1.msra.mxu0 0.0
    %2554 = vmatprep.subr.mxu0 0.0
    %2555 = vmatpush1.msra.mxu0 0.0
    %2556 = vmatprep.subr.mxu0 0.0
    %2557 = vmatpush1.msra.mxu0 0.0
    %2558 = vmatprep.subr.mxu0 0.0
    %2559 = vmatpush1.msra.mxu0 0.0
    %2560 = vmatprep.mubr.f32.mxu0 0.0
    %v2561 = vand.u32 %v2232, 4294901760
    %v2562 = vsub.f32 %v2232, %v2561
    %v2563 = vand.u32 %v2562, 4294901760
    %2564 = vmatmul.mubr.f32.gmra.mrb[0].mxu0 %v2563
    %v2565 = vpop.f32.mrb[0].mxu0
    %v2566 = vadd.f32 %v2484, %v2565
    %v2567 = vpop.f32.mrb[0].mxu0
    %2568 = vmatprep.mubr.f32.mxu0 0.0
    %v2569 = vand.u32 %v2235, 4294901760
    %v2570 = vsub.f32 %v2235, %v2569
    %v2571 = vand.u32 %v2570, 4294901760
    %2572 = vmatmul.mubr.f32.gmra.mrb[0].mxu0 %v2571
    %v2573 = vpop.f32.mrb[0].mxu0
    %v2574 = vadd.f32 %v2491, %v2573
    %v2575 = vpop.f32.mrb[0].mxu0
    %2576 = vdwg.mxu0
    %2577 = vmatprep.subr.mxu0 0.0
    %v2578 = vand.u32 %v2226, 4294901760
    %v2579 = vsub.f32 %v2226, %v2578
    %v2580 = vand.u32 %v2579, 4294901760
    %2581 = vmatpush1.msra.mxu0 %v2580
    %2582 = vmatprep.subr.mxu0 0.0
    %v2583 = vand.u32 %v2228, 4294901760
    %v2584 = vsub.f32 %v2228, %v2583
    %v2585 = vand.u32 %v2584, 4294901760
    %2586 = vmatpush1.msra.mxu0 %v2585
    %2587 = vmatprep.subr.mxu0 0.0
    %2588 = vmatpush1.msra.mxu0 0.0
    %2589 = vmatprep.subr.mxu0 0.0
    %2590 = vmatpush1.msra.mxu0 0.0
    %2591 = vmatprep.subr.mxu0 0.0
    %2592 = vmatpush1.msra.mxu0 0.0
    %2593 = vmatprep.subr.mxu0 0.0
    %2594 = vmatpush1.msra.mxu0 0.0
    %2595 = vmatprep.subr.mxu0 0.0
    %2596 = vmatpush1.msra.mxu0 0.0
    %2597 = vmatprep.subr.mxu0 0.0
    %2598 = vmatpush1.msra.mxu0 0.0
    %2599 = vmatprep.subr.mxu0 0.0
    %2600 = vmatpush1.msra.mxu0 0.0
    %2601 = vmatprep.subr.mxu0 0.0
    %2602 = vmatpush1.msra.mxu0 0.0
    %2603 = vmatprep.subr.mxu0 0.0
    %2604 = vmatpush1.msra.mxu0 0.0
    %2605 = vmatprep.subr.mxu0 0.0
    %2606 = vmatpush1.msra.mxu0 0.0
    %2607 = vmatprep.subr.mxu0 0.0
    %2608 = vmatpush1.msra.mxu0 0.0
    %2609 = vmatprep.subr.mxu0 0.0
    %2610 = vmatpush1.msra.mxu0 0.0
    %2611 = vmatprep.subr.mxu0 0.0
    %2612 = vmatpush1.msra.mxu0 0.0
    %2613 = vmatprep.subr.mxu0 0.0
    %2614 = vmatpush1.msra.mxu0 0.0
    %2615 = vmatprep.subr.mxu0 0.0
    %2616 = vmatpush1.msra.mxu0 0.0
    %2617 = vmatprep.subr.mxu0 0.0
    %2618 = vmatpush1.msra.mxu0 0.0
    %2619 = vmatprep.subr.mxu0 0.0
    %2620 = vmatpush1.msra.mxu0 0.0
    %2621 = vmatprep.subr.mxu0 0.0
    %2622 = vmatpush1.msra.mxu0 0.0
    %2623 = vmatprep.subr.mxu0 0.0
    %2624 = vmatpush1.msra.mxu0 0.0
    %2625 = vmatprep.subr.mxu0 0.0
    %2626 = vmatpush1.msra.mxu0 0.0
    %2627 = vmatprep.subr.mxu0 0.0
    %2628 = vmatpush1.msra.mxu0 0.0
    %2629 = vmatprep.subr.mxu0 0.0
    %2630 = vmatpush1.msra.mxu0 0.0
    %2631 = vmatprep.subr.mxu0 0.0
    %2632 = vmatpush1.msra.mxu0 0.0
    %2633 = vmatprep.subr.mxu0 0.0
    %2634 = vmatpush1.msra.mxu0 0.0
    %2635 = vmatprep.subr.mxu0 0.0
    %2636 = vmatpush1.msra.mxu0 0.0
    %2637 = vmatprep.subr.mxu0 0.0
    %2638 = vmatpush1.msra.mxu0 0.0
    %2639 = vmatprep.subr.mxu0 0.0
    %2640 = vmatpush1.msra.mxu0 0.0
    %2641 = vmatprep.subr.mxu0 0.0
    %2642 = vmatpush1.msra.mxu0 0.0
    %2643 = vmatprep.subr.mxu0 0.0
    %2644 = vmatpush1.msra.mxu0 0.0
    %2645 = vmatprep.subr.mxu0 0.0
    %2646 = vmatpush1.msra.mxu0 0.0
    %2647 = vmatprep.mubr.f32.mxu0 0.0
    %v2648 = vand.u32 %v2232, 4294901760
    %2649 = vmatmul.mubr.f32.gmra.mrb[0].mxu0 %v2648
    %v2650 = vpop.f32.mrb[0].mxu0
    %v2651 = vadd.f32 %v2566, %v2650
    %v2652 = vpop.f32.mrb[0].mxu0
    %2653 = vmatprep.mubr.f32.mxu0 0.0
    %v2654 = vand.u32 %v2235, 4294901760
    %2655 = vmatmul.mubr.f32.gmra.mrb[0].mxu0 %v2654
    %v2656 = vpop.f32.mrb[0].mxu0
    %v2657 = vadd.f32 %v2574, %v2656
    %v2658 = vpop.f32.mrb[0].mxu0
    %2659 = vdwg.mxu0
    %2660 = vmatprep.subr.mxu0 0.0
    %v2661 = vand.u32 %v2226, 4294901760
    %2662 = vmatpush1.msra.mxu0 %v2661
    %2663 = vmatprep.subr.mxu0 0.0
    %v2664 = vand.u32 %v2228, 4294901760
    %2665 = vmatpush1.msra.mxu0 %v2664
    %2666 = vmatprep.subr.mxu0 0.0
    %2667 = vmatpush1.msra.mxu0 0.0
    %2668 = vmatprep.subr.mxu0 0.0
    %2669 = vmatpush1.msra.mxu0 0.0
    %2670 = vmatprep.subr.mxu0 0.0
    %2671 = vmatpush1.msra.mxu0 0.0
    %2672 = vmatprep.subr.mxu0 0.0
    %2673 = vmatpush1.msra.mxu0 0.0
    %2674 = vmatprep.subr.mxu0 0.0
    %2675 = vmatpush1.msra.mxu0 0.0
    %2676 = vmatprep.subr.mxu0 0.0
    %2677 = vmatpush1.msra.mxu0 0.0
    %2678 = vmatprep.subr.mxu0 0.0
    %2679 = vmatpush1.msra.mxu0 0.0
    %2680 = vmatprep.subr.mxu0 0.0
    %2681 = vmatpush1.msra.mxu0 0.0
    %2682 = vmatprep.subr.mxu0 0.0
    %2683 = vmatpush1.msra.mxu0 0.0
    %2684 = vmatprep.subr.mxu0 0.0
    %2685 = vmatpush1.msra.mxu0 0.0
    %2686 = vmatprep.subr.mxu0 0.0
    %2687 = vmatpush1.msra.mxu0 0.0
    %2688 = vmatprep.subr.mxu0 0.0
    %2689 = vmatpush1.msra.mxu0 0.0
    %2690 = vmatprep.subr.mxu0 0.0
    %2691 = vmatpush1.msra.mxu0 0.0
    %2692 = vmatprep.subr.mxu0 0.0
    %2693 = vmatpush1.msra.mxu0 0.0
    %2694 = vmatprep.subr.mxu0 0.0
    %2695 = vmatpush1.msra.mxu0 0.0
    %2696 = vmatprep.subr.mxu0 0.0
    %2697 = vmatpush1.msra.mxu0 0.0
    %2698 = vmatprep.subr.mxu0 0.0
    %2699 = vmatpush1.msra.mxu0 0.0
    %2700 = vmatprep.subr.mxu0 0.0
    %2701 = vmatpush1.msra.mxu0 0.0
    %2702 = vmatprep.subr.mxu0 0.0
    %2703 = vmatpush1.msra.mxu0 0.0
    %2704 = vmatprep.subr.mxu0 0.0
    %2705 = vmatpush1.msra.mxu0 0.0
    %2706 = vmatprep.subr.mxu0 0.0
    %2707 = vmatpush1.msra.mxu0 0.0
    %2708 = vmatprep.subr.mxu0 0.0
    %2709 = vmatpush1.msra.mxu0 0.0
    %2710 = vmatprep.subr.mxu0 0.0
    %2711 = vmatpush1.msra.mxu0 0.0
    %2712 = vmatprep.subr.mxu0 0.0
    %2713 = vmatpush1.msra.mxu0 0.0
    %2714 = vmatprep.subr.mxu0 0.0
    %2715 = vmatpush1.msra.mxu0 0.0
    %2716 = vmatprep.subr.mxu0 0.0
    %2717 = vmatpush1.msra.mxu0 0.0
    %2718 = vmatprep.subr.mxu0 0.0
    %2719 = vmatpush1.msra.mxu0 0.0
    %2720 = vmatprep.subr.mxu0 0.0
    %2721 = vmatpush1.msra.mxu0 0.0
    %2722 = vmatprep.subr.mxu0 0.0
    %2723 = vmatpush1.msra.mxu0 0.0
    %2724 = vmatprep.subr.mxu0 0.0
    %2725 = vmatpush1.msra.mxu0 0.0
    %2726 = vmatprep.mubr.f32.mxu0 0.0
    %v2727 = vand.u32 %v2232, 4294901760
    %2728 = vmatmul.mubr.f32.gmra.mrb[0].mxu0 %v2727
    %v2729 = vpop.f32.mrb[0].mxu0
    %v2730 = vadd.f32 %v2651, %v2729
    %v2731 = vpop.f32.mrb[0].mxu0
    %2732 = vmatprep.mubr.f32.mxu0 0.0
    %v2733 = vand.u32 %v2235, 4294901760
    %2734 = vmatmul.mubr.f32.gmra.mrb[0].mxu0 %v2733
    %v2735 = vpop.f32.mrb[0].mxu0
    %v2736 = vadd.f32 %v2657, %v2735
    %v2737 = vpop.f32.mrb[0].mxu0
    %2738 = vdwg.mxu0
    %2739 = vrot.lane.b32.xlu0 %v630, 96
    %v2740 = vpop.permute.xlu0 %2739
    %2741 = vrot.lane.b32.xlu0 %v631, 96
    %v2742 = vpop.permute.xlu0 %2741
    %2743 = vrot.lane.b32.xlu0 %v619, 32
    %v2744 = vpop.permute.xlu0 %2743
    %2745 = vrot.lane.b32.xlu0 %v626, 32
    %v2746 = vpop.permute.xlu0 %2745
    %v2747 = vsel %vm640, %v2740, 0
    %v2749 = vsel %vm640, %v2742, 0
    %v2751 = vsel %vm640, %v2744, 0
    %v2753 = vsel %vm640, %v2746, 0
    %2755 = vmatprep.subr.mxu0 0.0
    %v2756 = vand.u32 %v2751, 4294901760
    %2757 = vmatpush1.xpose.msra.mxu0 %v2756
    %2758 = vmatprep.subr.mxu0 0.0
    %v2759 = vand.u32 %v2753, 4294901760
    %2760 = vmatpush1.xpose.msra.mxu0 %v2759
    %2761 = vmatprep.subr.mxu0 0.0
    %2762 = vmatpush1.xpose.msra.mxu0 0.0
    %2763 = vmatprep.subr.mxu0 0.0
    %2764 = vmatpush1.xpose.msra.mxu0 0.0
    %2765 = vmatprep.subr.mxu0 0.0
    %2766 = vmatpush1.xpose.msra.mxu0 0.0
    %2767 = vmatprep.subr.mxu0 0.0
    %2768 = vmatpush1.xpose.msra.mxu0 0.0
    %2769 = vmatprep.subr.mxu0 0.0
    %2770 = vmatpush1.xpose.msra.mxu0 0.0
    %2771 = vmatprep.subr.mxu0 0.0
    %2772 = vmatpush1.xpose.msra.mxu0 0.0
    %2773 = vmatprep.subr.mxu0 0.0
    %2774 = vmatpush1.xpose.msra.mxu0 0.0
    %2775 = vmatprep.subr.mxu0 0.0
    %2776 = vmatpush1.xpose.msra.mxu0 0.0
    %2777 = vmatprep.subr.mxu0 0.0
    %2778 = vmatpush1.xpose.msra.mxu0 0.0
    %2779 = vmatprep.subr.mxu0 0.0
    %2780 = vmatpush1.xpose.msra.mxu0 0.0
    %2781 = vmatprep.subr.mxu0 0.0
    %2782 = vmatpush1.xpose.msra.mxu0 0.0
    %2783 = vmatprep.subr.mxu0 0.0
    %2784 = vmatpush1.xpose.msra.mxu0 0.0
    %2785 = vmatprep.subr.mxu0 0.0
    %2786 = vmatpush1.xpose.msra.mxu0 0.0
    %2787 = vmatprep.subr.mxu0 0.0
    %2788 = vmatpush1.xpose.msra.mxu0 0.0
    %2789 = vmatprep.subr.mxu0 0.0
    %2790 = vmatpush1.xpose.msra.mxu0 0.0
    %2791 = vmatprep.subr.mxu0 0.0
    %2792 = vmatpush1.xpose.msra.mxu0 0.0
    %2793 = vmatprep.subr.mxu0 0.0
    %2794 = vmatpush1.xpose.msra.mxu0 0.0
    %2795 = vmatprep.subr.mxu0 0.0
    %2796 = vmatpush1.xpose.msra.mxu0 0.0
    %2797 = vmatprep.subr.mxu0 0.0
    %2798 = vmatpush1.xpose.msra.mxu0 0.0
    %2799 = vmatprep.subr.mxu0 0.0
    %2800 = vmatpush1.xpose.msra.mxu0 0.0
    %2801 = vmatprep.subr.mxu0 0.0
    %2802 = vmatpush1.xpose.msra.mxu0 0.0
    %2803 = vmatprep.subr.mxu0 0.0
    %2804 = vmatpush1.xpose.msra.mxu0 0.0
    %2805 = vmatprep.subr.mxu0 0.0
    %2806 = vmatpush1.xpose.msra.mxu0 0.0
    %2807 = vmatprep.subr.mxu0 0.0
    %2808 = vmatpush1.xpose.msra.mxu0 0.0
    %2809 = vmatprep.subr.mxu0 0.0
    %2810 = vmatpush1.xpose.msra.mxu0 0.0
    %2811 = vmatprep.subr.mxu0 0.0
    %2812 = vmatpush1.xpose.msra.mxu0 0.0
    %2813 = vmatprep.subr.mxu0 0.0
    %2814 = vmatpush1.xpose.msra.mxu0 0.0
    %2815 = vmatprep.subr.mxu0 0.0
    %2816 = vmatpush1.xpose.msra.mxu0 0.0
    %2817 = vmatprep.subr.mxu0 0.0
    %2818 = vmatpush1.xpose.msra.mxu0 0.0
    %2819 = vmatprep.subr.mxu0 0.0
    %2820 = vmatpush1.xpose.msra.mxu0 0.0
    %2821 = vmatprep.mubr.f32.mxu0 0.0
    %v2822 = vand.u32 %v2747, 4294901760
    %v2823 = vsub.f32 %v2747, %v2822
    %v2824 = vand.u32 %v2823, 4294901760
    %v2825 = vsub.f32 %v2823, %v2824
    %v2826 = vand.u32 %v2825, 4294901760
    %2827 = vmatmul.mubr.f32.gmra.mrb[0].mxu0 %v2826
    %v2828 = vpop.f32.mrb[0].mxu0
    %v2829 = vadd.f32 %v632, %v2828
    %v2830 = vpop.f32.mrb[0].mxu0
    %2831 = vmatprep.mubr.f32.mxu0 0.0
    %v2832 = vand.u32 %v2749, 4294901760
    %v2833 = vsub.f32 %v2749, %v2832
    %v2834 = vand.u32 %v2833, 4294901760
    %v2835 = vsub.f32 %v2833, %v2834
    %v2836 = vand.u32 %v2835, 4294901760
    %2837 = vmatmul.mubr.f32.gmra.mrb[0].mxu0 %v2836
    %v2838 = vpop.f32.mrb[0].mxu0
    %v2839 = vadd.f32 %v633, %v2838
    %v2840 = vpop.f32.mrb[0].mxu0
    %2841 = vdwg.mxu0
    %2842 = vmatprep.subr.mxu0 0.0
    %v2843 = vand.u32 %v2751, 4294901760
    %v2844 = vsub.f32 %v2751, %v2843
    %v2845 = vand.u32 %v2844, 4294901760
    %v2846 = vsub.f32 %v2844, %v2845
    %v2847 = vand.u32 %v2846, 4294901760
    %2848 = vmatpush1.xpose.msra.mxu0 %v2847
    %2849 = vmatprep.subr.mxu0 0.0
    %v2850 = vand.u32 %v2753, 4294901760
    %v2851 = vsub.f32 %v2753, %v2850
    %v2852 = vand.u32 %v2851, 4294901760
    %v2853 = vsub.f32 %v2851, %v2852
    %v2854 = vand.u32 %v2853, 4294901760
    %2855 = vmatpush1.xpose.msra.mxu0 %v2854
    %2856 = vmatprep.subr.mxu0 0.0
    %2857 = vmatpush1.xpose.msra.mxu0 0.0
    %2858 = vmatprep.subr.mxu0 0.0
    %2859 = vmatpush1.xpose.msra.mxu0 0.0
    %2860 = vmatprep.subr.mxu0 0.0
    %2861 = vmatpush1.xpose.msra.mxu0 0.0
    %2862 = vmatprep.subr.mxu0 0.0
    %2863 = vmatpush1.xpose.msra.mxu0 0.0
    %2864 = vmatprep.subr.mxu0 0.0
    %2865 = vmatpush1.xpose.msra.mxu0 0.0
    %2866 = vmatprep.subr.mxu0 0.0
    %2867 = vmatpush1.xpose.msra.mxu0 0.0
    %2868 = vmatprep.subr.mxu0 0.0
    %2869 = vmatpush1.xpose.msra.mxu0 0.0
    %2870 = vmatprep.subr.mxu0 0.0
    %2871 = vmatpush1.xpose.msra.mxu0 0.0
    %2872 = vmatprep.subr.mxu0 0.0
    %2873 = vmatpush1.xpose.msra.mxu0 0.0
    %2874 = vmatprep.subr.mxu0 0.0
    %2875 = vmatpush1.xpose.msra.mxu0 0.0
    %2876 = vmatprep.subr.mxu0 0.0
    %2877 = vmatpush1.xpose.msra.mxu0 0.0
    %2878 = vmatprep.subr.mxu0 0.0
    %2879 = vmatpush1.xpose.msra.mxu0 0.0
    %2880 = vmatprep.subr.mxu0 0.0
    %2881 = vmatpush1.xpose.msra.mxu0 0.0
    %2882 = vmatprep.subr.mxu0 0.0
    %2883 = vmatpush1.xpose.msra.mxu0 0.0
    %2884 = vmatprep.subr.mxu0 0.0
    %2885 = vmatpush1.xpose.msra.mxu0 0.0
    %2886 = vmatprep.subr.mxu0 0.0
    %2887 = vmatpush1.xpose.msra.mxu0 0.0
    %2888 = vmatprep.subr.mxu0 0.0
    %2889 = vmatpush1.xpose.msra.mxu0 0.0
    %2890 = vmatprep.subr.mxu0 0.0
    %2891 = vmatpush1.xpose.msra.mxu0 0.0
    %2892 = vmatprep.subr.mxu0 0.0
    %2893 = vmatpush1.xpose.msra.mxu0 0.0
    %2894 = vmatprep.subr.mxu0 0.0
    %2895 = vmatpush1.xpose.msra.mxu0 0.0
    %2896 = vmatprep.subr.mxu0 0.0
    %2897 = vmatpush1.xpose.msra.mxu0 0.0
    %2898 = vmatprep.subr.mxu0 0.0
    %2899 = vmatpush1.xpose.msra.mxu0 0.0
    %2900 = vmatprep.subr.mxu0 0.0
    %2901 = vmatpush1.xpose.msra.mxu0 0.0
    %2902 = vmatprep.subr.mxu0 0.0
    %2903 = vmatpush1.xpose.msra.mxu0 0.0
    %2904 = vmatprep.subr.mxu0 0.0
    %2905 = vmatpush1.xpose.msra.mxu0 0.0
    %2906 = vmatprep.subr.mxu0 0.0
    %2907 = vmatpush1.xpose.msra.mxu0 0.0
    %2908 = vmatprep.subr.mxu0 0.0
    %2909 = vmatpush1.xpose.msra.mxu0 0.0
    %2910 = vmatprep.subr.mxu0 0.0
    %2911 = vmatpush1.xpose.msra.mxu0 0.0
    %2912 = vmatprep.subr.mxu0 0.0
    %2913 = vmatpush1.xpose.msra.mxu0 0.0
    %2914 = vmatprep.subr.mxu0 0.0
    %2915 = vmatpush1.xpose.msra.mxu0 0.0
    %2916 = vmatprep.mubr.f32.mxu0 0.0
    %v2917 = vand.u32 %v2747, 4294901760
    %2918 = vmatmul.mubr.f32.gmra.mrb[0].mxu0 %v2917
    %v2919 = vpop.f32.mrb[0].mxu0
    %v2920 = vadd.f32 %v2829, %v2919
    %v2921 = vpop.f32.mrb[0].mxu0
    %2922 = vmatprep.mubr.f32.mxu0 0.0
    %v2923 = vand.u32 %v2749, 4294901760
    %2924 = vmatmul.mubr.f32.gmra.mrb[0].mxu0 %v2923
    %v2925 = vpop.f32.mrb[0].mxu0
    %v2926 = vadd.f32 %v2839, %v2925
    %v2927 = vpop.f32.mrb[0].mxu0
    %2928 = vdwg.mxu0
    %2929 = vmatprep.subr.mxu0 0.0
    %v2930 = vand.u32 %v2751, 4294901760
    %v2931 = vsub.f32 %v2751, %v2930
    %2932 = vmatpush1.xpose.msra.mxu0 %v2931
    %2933 = vmatprep.subr.mxu0 0.0
    %v2934 = vand.u32 %v2753, 4294901760
    %v2935 = vsub.f32 %v2753, %v2934
    %2936 = vmatpush1.xpose.msra.mxu0 %v2935
    %2937 = vmatprep.subr.mxu0 0.0
    %2938 = vmatpush1.xpose.msra.mxu0 0.0
    %2939 = vmatprep.subr.mxu0 0.0
    %2940 = vmatpush1.xpose.msra.mxu0 0.0
    %2941 = vmatprep.subr.mxu0 0.0
    %2942 = vmatpush1.xpose.msra.mxu0 0.0
    %2943 = vmatprep.subr.mxu0 0.0
    %2944 = vmatpush1.xpose.msra.mxu0 0.0
    %2945 = vmatprep.subr.mxu0 0.0
    %2946 = vmatpush1.xpose.msra.mxu0 0.0
    %2947 = vmatprep.subr.mxu0 0.0
    %2948 = vmatpush1.xpose.msra.mxu0 0.0
    %2949 = vmatprep.subr.mxu0 0.0
    %2950 = vmatpush1.xpose.msra.mxu0 0.0
    %2951 = vmatprep.subr.mxu0 0.0
    %2952 = vmatpush1.xpose.msra.mxu0 0.0
    %2953 = vmatprep.subr.mxu0 0.0
    %2954 = vmatpush1.xpose.msra.mxu0 0.0
    %2955 = vmatprep.subr.mxu0 0.0
    %2956 = vmatpush1.xpose.msra.mxu0 0.0
    %2957 = vmatprep.subr.mxu0 0.0
    %2958 = vmatpush1.xpose.msra.mxu0 0.0
    %2959 = vmatprep.subr.mxu0 0.0
    %2960 = vmatpush1.xpose.msra.mxu0 0.0
    %2961 = vmatprep.subr.mxu0 0.0
    %2962 = vmatpush1.xpose.msra.mxu0 0.0
    %2963 = vmatprep.subr.mxu0 0.0
    %2964 = vmatpush1.xpose.msra.mxu0 0.0
    %2965 = vmatprep.subr.mxu0 0.0
    %2966 = vmatpush1.xpose.msra.mxu0 0.0
    %2967 = vmatprep.subr.mxu0 0.0
    %2968 = vmatpush1.xpose.msra.mxu0 0.0
    %2969 = vmatprep.subr.mxu0 0.0
    %2970 = vmatpush1.xpose.msra.mxu0 0.0
    %2971 = vmatprep.subr.mxu0 0.0
    %2972 = vmatpush1.xpose.msra.mxu0 0.0
    %2973 = vmatprep.subr.mxu0 0.0
    %2974 = vmatpush1.xpose.msra.mxu0 0.0
    %2975 = vmatprep.subr.mxu0 0.0
    %2976 = vmatpush1.xpose.msra.mxu0 0.0
    %2977 = vmatprep.subr.mxu0 0.0
    %2978 = vmatpush1.xpose.msra.mxu0 0.0
    %2979 = vmatprep.subr.mxu0 0.0
    %2980 = vmatpush1.xpose.msra.mxu0 0.0
    %2981 = vmatprep.subr.mxu0 0.0
    %2982 = vmatpush1.xpose.msra.mxu0 0.0
    %2983 = vmatprep.subr.mxu0 0.0
    %2984 = vmatpush1.xpose.msra.mxu0 0.0
    %2985 = vmatprep.subr.mxu0 0.0
    %2986 = vmatpush1.xpose.msra.mxu0 0.0
    %2987 = vmatprep.subr.mxu0 0.0
    %2988 = vmatpush1.xpose.msra.mxu0 0.0
    %2989 = vmatprep.subr.mxu0 0.0
    %2990 = vmatpush1.xpose.msra.mxu0 0.0
    %2991 = vmatprep.subr.mxu0 0.0
    %2992 = vmatpush1.xpose.msra.mxu0 0.0
    %2993 = vmatprep.subr.mxu0 0.0
    %2994 = vmatpush1.xpose.msra.mxu0 0.0
    %2995 = vmatprep.subr.mxu0 0.0
    %2996 = vmatpush1.xpose.msra.mxu0 0.0
    %2997 = vmatprep.mubr.f32.mxu0 0.0
    %v2998 = vand.u32 %v2747, 4294901760
    %v2999 = vsub.f32 %v2747, %v2998
    %3000 = vmatmul.mubr.f32.gmra.mrb[0].mxu0 %v2999
    %v3001 = vpop.f32.mrb[0].mxu0
    %v3002 = vadd.f32 %v2920, %v3001
    %v3003 = vpop.f32.mrb[0].mxu0
    %3004 = vmatprep.mubr.f32.mxu0 0.0
    %v3005 = vand.u32 %v2749, 4294901760
    %v3006 = vsub.f32 %v2749, %v3005
    %3007 = vmatmul.mubr.f32.gmra.mrb[0].mxu0 %v3006
    %v3008 = vpop.f32.mrb[0].mxu0
    %v3009 = vadd.f32 %v2926, %v3008
    %v3010 = vpop.f32.mrb[0].mxu0
    %3011 = vdwg.mxu0
    %3012 = vmatprep.subr.mxu0 0.0
    %v3013 = vand.u32 %v2751, 4294901760
    %3014 = vmatpush1.xpose.msra.mxu0 %v3013
    %3015 = vmatprep.subr.mxu0 0.0
    %v3016 = vand.u32 %v2753, 4294901760
    %3017 = vmatpush1.xpose.msra.mxu0 %v3016
    %3018 = vmatprep.subr.mxu0 0.0
    %3019 = vmatpush1.xpose.msra.mxu0 0.0
    %3020 = vmatprep.subr.mxu0 0.0
    %3021 = vmatpush1.xpose.msra.mxu0 0.0
    %3022 = vmatprep.subr.mxu0 0.0
    %3023 = vmatpush1.xpose.msra.mxu0 0.0
    %3024 = vmatprep.subr.mxu0 0.0
    %3025 = vmatpush1.xpose.msra.mxu0 0.0
    %3026 = vmatprep.subr.mxu0 0.0
    %3027 = vmatpush1.xpose.msra.mxu0 0.0
    %3028 = vmatprep.subr.mxu0 0.0
    %3029 = vmatpush1.xpose.msra.mxu0 0.0
    %3030 = vmatprep.subr.mxu0 0.0
    %3031 = vmatpush1.xpose.msra.mxu0 0.0
    %3032 = vmatprep.subr.mxu0 0.0
    %3033 = vmatpush1.xpose.msra.mxu0 0.0
    %3034 = vmatprep.subr.mxu0 0.0
    %3035 = vmatpush1.xpose.msra.mxu0 0.0
    %3036 = vmatprep.subr.mxu0 0.0
    %3037 = vmatpush1.xpose.msra.mxu0 0.0
    %3038 = vmatprep.subr.mxu0 0.0
    %3039 = vmatpush1.xpose.msra.mxu0 0.0
    %3040 = vmatprep.subr.mxu0 0.0
    %3041 = vmatpush1.xpose.msra.mxu0 0.0
    %3042 = vmatprep.subr.mxu0 0.0
    %3043 = vmatpush1.xpose.msra.mxu0 0.0
    %3044 = vmatprep.subr.mxu0 0.0
    %3045 = vmatpush1.xpose.msra.mxu0 0.0
    %3046 = vmatprep.subr.mxu0 0.0
    %3047 = vmatpush1.xpose.msra.mxu0 0.0
    %3048 = vmatprep.subr.mxu0 0.0
    %3049 = vmatpush1.xpose.msra.mxu0 0.0
    %3050 = vmatprep.subr.mxu0 0.0
    %3051 = vmatpush1.xpose.msra.mxu0 0.0
    %3052 = vmatprep.subr.mxu0 0.0
    %3053 = vmatpush1.xpose.msra.mxu0 0.0
    %3054 = vmatprep.subr.mxu0 0.0
    %3055 = vmatpush1.xpose.msra.mxu0 0.0
    %3056 = vmatprep.subr.mxu0 0.0
    %3057 = vmatpush1.xpose.msra.mxu0 0.0
    %3058 = vmatprep.subr.mxu0 0.0
    %3059 = vmatpush1.xpose.msra.mxu0 0.0
    %3060 = vmatprep.subr.mxu0 0.0
    %3061 = vmatpush1.xpose.msra.mxu0 0.0
    %3062 = vmatprep.subr.mxu0 0.0
    %3063 = vmatpush1.xpose.msra.mxu0 0.0
    %3064 = vmatprep.subr.mxu0 0.0
    %3065 = vmatpush1.xpose.msra.mxu0 0.0
    %3066 = vmatprep.subr.mxu0 0.0
    %3067 = vmatpush1.xpose.msra.mxu0 0.0
    %3068 = vmatprep.subr.mxu0 0.0
    %3069 = vmatpush1.xpose.msra.mxu0 0.0
    %3070 = vmatprep.subr.mxu0 0.0
    %3071 = vmatpush1.xpose.msra.mxu0 0.0
    %3072 = vmatprep.subr.mxu0 0.0
    %3073 = vmatpush1.xpose.msra.mxu0 0.0
    %3074 = vmatprep.subr.mxu0 0.0
    %3075 = vmatpush1.xpose.msra.mxu0 0.0
    %3076 = vmatprep.subr.mxu0 0.0
    %3077 = vmatpush1.xpose.msra.mxu0 0.0
    %3078 = vmatprep.mubr.f32.mxu0 0.0
    %v3079 = vand.u32 %v2747, 4294901760
    %v3080 = vsub.f32 %v2747, %v3079
    %v3081 = vand.u32 %v3080, 4294901760
    %3082 = vmatmul.mubr.f32.gmra.mrb[0].mxu0 %v3081
    %v3083 = vpop.f32.mrb[0].mxu0
    %v3084 = vadd.f32 %v3002, %v3083
    %v3085 = vpop.f32.mrb[0].mxu0
    %3086 = vmatprep.mubr.f32.mxu0 0.0
    %v3087 = vand.u32 %v2749, 4294901760
    %v3088 = vsub.f32 %v2749, %v3087
    %v3089 = vand.u32 %v3088, 4294901760
    %3090 = vmatmul.mubr.f32.gmra.mrb[0].mxu0 %v3089
    %v3091 = vpop.f32.mrb[0].mxu0
    %v3092 = vadd.f32 %v3009, %v3091
    %v3093 = vpop.f32.mrb[0].mxu0
    %3094 = vdwg.mxu0
    %3095 = vmatprep.subr.mxu0 0.0
    %v3096 = vand.u32 %v2751, 4294901760
    %v3097 = vsub.f32 %v2751, %v3096
    %v3098 = vand.u32 %v3097, 4294901760
    %3099 = vmatpush1.xpose.msra.mxu0 %v3098
    %3100 = vmatprep.subr.mxu0 0.0
    %v3101 = vand.u32 %v2753, 4294901760
    %v3102 = vsub.f32 %v2753, %v3101
    %v3103 = vand.u32 %v3102, 4294901760
    %3104 = vmatpush1.xpose.msra.mxu0 %v3103
    %3105 = vmatprep.subr.mxu0 0.0
    %3106 = vmatpush1.xpose.msra.mxu0 0.0
    %3107 = vmatprep.subr.mxu0 0.0
    %3108 = vmatpush1.xpose.msra.mxu0 0.0
    %3109 = vmatprep.subr.mxu0 0.0
    %3110 = vmatpush1.xpose.msra.mxu0 0.0
    %3111 = vmatprep.subr.mxu0 0.0
    %3112 = vmatpush1.xpose.msra.mxu0 0.0
    %3113 = vmatprep.subr.mxu0 0.0
    %3114 = vmatpush1.xpose.msra.mxu0 0.0
    %3115 = vmatprep.subr.mxu0 0.0
    %3116 = vmatpush1.xpose.msra.mxu0 0.0
    %3117 = vmatprep.subr.mxu0 0.0
    %3118 = vmatpush1.xpose.msra.mxu0 0.0
    %3119 = vmatprep.subr.mxu0 0.0
    %3120 = vmatpush1.xpose.msra.mxu0 0.0
    %3121 = vmatprep.subr.mxu0 0.0
    %3122 = vmatpush1.xpose.msra.mxu0 0.0
    %3123 = vmatprep.subr.mxu0 0.0
    %3124 = vmatpush1.xpose.msra.mxu0 0.0
    %3125 = vmatprep.subr.mxu0 0.0
    %3126 = vmatpush1.xpose.msra.mxu0 0.0
    %3127 = vmatprep.subr.mxu0 0.0
    %3128 = vmatpush1.xpose.msra.mxu0 0.0
    %3129 = vmatprep.subr.mxu0 0.0
    %3130 = vmatpush1.xpose.msra.mxu0 0.0
    %3131 = vmatprep.subr.mxu0 0.0
    %3132 = vmatpush1.xpose.msra.mxu0 0.0
    %3133 = vmatprep.subr.mxu0 0.0
    %3134 = vmatpush1.xpose.msra.mxu0 0.0
    %3135 = vmatprep.subr.mxu0 0.0
    %3136 = vmatpush1.xpose.msra.mxu0 0.0
    %3137 = vmatprep.subr.mxu0 0.0
    %3138 = vmatpush1.xpose.msra.mxu0 0.0
    %3139 = vmatprep.subr.mxu0 0.0
    %3140 = vmatpush1.xpose.msra.mxu0 0.0
    %3141 = vmatprep.subr.mxu0 0.0
    %3142 = vmatpush1.xpose.msra.mxu0 0.0
    %3143 = vmatprep.subr.mxu0 0.0
    %3144 = vmatpush1.xpose.msra.mxu0 0.0
    %3145 = vmatprep.subr.mxu0 0.0
    %3146 = vmatpush1.xpose.msra.mxu0 0.0
    %3147 = vmatprep.subr.mxu0 0.0
    %3148 = vmatpush1.xpose.msra.mxu0 0.0
    %3149 = vmatprep.subr.mxu0 0.0
    %3150 = vmatpush1.xpose.msra.mxu0 0.0
    %3151 = vmatprep.subr.mxu0 0.0
    %3152 = vmatpush1.xpose.msra.mxu0 0.0
    %3153 = vmatprep.subr.mxu0 0.0
    %3154 = vmatpush1.xpose.msra.mxu0 0.0
    %3155 = vmatprep.subr.mxu0 0.0
    %3156 = vmatpush1.xpose.msra.mxu0 0.0
    %3157 = vmatprep.subr.mxu0 0.0
    %3158 = vmatpush1.xpose.msra.mxu0 0.0
    %3159 = vmatprep.subr.mxu0 0.0
    %3160 = vmatpush1.xpose.msra.mxu0 0.0
    %3161 = vmatprep.subr.mxu0 0.0
    %3162 = vmatpush1.xpose.msra.mxu0 0.0
    %3163 = vmatprep.subr.mxu0 0.0
    %3164 = vmatpush1.xpose.msra.mxu0 0.0
    %3165 = vmatprep.mubr.f32.mxu0 0.0
    %v3166 = vand.u32 %v2747, 4294901760
    %3167 = vmatmul.mubr.f32.gmra.mrb[0].mxu0 %v3166
    %v3168 = vpop.f32.mrb[0].mxu0
    %v3169 = vadd.f32 %v3084, %v3168
    %v3170 = vpop.f32.mrb[0].mxu0
    %3171 = vmatprep.mubr.f32.mxu0 0.0
    %v3172 = vand.u32 %v2749, 4294901760
    %3173 = vmatmul.mubr.f32.gmra.mrb[0].mxu0 %v3172
    %v3174 = vpop.f32.mrb[0].mxu0
    %v3175 = vadd.f32 %v3092, %v3174
    %v3176 = vpop.f32.mrb[0].mxu0
    %3177 = vdwg.mxu0
    %3178 = vmatprep.subr.mxu0 0.0
    %v3179 = vand.u32 %v2751, 4294901760
    %3180 = vmatpush1.xpose.msra.mxu0 %v3179
    %3181 = vmatprep.subr.mxu0 0.0
    %v3182 = vand.u32 %v2753, 4294901760
    %3183 = vmatpush1.xpose.msra.mxu0 %v3182
    %3184 = vmatprep.subr.mxu0 0.0
    %3185 = vmatpush1.xpose.msra.mxu0 0.0
    %3186 = vmatprep.subr.mxu0 0.0
    %3187 = vmatpush1.xpose.msra.mxu0 0.0
    %3188 = vmatprep.subr.mxu0 0.0
    %3189 = vmatpush1.xpose.msra.mxu0 0.0
    %3190 = vmatprep.subr.mxu0 0.0
    %3191 = vmatpush1.xpose.msra.mxu0 0.0
    %3192 = vmatprep.subr.mxu0 0.0
    %3193 = vmatpush1.xpose.msra.mxu0 0.0
    %3194 = vmatprep.subr.mxu0 0.0
    %3195 = vmatpush1.xpose.msra.mxu0 0.0
    %3196 = vmatprep.subr.mxu0 0.0
    %3197 = vmatpush1.xpose.msra.mxu0 0.0
    %3198 = vmatprep.subr.mxu0 0.0
    %3199 = vmatpush1.xpose.msra.mxu0 0.0
    %3200 = vmatprep.subr.mxu0 0.0
    %3201 = vmatpush1.xpose.msra.mxu0 0.0
    %3202 = vmatprep.subr.mxu0 0.0
    %3203 = vmatpush1.xpose.msra.mxu0 0.0
    %3204 = vmatprep.subr.mxu0 0.0
    %3205 = vmatpush1.xpose.msra.mxu0 0.0
    %3206 = vmatprep.subr.mxu0 0.0
    %3207 = vmatpush1.xpose.msra.mxu0 0.0
    %3208 = vmatprep.subr.mxu0 0.0
    %3209 = vmatpush1.xpose.msra.mxu0 0.0
    %3210 = vmatprep.subr.mxu0 0.0
    %3211 = vmatpush1.xpose.msra.mxu0 0.0
    %3212 = vmatprep.subr.mxu0 0.0
    %3213 = vmatpush1.xpose.msra.mxu0 0.0
    %3214 = vmatprep.subr.mxu0 0.0
    %3215 = vmatpush1.xpose.msra.mxu0 0.0
    %3216 = vmatprep.subr.mxu0 0.0
    %3217 = vmatpush1.xpose.msra.mxu0 0.0
    %3218 = vmatprep.subr.mxu0 0.0
    %3219 = vmatpush1.xpose.msra.mxu0 0.0
    %3220 = vmatprep.subr.mxu0 0.0
    %3221 = vmatpush1.xpose.msra.mxu0 0.0
    %3222 = vmatprep.subr.mxu0 0.0
    %3223 = vmatpush1.xpose.msra.mxu0 0.0
    %3224 = vmatprep.subr.mxu0 0.0
    %3225 = vmatpush1.xpose.msra.mxu0 0.0
    %3226 = vmatprep.subr.mxu0 0.0
    %3227 = vmatpush1.xpose.msra.mxu0 0.0
    %3228 = vmatprep.subr.mxu0 0.0
    %3229 = vmatpush1.xpose.msra.mxu0 0.0
    %3230 = vmatprep.subr.mxu0 0.0
    %3231 = vmatpush1.xpose.msra.mxu0 0.0
    %3232 = vmatprep.subr.mxu0 0.0
    %3233 = vmatpush1.xpose.msra.mxu0 0.0
    %3234 = vmatprep.subr.mxu0 0.0
    %3235 = vmatpush1.xpose.msra.mxu0 0.0
    %3236 = vmatprep.subr.mxu0 0.0
    %3237 = vmatpush1.xpose.msra.mxu0 0.0
    %3238 = vmatprep.subr.mxu0 0.0
    %3239 = vmatpush1.xpose.msra.mxu0 0.0
    %3240 = vmatprep.subr.mxu0 0.0
    %3241 = vmatpush1.xpose.msra.mxu0 0.0
    %3242 = vmatprep.subr.mxu0 0.0
    %3243 = vmatpush1.xpose.msra.mxu0 0.0
    %3244 = vmatprep.mubr.f32.mxu0 0.0
    %v3245 = vand.u32 %v2747, 4294901760
    %3246 = vmatmul.mubr.f32.gmra.mrb[0].mxu0 %v3245
    %v3247 = vpop.f32.mrb[0].mxu0
    %v3248 = vadd.f32 %v3169, %v3247
    %v3249 = vpop.f32.mrb[0].mxu0
    %3250 = vmatprep.mubr.f32.mxu0 0.0
    %v3251 = vand.u32 %v2749, 4294901760
    %3252 = vmatmul.mubr.f32.gmra.mrb[0].mxu0 %v3251
    %v3253 = vpop.f32.mrb[0].mxu0
    %v3254 = vadd.f32 %v3175, %v3253
    %v3255 = vpop.f32.mrb[0].mxu0
    %3256 = vdwg.mxu0
    %v3257 = vsel %vm640, %v3248, -inf
    %3258 = vmax.xlane.f32.xlu0 %v3257
    %v3259 = vpop.xlane.xlu0 %3258
    %v3260 = vsel %vm640, %v3254, -inf
    %3261 = vmax.xlane.f32.xlu0 %v3260
    %v3262 = vpop.xlane.xlu0 %3261
    %v3263 = vsub.f32 %v3248, %v3259
    %v3264 = vsub.f32 %v3254, %v3262
    %v3265 = vmul.f32 %v3263, 1.442695
    %v3266 = vpow.pop %v3265
    %v3267 = vmul.f32 %v3264, 1.442695
    %v3268 = vpow.pop %v3267
    %v3269 = vsel %vm640, %v3266, 0.0
    %3270 = vadd.xlane.f32.xlu0 %v3269
    %v3271 = vpop.xlane.xlu0 %3270
    %v3272 = vsel %vm640, %v3268, 0.0
    %3273 = vadd.xlane.f32.xlu0 %v3272
    %v3274 = vpop.xlane.xlu0 %3273
    %v3275 = vrcp.pop %v3271
    %v3276 = vmul.f32 %v3266, %v3275
    %v3277 = vrcp.pop %v3274
    %v3278 = vmul.f32 %v3268, %v3277
    %3279 = vrot.lane.b32.xlu0 %v621, 96
    %v3280 = vpop.permute.xlu0 %3279
    %3281 = vrot.lane.b32.xlu0 %v628, 96
    %v3282 = vpop.permute.xlu0 %3281
    %v3286 = vsel %vm640, %v3276, 0
    %v3289 = vsel %vm640, %v3278, 0
    %3291 = vmatprep.subr.mxu0 0.0
    %v3292 = vand.u32 %v3280, 4294901760
    %3293 = vmatpush1.msra.mxu0 %v3292
    %3294 = vmatprep.subr.mxu0 0.0
    %v3295 = vand.u32 %v3282, 4294901760
    %3296 = vmatpush1.msra.mxu0 %v3295
    %3297 = vmatprep.subr.mxu0 0.0
    %3298 = vmatpush1.msra.mxu0 0.0
    %3299 = vmatprep.subr.mxu0 0.0
    %3300 = vmatpush1.msra.mxu0 0.0
    %3301 = vmatprep.subr.mxu0 0.0
    %3302 = vmatpush1.msra.mxu0 0.0
    %3303 = vmatprep.subr.mxu0 0.0
    %3304 = vmatpush1.msra.mxu0 0.0
    %3305 = vmatprep.subr.mxu0 0.0
    %3306 = vmatpush1.msra.mxu0 0.0
    %3307 = vmatprep.subr.mxu0 0.0
    %3308 = vmatpush1.msra.mxu0 0.0
    %3309 = vmatprep.subr.mxu0 0.0
    %3310 = vmatpush1.msra.mxu0 0.0
    %3311 = vmatprep.subr.mxu0 0.0
    %3312 = vmatpush1.msra.mxu0 0.0
    %3313 = vmatprep.subr.mxu0 0.0
    %3314 = vmatpush1.msra.mxu0 0.0
    %3315 = vmatprep.subr.mxu0 0.0
    %3316 = vmatpush1.msra.mxu0 0.0
    %3317 = vmatprep.subr.mxu0 0.0
    %3318 = vmatpush1.msra.mxu0 0.0
    %3319 = vmatprep.subr.mxu0 0.0
    %3320 = vmatpush1.msra.mxu0 0.0
    %3321 = vmatprep.subr.mxu0 0.0
    %3322 = vmatpush1.msra.mxu0 0.0
    %3323 = vmatprep.subr.mxu0 0.0
    %3324 = vmatpush1.msra.mxu0 0.0
    %3325 = vmatprep.subr.mxu0 0.0
    %3326 = vmatpush1.msra.mxu0 0.0
    %3327 = vmatprep.subr.mxu0 0.0
    %3328 = vmatpush1.msra.mxu0 0.0
    %3329 = vmatprep.subr.mxu0 0.0
    %3330 = vmatpush1.msra.mxu0 0.0
    %3331 = vmatprep.subr.mxu0 0.0
    %3332 = vmatpush1.msra.mxu0 0.0
    %3333 = vmatprep.subr.mxu0 0.0
    %3334 = vmatpush1.msra.mxu0 0.0
    %3335 = vmatprep.subr.mxu0 0.0
    %3336 = vmatpush1.msra.mxu0 0.0
    %3337 = vmatprep.subr.mxu0 0.0
    %3338 = vmatpush1.msra.mxu0 0.0
    %3339 = vmatprep.subr.mxu0 0.0
    %3340 = vmatpush1.msra.mxu0 0.0
    %3341 = vmatprep.subr.mxu0 0.0
    %3342 = vmatpush1.msra.mxu0 0.0
    %3343 = vmatprep.subr.mxu0 0.0
    %3344 = vmatpush1.msra.mxu0 0.0
    %3345 = vmatprep.subr.mxu0 0.0
    %3346 = vmatpush1.msra.mxu0 0.0
    %3347 = vmatprep.subr.mxu0 0.0
    %3348 = vmatpush1.msra.mxu0 0.0
    %3349 = vmatprep.subr.mxu0 0.0
    %3350 = vmatpush1.msra.mxu0 0.0
    %3351 = vmatprep.subr.mxu0 0.0
    %3352 = vmatpush1.msra.mxu0 0.0
    %3353 = vmatprep.subr.mxu0 0.0
    %3354 = vmatpush1.msra.mxu0 0.0
    %3355 = vmatprep.subr.mxu0 0.0
    %3356 = vmatpush1.msra.mxu0 0.0
    %3357 = vmatprep.mubr.f32.mxu0 0.0
    %v3358 = vand.u32 %v3286, 4294901760
    %v3359 = vsub.f32 %v3286, %v3358
    %v3360 = vand.u32 %v3359, 4294901760
    %v3361 = vsub.f32 %v3359, %v3360
    %v3362 = vand.u32 %v3361, 4294901760
    %3363 = vmatmul.mubr.f32.gmra.mrb[0].mxu0 %v3362
    %v3364 = vpop.f32.mrb[0].mxu0
    %v3365 = vadd.f32 0.0, %v3364
    %v3366 = vpop.f32.mrb[0].mxu0
    %3367 = vmatprep.mubr.f32.mxu0 0.0
    %v3368 = vand.u32 %v3289, 4294901760
    %v3369 = vsub.f32 %v3289, %v3368
    %v3370 = vand.u32 %v3369, 4294901760
    %v3371 = vsub.f32 %v3369, %v3370
    %v3372 = vand.u32 %v3371, 4294901760
    %3373 = vmatmul.mubr.f32.gmra.mrb[0].mxu0 %v3372
    %v3374 = vpop.f32.mrb[0].mxu0
    %v3375 = vadd.f32 0.0, %v3374
    %v3376 = vpop.f32.mrb[0].mxu0
    %3377 = vdwg.mxu0
    %3378 = vmatprep.subr.mxu0 0.0
    %v3379 = vand.u32 %v3280, 4294901760
    %v3380 = vsub.f32 %v3280, %v3379
    %v3381 = vand.u32 %v3380, 4294901760
    %v3382 = vsub.f32 %v3380, %v3381
    %v3383 = vand.u32 %v3382, 4294901760
    %3384 = vmatpush1.msra.mxu0 %v3383
    %3385 = vmatprep.subr.mxu0 0.0
    %v3386 = vand.u32 %v3282, 4294901760
    %v3387 = vsub.f32 %v3282, %v3386
    %v3388 = vand.u32 %v3387, 4294901760
    %v3389 = vsub.f32 %v3387, %v3388
    %v3390 = vand.u32 %v3389, 4294901760
    %3391 = vmatpush1.msra.mxu0 %v3390
    %3392 = vmatprep.subr.mxu0 0.0
    %3393 = vmatpush1.msra.mxu0 0.0
    %3394 = vmatprep.subr.mxu0 0.0
    %3395 = vmatpush1.msra.mxu0 0.0
    %3396 = vmatprep.subr.mxu0 0.0
    %3397 = vmatpush1.msra.mxu0 0.0
    %3398 = vmatprep.subr.mxu0 0.0
    %3399 = vmatpush1.msra.mxu0 0.0
    %3400 = vmatprep.subr.mxu0 0.0
    %3401 = vmatpush1.msra.mxu0 0.0
    %3402 = vmatprep.subr.mxu0 0.0
    %3403 = vmatpush1.msra.mxu0 0.0
    %3404 = vmatprep.subr.mxu0 0.0
    %3405 = vmatpush1.msra.mxu0 0.0
    %3406 = vmatprep.subr.mxu0 0.0
    %3407 = vmatpush1.msra.mxu0 0.0
    %3408 = vmatprep.subr.mxu0 0.0
    %3409 = vmatpush1.msra.mxu0 0.0
    %3410 = vmatprep.subr.mxu0 0.0
    %3411 = vmatpush1.msra.mxu0 0.0
    %3412 = vmatprep.subr.mxu0 0.0
    %3413 = vmatpush1.msra.mxu0 0.0
    %3414 = vmatprep.subr.mxu0 0.0
    %3415 = vmatpush1.msra.mxu0 0.0
    %3416 = vmatprep.subr.mxu0 0.0
    %3417 = vmatpush1.msra.mxu0 0.0
    %3418 = vmatprep.subr.mxu0 0.0
    %3419 = vmatpush1.msra.mxu0 0.0
    %3420 = vmatprep.subr.mxu0 0.0
    %3421 = vmatpush1.msra.mxu0 0.0
    %3422 = vmatprep.subr.mxu0 0.0
    %3423 = vmatpush1.msra.mxu0 0.0
    %3424 = vmatprep.subr.mxu0 0.0
    %3425 = vmatpush1.msra.mxu0 0.0
    %3426 = vmatprep.subr.mxu0 0.0
    %3427 = vmatpush1.msra.mxu0 0.0
    %3428 = vmatprep.subr.mxu0 0.0
    %3429 = vmatpush1.msra.mxu0 0.0
    %3430 = vmatprep.subr.mxu0 0.0
    %3431 = vmatpush1.msra.mxu0 0.0
    %3432 = vmatprep.subr.mxu0 0.0
    %3433 = vmatpush1.msra.mxu0 0.0
    %3434 = vmatprep.subr.mxu0 0.0
    %3435 = vmatpush1.msra.mxu0 0.0
    %3436 = vmatprep.subr.mxu0 0.0
    %3437 = vmatpush1.msra.mxu0 0.0
    %3438 = vmatprep.subr.mxu0 0.0
    %3439 = vmatpush1.msra.mxu0 0.0
    %3440 = vmatprep.subr.mxu0 0.0
    %3441 = vmatpush1.msra.mxu0 0.0
    %3442 = vmatprep.subr.mxu0 0.0
    %3443 = vmatpush1.msra.mxu0 0.0
    %3444 = vmatprep.subr.mxu0 0.0
    %3445 = vmatpush1.msra.mxu0 0.0
    %3446 = vmatprep.subr.mxu0 0.0
    %3447 = vmatpush1.msra.mxu0 0.0
    %3448 = vmatprep.subr.mxu0 0.0
    %3449 = vmatpush1.msra.mxu0 0.0
    %3450 = vmatprep.subr.mxu0 0.0
    %3451 = vmatpush1.msra.mxu0 0.0
    %3452 = vmatprep.mubr.f32.mxu0 0.0
    %v3453 = vand.u32 %v3286, 4294901760
    %3454 = vmatmul.mubr.f32.gmra.mrb[0].mxu0 %v3453
    %v3455 = vpop.f32.mrb[0].mxu0
    %v3456 = vadd.f32 %v3365, %v3455
    %v3457 = vpop.f32.mrb[0].mxu0
    %3458 = vmatprep.mubr.f32.mxu0 0.0
    %v3459 = vand.u32 %v3289, 4294901760
    %3460 = vmatmul.mubr.f32.gmra.mrb[0].mxu0 %v3459
    %v3461 = vpop.f32.mrb[0].mxu0
    %v3462 = vadd.f32 %v3375, %v3461
    %v3463 = vpop.f32.mrb[0].mxu0
    %3464 = vdwg.mxu0
    %3465 = vmatprep.subr.mxu0 0.0
    %v3466 = vand.u32 %v3280, 4294901760
    %v3467 = vsub.f32 %v3280, %v3466
    %3468 = vmatpush1.msra.mxu0 %v3467
    %3469 = vmatprep.subr.mxu0 0.0
    %v3470 = vand.u32 %v3282, 4294901760
    %v3471 = vsub.f32 %v3282, %v3470
    %3472 = vmatpush1.msra.mxu0 %v3471
    %3473 = vmatprep.subr.mxu0 0.0
    %3474 = vmatpush1.msra.mxu0 0.0
    %3475 = vmatprep.subr.mxu0 0.0
    %3476 = vmatpush1.msra.mxu0 0.0
    %3477 = vmatprep.subr.mxu0 0.0
    %3478 = vmatpush1.msra.mxu0 0.0
    %3479 = vmatprep.subr.mxu0 0.0
    %3480 = vmatpush1.msra.mxu0 0.0
    %3481 = vmatprep.subr.mxu0 0.0
    %3482 = vmatpush1.msra.mxu0 0.0
    %3483 = vmatprep.subr.mxu0 0.0
    %3484 = vmatpush1.msra.mxu0 0.0
    %3485 = vmatprep.subr.mxu0 0.0
    %3486 = vmatpush1.msra.mxu0 0.0
    %3487 = vmatprep.subr.mxu0 0.0
    %3488 = vmatpush1.msra.mxu0 0.0
    %3489 = vmatprep.subr.mxu0 0.0
    %3490 = vmatpush1.msra.mxu0 0.0
    %3491 = vmatprep.subr.mxu0 0.0
    %3492 = vmatpush1.msra.mxu0 0.0
    %3493 = vmatprep.subr.mxu0 0.0
    %3494 = vmatpush1.msra.mxu0 0.0
    %3495 = vmatprep.subr.mxu0 0.0
    %3496 = vmatpush1.msra.mxu0 0.0
    %3497 = vmatprep.subr.mxu0 0.0
    %3498 = vmatpush1.msra.mxu0 0.0
    %3499 = vmatprep.subr.mxu0 0.0
    %3500 = vmatpush1.msra.mxu0 0.0
    %3501 = vmatprep.subr.mxu0 0.0
    %3502 = vmatpush1.msra.mxu0 0.0
    %3503 = vmatprep.subr.mxu0 0.0
    %3504 = vmatpush1.msra.mxu0 0.0
    %3505 = vmatprep.subr.mxu0 0.0
    %3506 = vmatpush1.msra.mxu0 0.0
    %3507 = vmatprep.subr.mxu0 0.0
    %3508 = vmatpush1.msra.mxu0 0.0
    %3509 = vmatprep.subr.mxu0 0.0
    %3510 = vmatpush1.msra.mxu0 0.0
    %3511 = vmatprep.subr.mxu0 0.0
    %3512 = vmatpush1.msra.mxu0 0.0
    %3513 = vmatprep.subr.mxu0 0.0
    %3514 = vmatpush1.msra.mxu0 0.0
    %3515 = vmatprep.subr.mxu0 0.0
    %3516 = vmatpush1.msra.mxu0 0.0
    %3517 = vmatprep.subr.mxu0 0.0
    %3518 = vmatpush1.msra.mxu0 0.0
    %3519 = vmatprep.subr.mxu0 0.0
    %3520 = vmatpush1.msra.mxu0 0.0
    %3521 = vmatprep.subr.mxu0 0.0
    %3522 = vmatpush1.msra.mxu0 0.0
    %3523 = vmatprep.subr.mxu0 0.0
    %3524 = vmatpush1.msra.mxu0 0.0
    %3525 = vmatprep.subr.mxu0 0.0
    %3526 = vmatpush1.msra.mxu0 0.0
    %3527 = vmatprep.subr.mxu0 0.0
    %3528 = vmatpush1.msra.mxu0 0.0
    %3529 = vmatprep.subr.mxu0 0.0
    %3530 = vmatpush1.msra.mxu0 0.0
    %3531 = vmatprep.subr.mxu0 0.0
    %3532 = vmatpush1.msra.mxu0 0.0
    %3533 = vmatprep.mubr.f32.mxu0 0.0
    %v3534 = vand.u32 %v3286, 4294901760
    %v3535 = vsub.f32 %v3286, %v3534
    %3536 = vmatmul.mubr.f32.gmra.mrb[0].mxu0 %v3535
    %v3537 = vpop.f32.mrb[0].mxu0
    %v3538 = vadd.f32 %v3456, %v3537
    %v3539 = vpop.f32.mrb[0].mxu0
    %3540 = vmatprep.mubr.f32.mxu0 0.0
    %v3541 = vand.u32 %v3289, 4294901760
    %v3542 = vsub.f32 %v3289, %v3541
    %3543 = vmatmul.mubr.f32.gmra.mrb[0].mxu0 %v3542
    %v3544 = vpop.f32.mrb[0].mxu0
    %v3545 = vadd.f32 %v3462, %v3544
    %v3546 = vpop.f32.mrb[0].mxu0
    %3547 = vdwg.mxu0
    %3548 = vmatprep.subr.mxu0 0.0
    %v3549 = vand.u32 %v3280, 4294901760
    %3550 = vmatpush1.msra.mxu0 %v3549
    %3551 = vmatprep.subr.mxu0 0.0
    %v3552 = vand.u32 %v3282, 4294901760
    %3553 = vmatpush1.msra.mxu0 %v3552
    %3554 = vmatprep.subr.mxu0 0.0
    %3555 = vmatpush1.msra.mxu0 0.0
    %3556 = vmatprep.subr.mxu0 0.0
    %3557 = vmatpush1.msra.mxu0 0.0
    %3558 = vmatprep.subr.mxu0 0.0
    %3559 = vmatpush1.msra.mxu0 0.0
    %3560 = vmatprep.subr.mxu0 0.0
    %3561 = vmatpush1.msra.mxu0 0.0
    %3562 = vmatprep.subr.mxu0 0.0
    %3563 = vmatpush1.msra.mxu0 0.0
    %3564 = vmatprep.subr.mxu0 0.0
    %3565 = vmatpush1.msra.mxu0 0.0
    %3566 = vmatprep.subr.mxu0 0.0
    %3567 = vmatpush1.msra.mxu0 0.0
    %3568 = vmatprep.subr.mxu0 0.0
    %3569 = vmatpush1.msra.mxu0 0.0
    %3570 = vmatprep.subr.mxu0 0.0
    %3571 = vmatpush1.msra.mxu0 0.0
    %3572 = vmatprep.subr.mxu0 0.0
    %3573 = vmatpush1.msra.mxu0 0.0
    %3574 = vmatprep.subr.mxu0 0.0
    %3575 = vmatpush1.msra.mxu0 0.0
    %3576 = vmatprep.subr.mxu0 0.0
    %3577 = vmatpush1.msra.mxu0 0.0
    %3578 = vmatprep.subr.mxu0 0.0
    %3579 = vmatpush1.msra.mxu0 0.0
    %3580 = vmatprep.subr.mxu0 0.0
    %3581 = vmatpush1.msra.mxu0 0.0
    %3582 = vmatprep.subr.mxu0 0.0
    %3583 = vmatpush1.msra.mxu0 0.0
    %3584 = vmatprep.subr.mxu0 0.0
    %3585 = vmatpush1.msra.mxu0 0.0
    %3586 = vmatprep.subr.mxu0 0.0
    %3587 = vmatpush1.msra.mxu0 0.0
    %3588 = vmatprep.subr.mxu0 0.0
    %3589 = vmatpush1.msra.mxu0 0.0
    %3590 = vmatprep.subr.mxu0 0.0
    %3591 = vmatpush1.msra.mxu0 0.0
    %3592 = vmatprep.subr.mxu0 0.0
    %3593 = vmatpush1.msra.mxu0 0.0
    %3594 = vmatprep.subr.mxu0 0.0
    %3595 = vmatpush1.msra.mxu0 0.0
    %3596 = vmatprep.subr.mxu0 0.0
    %3597 = vmatpush1.msra.mxu0 0.0
    %3598 = vmatprep.subr.mxu0 0.0
    %3599 = vmatpush1.msra.mxu0 0.0
    %3600 = vmatprep.subr.mxu0 0.0
    %3601 = vmatpush1.msra.mxu0 0.0
    %3602 = vmatprep.subr.mxu0 0.0
    %3603 = vmatpush1.msra.mxu0 0.0
    %3604 = vmatprep.subr.mxu0 0.0
    %3605 = vmatpush1.msra.mxu0 0.0
    %3606 = vmatprep.subr.mxu0 0.0
    %3607 = vmatpush1.msra.mxu0 0.0
    %3608 = vmatprep.subr.mxu0 0.0
    %3609 = vmatpush1.msra.mxu0 0.0
    %3610 = vmatprep.subr.mxu0 0.0
    %3611 = vmatpush1.msra.mxu0 0.0
    %3612 = vmatprep.subr.mxu0 0.0
    %3613 = vmatpush1.msra.mxu0 0.0
    %3614 = vmatprep.mubr.f32.mxu0 0.0
    %v3615 = vand.u32 %v3286, 4294901760
    %v3616 = vsub.f32 %v3286, %v3615
    %v3617 = vand.u32 %v3616, 4294901760
    %3618 = vmatmul.mubr.f32.gmra.mrb[0].mxu0 %v3617
    %v3619 = vpop.f32.mrb[0].mxu0
    %v3620 = vadd.f32 %v3538, %v3619
    %v3621 = vpop.f32.mrb[0].mxu0
    %3622 = vmatprep.mubr.f32.mxu0 0.0
    %v3623 = vand.u32 %v3289, 4294901760
    %v3624 = vsub.f32 %v3289, %v3623
    %v3625 = vand.u32 %v3624, 4294901760
    %3626 = vmatmul.mubr.f32.gmra.mrb[0].mxu0 %v3625
    %v3627 = vpop.f32.mrb[0].mxu0
    %v3628 = vadd.f32 %v3545, %v3627
    %v3629 = vpop.f32.mrb[0].mxu0
    %3630 = vdwg.mxu0
    %3631 = vmatprep.subr.mxu0 0.0
    %v3632 = vand.u32 %v3280, 4294901760
    %v3633 = vsub.f32 %v3280, %v3632
    %v3634 = vand.u32 %v3633, 4294901760
    %3635 = vmatpush1.msra.mxu0 %v3634
    %3636 = vmatprep.subr.mxu0 0.0
    %v3637 = vand.u32 %v3282, 4294901760
    %v3638 = vsub.f32 %v3282, %v3637
    %v3639 = vand.u32 %v3638, 4294901760
    %3640 = vmatpush1.msra.mxu0 %v3639
    %3641 = vmatprep.subr.mxu0 0.0
    %3642 = vmatpush1.msra.mxu0 0.0
    %3643 = vmatprep.subr.mxu0 0.0
    %3644 = vmatpush1.msra.mxu0 0.0
    %3645 = vmatprep.subr.mxu0 0.0
    %3646 = vmatpush1.msra.mxu0 0.0
    %3647 = vmatprep.subr.mxu0 0.0
    %3648 = vmatpush1.msra.mxu0 0.0
    %3649 = vmatprep.subr.mxu0 0.0
    %3650 = vmatpush1.msra.mxu0 0.0
    %3651 = vmatprep.subr.mxu0 0.0
    %3652 = vmatpush1.msra.mxu0 0.0
    %3653 = vmatprep.subr.mxu0 0.0
    %3654 = vmatpush1.msra.mxu0 0.0
    %3655 = vmatprep.subr.mxu0 0.0
    %3656 = vmatpush1.msra.mxu0 0.0
    %3657 = vmatprep.subr.mxu0 0.0
    %3658 = vmatpush1.msra.mxu0 0.0
    %3659 = vmatprep.subr.mxu0 0.0
    %3660 = vmatpush1.msra.mxu0 0.0
    %3661 = vmatprep.subr.mxu0 0.0
    %3662 = vmatpush1.msra.mxu0 0.0
    %3663 = vmatprep.subr.mxu0 0.0
    %3664 = vmatpush1.msra.mxu0 0.0
    %3665 = vmatprep.subr.mxu0 0.0
    %3666 = vmatpush1.msra.mxu0 0.0
    %3667 = vmatprep.subr.mxu0 0.0
    %3668 = vmatpush1.msra.mxu0 0.0
    %3669 = vmatprep.subr.mxu0 0.0
    %3670 = vmatpush1.msra.mxu0 0.0
    %3671 = vmatprep.subr.mxu0 0.0
    %3672 = vmatpush1.msra.mxu0 0.0
    %3673 = vmatprep.subr.mxu0 0.0
    %3674 = vmatpush1.msra.mxu0 0.0
    %3675 = vmatprep.subr.mxu0 0.0
    %3676 = vmatpush1.msra.mxu0 0.0
    %3677 = vmatprep.subr.mxu0 0.0
    %3678 = vmatpush1.msra.mxu0 0.0
    %3679 = vmatprep.subr.mxu0 0.0
    %3680 = vmatpush1.msra.mxu0 0.0
    %3681 = vmatprep.subr.mxu0 0.0
    %3682 = vmatpush1.msra.mxu0 0.0
    %3683 = vmatprep.subr.mxu0 0.0
    %3684 = vmatpush1.msra.mxu0 0.0
    %3685 = vmatprep.subr.mxu0 0.0
    %3686 = vmatpush1.msra.mxu0 0.0
    %3687 = vmatprep.subr.mxu0 0.0
    %3688 = vmatpush1.msra.mxu0 0.0
    %3689 = vmatprep.subr.mxu0 0.0
    %3690 = vmatpush1.msra.mxu0 0.0
    %3691 = vmatprep.subr.mxu0 0.0
    %3692 = vmatpush1.msra.mxu0 0.0
    %3693 = vmatprep.subr.mxu0 0.0
    %3694 = vmatpush1.msra.mxu0 0.0
    %3695 = vmatprep.subr.mxu0 0.0
    %3696 = vmatpush1.msra.mxu0 0.0
    %3697 = vmatprep.subr.mxu0 0.0
    %3698 = vmatpush1.msra.mxu0 0.0
    %3699 = vmatprep.subr.mxu0 0.0
    %3700 = vmatpush1.msra.mxu0 0.0
    %3701 = vmatprep.mubr.f32.mxu0 0.0
    %v3702 = vand.u32 %v3286, 4294901760
    %3703 = vmatmul.mubr.f32.gmra.mrb[0].mxu0 %v3702
    %v3704 = vpop.f32.mrb[0].mxu0
    %v3705 = vadd.f32 %v3620, %v3704
    %v3706 = vpop.f32.mrb[0].mxu0
    %3707 = vmatprep.mubr.f32.mxu0 0.0
    %v3708 = vand.u32 %v3289, 4294901760
    %3709 = vmatmul.mubr.f32.gmra.mrb[0].mxu0 %v3708
    %v3710 = vpop.f32.mrb[0].mxu0
    %v3711 = vadd.f32 %v3628, %v3710
    %v3712 = vpop.f32.mrb[0].mxu0
    %3713 = vdwg.mxu0
    %3714 = vmatprep.subr.mxu0 0.0
    %v3715 = vand.u32 %v3280, 4294901760
    %3716 = vmatpush1.msra.mxu0 %v3715
    %3717 = vmatprep.subr.mxu0 0.0
    %v3718 = vand.u32 %v3282, 4294901760
    %3719 = vmatpush1.msra.mxu0 %v3718
    %3720 = vmatprep.subr.mxu0 0.0
    %3721 = vmatpush1.msra.mxu0 0.0
    %3722 = vmatprep.subr.mxu0 0.0
    %3723 = vmatpush1.msra.mxu0 0.0
    %3724 = vmatprep.subr.mxu0 0.0
    %3725 = vmatpush1.msra.mxu0 0.0
    %3726 = vmatprep.subr.mxu0 0.0
    %3727 = vmatpush1.msra.mxu0 0.0
    %3728 = vmatprep.subr.mxu0 0.0
    %3729 = vmatpush1.msra.mxu0 0.0
    %3730 = vmatprep.subr.mxu0 0.0
    %3731 = vmatpush1.msra.mxu0 0.0
    %3732 = vmatprep.subr.mxu0 0.0
    %3733 = vmatpush1.msra.mxu0 0.0
    %3734 = vmatprep.subr.mxu0 0.0
    %3735 = vmatpush1.msra.mxu0 0.0
    %3736 = vmatprep.subr.mxu0 0.0
    %3737 = vmatpush1.msra.mxu0 0.0
    %3738 = vmatprep.subr.mxu0 0.0
    %3739 = vmatpush1.msra.mxu0 0.0
    %3740 = vmatprep.subr.mxu0 0.0
    %3741 = vmatpush1.msra.mxu0 0.0
    %3742 = vmatprep.subr.mxu0 0.0
    %3743 = vmatpush1.msra.mxu0 0.0
    %3744 = vmatprep.subr.mxu0 0.0
    %3745 = vmatpush1.msra.mxu0 0.0
    %3746 = vmatprep.subr.mxu0 0.0
    %3747 = vmatpush1.msra.mxu0 0.0
    %3748 = vmatprep.subr.mxu0 0.0
    %3749 = vmatpush1.msra.mxu0 0.0
    %3750 = vmatprep.subr.mxu0 0.0
    %3751 = vmatpush1.msra.mxu0 0.0
    %3752 = vmatprep.subr.mxu0 0.0
    %3753 = vmatpush1.msra.mxu0 0.0
    %3754 = vmatprep.subr.mxu0 0.0
    %3755 = vmatpush1.msra.mxu0 0.0
    %3756 = vmatprep.subr.mxu0 0.0
    %3757 = vmatpush1.msra.mxu0 0.0
    %3758 = vmatprep.subr.mxu0 0.0
    %3759 = vmatpush1.msra.mxu0 0.0
    %3760 = vmatprep.subr.mxu0 0.0
    %3761 = vmatpush1.msra.mxu0 0.0
    %3762 = vmatprep.subr.mxu0 0.0
    %3763 = vmatpush1.msra.mxu0 0.0
    %3764 = vmatprep.subr.mxu0 0.0
    %3765 = vmatpush1.msra.mxu0 0.0
    %3766 = vmatprep.subr.mxu0 0.0
    %3767 = vmatpush1.msra.mxu0 0.0
    %3768 = vmatprep.subr.mxu0 0.0
    %3769 = vmatpush1.msra.mxu0 0.0
    %3770 = vmatprep.subr.mxu0 0.0
    %3771 = vmatpush1.msra.mxu0 0.0
    %3772 = vmatprep.subr.mxu0 0.0
    %3773 = vmatpush1.msra.mxu0 0.0
    %3774 = vmatprep.subr.mxu0 0.0
    %3775 = vmatpush1.msra.mxu0 0.0
    %3776 = vmatprep.subr.mxu0 0.0
    %3777 = vmatpush1.msra.mxu0 0.0
    %3778 = vmatprep.subr.mxu0 0.0
    %3779 = vmatpush1.msra.mxu0 0.0
    %3780 = vmatprep.mubr.f32.mxu0 0.0
    %v3781 = vand.u32 %v3286, 4294901760
    %3782 = vmatmul.mubr.f32.gmra.mrb[0].mxu0 %v3781
    %v3783 = vpop.f32.mrb[0].mxu0
    %v3784 = vadd.f32 %v3705, %v3783
    %v3785 = vpop.f32.mrb[0].mxu0
    %3786 = vmatprep.mubr.f32.mxu0 0.0
    %v3787 = vand.u32 %v3289, 4294901760
    %3788 = vmatmul.mubr.f32.gmra.mrb[0].mxu0 %v3787
    %v3789 = vpop.f32.mrb[0].mxu0
    %v3790 = vadd.f32 %v3711, %v3789
    %v3791 = vpop.f32.mrb[0].mxu0
    %3792 = vdwg.mxu0
    %3793 = vrot.lane.b32.xlu0 %v630, 80
    %v3794 = vpop.permute.xlu0 %3793
    %3795 = vrot.lane.b32.xlu0 %v631, 80
    %v3796 = vpop.permute.xlu0 %3795
    %3797 = vrot.lane.b32.xlu0 %v619, 16
    %v3798 = vpop.permute.xlu0 %3797
    %3799 = vrot.lane.b32.xlu0 %v626, 16
    %v3800 = vpop.permute.xlu0 %3799
    %v3801 = vsel %vm640, %v3794, 0
    %v3803 = vsel %vm640, %v3796, 0
    %v3805 = vsel %vm640, %v3798, 0
    %v3807 = vsel %vm640, %v3800, 0
    %3809 = vmatprep.subr.mxu0 0.0
    %v3810 = vand.u32 %v3805, 4294901760
    %3811 = vmatpush1.xpose.msra.mxu0 %v3810
    %3812 = vmatprep.subr.mxu0 0.0
    %v3813 = vand.u32 %v3807, 4294901760
    %3814 = vmatpush1.xpose.msra.mxu0 %v3813
    %3815 = vmatprep.subr.mxu0 0.0
    %3816 = vmatpush1.xpose.msra.mxu0 0.0
    %3817 = vmatprep.subr.mxu0 0.0
    %3818 = vmatpush1.xpose.msra.mxu0 0.0
    %3819 = vmatprep.subr.mxu0 0.0
    %3820 = vmatpush1.xpose.msra.mxu0 0.0
    %3821 = vmatprep.subr.mxu0 0.0
    %3822 = vmatpush1.xpose.msra.mxu0 0.0
    %3823 = vmatprep.subr.mxu0 0.0
    %3824 = vmatpush1.xpose.msra.mxu0 0.0
    %3825 = vmatprep.subr.mxu0 0.0
    %3826 = vmatpush1.xpose.msra.mxu0 0.0
    %3827 = vmatprep.subr.mxu0 0.0
    %3828 = vmatpush1.xpose.msra.mxu0 0.0
    %3829 = vmatprep.subr.mxu0 0.0
    %3830 = vmatpush1.xpose.msra.mxu0 0.0
    %3831 = vmatprep.subr.mxu0 0.0
    %3832 = vmatpush1.xpose.msra.mxu0 0.0
    %3833 = vmatprep.subr.mxu0 0.0
    %3834 = vmatpush1.xpose.msra.mxu0 0.0
    %3835 = vmatprep.subr.mxu0 0.0
    %3836 = vmatpush1.xpose.msra.mxu0 0.0
    %3837 = vmatprep.subr.mxu0 0.0
    %3838 = vmatpush1.xpose.msra.mxu0 0.0
    %3839 = vmatprep.subr.mxu0 0.0
    %3840 = vmatpush1.xpose.msra.mxu0 0.0
    %3841 = vmatprep.subr.mxu0 0.0
    %3842 = vmatpush1.xpose.msra.mxu0 0.0
    %3843 = vmatprep.subr.mxu0 0.0
    %3844 = vmatpush1.xpose.msra.mxu0 0.0
    %3845 = vmatprep.subr.mxu0 0.0
    %3846 = vmatpush1.xpose.msra.mxu0 0.0
    %3847 = vmatprep.subr.mxu0 0.0
    %3848 = vmatpush1.xpose.msra.mxu0 0.0
    %3849 = vmatprep.subr.mxu0 0.0
    %3850 = vmatpush1.xpose.msra.mxu0 0.0
    %3851 = vmatprep.subr.mxu0 0.0
    %3852 = vmatpush1.xpose.msra.mxu0 0.0
    %3853 = vmatprep.subr.mxu0 0.0
    %3854 = vmatpush1.xpose.msra.mxu0 0.0
    %3855 = vmatprep.subr.mxu0 0.0
    %3856 = vmatpush1.xpose.msra.mxu0 0.0
    %3857 = vmatprep.subr.mxu0 0.0
    %3858 = vmatpush1.xpose.msra.mxu0 0.0
    %3859 = vmatprep.subr.mxu0 0.0
    %3860 = vmatpush1.xpose.msra.mxu0 0.0
    %3861 = vmatprep.subr.mxu0 0.0
    %3862 = vmatpush1.xpose.msra.mxu0 0.0
    %3863 = vmatprep.subr.mxu0 0.0
    %3864 = vmatpush1.xpose.msra.mxu0 0.0
    %3865 = vmatprep.subr.mxu0 0.0
    %3866 = vmatpush1.xpose.msra.mxu0 0.0
    %3867 = vmatprep.subr.mxu0 0.0
    %3868 = vmatpush1.xpose.msra.mxu0 0.0
    %3869 = vmatprep.subr.mxu0 0.0
    %3870 = vmatpush1.xpose.msra.mxu0 0.0
    %3871 = vmatprep.subr.mxu0 0.0
    %3872 = vmatpush1.xpose.msra.mxu0 0.0
    %3873 = vmatprep.subr.mxu0 0.0
    %3874 = vmatpush1.xpose.msra.mxu0 0.0
    %3875 = vmatprep.mubr.f32.mxu0 0.0
    %v3876 = vand.u32 %v3801, 4294901760
    %v3877 = vsub.f32 %v3801, %v3876
    %v3878 = vand.u32 %v3877, 4294901760
    %v3879 = vsub.f32 %v3877, %v3878
    %v3880 = vand.u32 %v3879, 4294901760
    %3881 = vmatmul.mubr.f32.gmra.mrb[0].mxu0 %v3880
    %v3882 = vpop.f32.mrb[0].mxu0
    %v3883 = vadd.f32 %v632, %v3882
    %v3884 = vpop.f32.mrb[0].mxu0
    %3885 = vmatprep.mubr.f32.mxu0 0.0
    %v3886 = vand.u32 %v3803, 4294901760
    %v3887 = vsub.f32 %v3803, %v3886
    %v3888 = vand.u32 %v3887, 4294901760
    %v3889 = vsub.f32 %v3887, %v3888
    %v3890 = vand.u32 %v3889, 4294901760
    %3891 = vmatmul.mubr.f32.gmra.mrb[0].mxu0 %v3890
    %v3892 = vpop.f32.mrb[0].mxu0
    %v3893 = vadd.f32 %v633, %v3892
    %v3894 = vpop.f32.mrb[0].mxu0
    %3895 = vdwg.mxu0
    %3896 = vmatprep.subr.mxu0 0.0
    %v3897 = vand.u32 %v3805, 4294901760
    %v3898 = vsub.f32 %v3805, %v3897
    %v3899 = vand.u32 %v3898, 4294901760
    %v3900 = vsub.f32 %v3898, %v3899
    %v3901 = vand.u32 %v3900, 4294901760
    %3902 = vmatpush1.xpose.msra.mxu0 %v3901
    %3903 = vmatprep.subr.mxu0 0.0
    %v3904 = vand.u32 %v3807, 4294901760
    %v3905 = vsub.f32 %v3807, %v3904
    %v3906 = vand.u32 %v3905, 4294901760
    %v3907 = vsub.f32 %v3905, %v3906
    %v3908 = vand.u32 %v3907, 4294901760
    %3909 = vmatpush1.xpose.msra.mxu0 %v3908
    %3910 = vmatprep.subr.mxu0 0.0
    %3911 = vmatpush1.xpose.msra.mxu0 0.0
    %3912 = vmatprep.subr.mxu0 0.0
    %3913 = vmatpush1.xpose.msra.mxu0 0.0
    %3914 = vmatprep.subr.mxu0 0.0
    %3915 = vmatpush1.xpose.msra.mxu0 0.0
    %3916 = vmatprep.subr.mxu0 0.0
    %3917 = vmatpush1.xpose.msra.mxu0 0.0
    %3918 = vmatprep.subr.mxu0 0.0
    %3919 = vmatpush1.xpose.msra.mxu0 0.0
    %3920 = vmatprep.subr.mxu0 0.0
    %3921 = vmatpush1.xpose.msra.mxu0 0.0
    %3922 = vmatprep.subr.mxu0 0.0
    %3923 = vmatpush1.xpose.msra.mxu0 0.0
    %3924 = vmatprep.subr.mxu0 0.0
    %3925 = vmatpush1.xpose.msra.mxu0 0.0
    %3926 = vmatprep.subr.mxu0 0.0
    %3927 = vmatpush1.xpose.msra.mxu0 0.0
    %3928 = vmatprep.subr.mxu0 0.0
    %3929 = vmatpush1.xpose.msra.mxu0 0.0
    %3930 = vmatprep.subr.mxu0 0.0
    %3931 = vmatpush1.xpose.msra.mxu0 0.0
    %3932 = vmatprep.subr.mxu0 0.0
    %3933 = vmatpush1.xpose.msra.mxu0 0.0
    %3934 = vmatprep.subr.mxu0 0.0
    %3935 = vmatpush1.xpose.msra.mxu0 0.0
    %3936 = vmatprep.subr.mxu0 0.0
    %3937 = vmatpush1.xpose.msra.mxu0 0.0
    %3938 = vmatprep.subr.mxu0 0.0
    %3939 = vmatpush1.xpose.msra.mxu0 0.0
    %3940 = vmatprep.subr.mxu0 0.0
    %3941 = vmatpush1.xpose.msra.mxu0 0.0
    %3942 = vmatprep.subr.mxu0 0.0
    %3943 = vmatpush1.xpose.msra.mxu0 0.0
    %3944 = vmatprep.subr.mxu0 0.0
    %3945 = vmatpush1.xpose.msra.mxu0 0.0
    %3946 = vmatprep.subr.mxu0 0.0
    %3947 = vmatpush1.xpose.msra.mxu0 0.0
    %3948 = vmatprep.subr.mxu0 0.0
    %3949 = vmatpush1.xpose.msra.mxu0 0.0
    %3950 = vmatprep.subr.mxu0 0.0
    %3951 = vmatpush1.xpose.msra.mxu0 0.0
    %3952 = vmatprep.subr.mxu0 0.0
    %3953 = vmatpush1.xpose.msra.mxu0 0.0
    %3954 = vmatprep.subr.mxu0 0.0
    %3955 = vmatpush1.xpose.msra.mxu0 0.0
    %3956 = vmatprep.subr.mxu0 0.0
    %3957 = vmatpush1.xpose.msra.mxu0 0.0
    %3958 = vmatprep.subr.mxu0 0.0
    %3959 = vmatpush1.xpose.msra.mxu0 0.0
    %3960 = vmatprep.subr.mxu0 0.0
    %3961 = vmatpush1.xpose.msra.mxu0 0.0
    %3962 = vmatprep.subr.mxu0 0.0
    %3963 = vmatpush1.xpose.msra.mxu0 0.0
    %3964 = vmatprep.subr.mxu0 0.0
    %3965 = vmatpush1.xpose.msra.mxu0 0.0
    %3966 = vmatprep.subr.mxu0 0.0
    %3967 = vmatpush1.xpose.msra.mxu0 0.0
    %3968 = vmatprep.subr.mxu0 0.0
    %3969 = vmatpush1.xpose.msra.mxu0 0.0
    %3970 = vmatprep.mubr.f32.mxu0 0.0
    %v3971 = vand.u32 %v3801, 4294901760
    %3972 = vmatmul.mubr.f32.gmra.mrb[0].mxu0 %v3971
    %v3973 = vpop.f32.mrb[0].mxu0
    %v3974 = vadd.f32 %v3883, %v3973
    %v3975 = vpop.f32.mrb[0].mxu0
    %3976 = vmatprep.mubr.f32.mxu0 0.0
    %v3977 = vand.u32 %v3803, 4294901760
    %3978 = vmatmul.mubr.f32.gmra.mrb[0].mxu0 %v3977
    %v3979 = vpop.f32.mrb[0].mxu0
    %v3980 = vadd.f32 %v3893, %v3979
    %v3981 = vpop.f32.mrb[0].mxu0
    %3982 = vdwg.mxu0
    %3983 = vmatprep.subr.mxu0 0.0
    %v3984 = vand.u32 %v3805, 4294901760
    %v3985 = vsub.f32 %v3805, %v3984
    %3986 = vmatpush1.xpose.msra.mxu0 %v3985
    %3987 = vmatprep.subr.mxu0 0.0
    %v3988 = vand.u32 %v3807, 4294901760
    %v3989 = vsub.f32 %v3807, %v3988
    %3990 = vmatpush1.xpose.msra.mxu0 %v3989
    %3991 = vmatprep.subr.mxu0 0.0
    %3992 = vmatpush1.xpose.msra.mxu0 0.0
    %3993 = vmatprep.subr.mxu0 0.0
    %3994 = vmatpush1.xpose.msra.mxu0 0.0
    %3995 = vmatprep.subr.mxu0 0.0
    %3996 = vmatpush1.xpose.msra.mxu0 0.0
    %3997 = vmatprep.subr.mxu0 0.0
    %3998 = vmatpush1.xpose.msra.mxu0 0.0
    %3999 = vmatprep.subr.mxu0 0.0
    %4000 = vmatpush1.xpose.msra.mxu0 0.0
    %4001 = vmatprep.subr.mxu0 0.0
    %4002 = vmatpush1.xpose.msra.mxu0 0.0
    %4003 = vmatprep.subr.mxu0 0.0
    %4004 = vmatpush1.xpose.msra.mxu0 0.0
    %4005 = vmatprep.subr.mxu0 0.0
    %4006 = vmatpush1.xpose.msra.mxu0 0.0
    %4007 = vmatprep.subr.mxu0 0.0
    %4008 = vmatpush1.xpose.msra.mxu0 0.0
    %4009 = vmatprep.subr.mxu0 0.0
    %4010 = vmatpush1.xpose.msra.mxu0 0.0
    %4011 = vmatprep.subr.mxu0 0.0
    %4012 = vmatpush1.xpose.msra.mxu0 0.0
    %4013 = vmatprep.subr.mxu0 0.0
    %4014 = vmatpush1.xpose.msra.mxu0 0.0
    %4015 = vmatprep.subr.mxu0 0.0
    %4016 = vmatpush1.xpose.msra.mxu0 0.0
    %4017 = vmatprep.subr.mxu0 0.0
    %4018 = vmatpush1.xpose.msra.mxu0 0.0
    %4019 = vmatprep.subr.mxu0 0.0
    %4020 = vmatpush1.xpose.msra.mxu0 0.0
    %4021 = vmatprep.subr.mxu0 0.0
    %4022 = vmatpush1.xpose.msra.mxu0 0.0
    %4023 = vmatprep.subr.mxu0 0.0
    %4024 = vmatpush1.xpose.msra.mxu0 0.0
    %4025 = vmatprep.subr.mxu0 0.0
    %4026 = vmatpush1.xpose.msra.mxu0 0.0
    %4027 = vmatprep.subr.mxu0 0.0
    %4028 = vmatpush1.xpose.msra.mxu0 0.0
    %4029 = vmatprep.subr.mxu0 0.0
    %4030 = vmatpush1.xpose.msra.mxu0 0.0
    %4031 = vmatprep.subr.mxu0 0.0
    %4032 = vmatpush1.xpose.msra.mxu0 0.0
    %4033 = vmatprep.subr.mxu0 0.0
    %4034 = vmatpush1.xpose.msra.mxu0 0.0
    %4035 = vmatprep.subr.mxu0 0.0
    %4036 = vmatpush1.xpose.msra.mxu0 0.0
    %4037 = vmatprep.subr.mxu0 0.0
    %4038 = vmatpush1.xpose.msra.mxu0 0.0
    %4039 = vmatprep.subr.mxu0 0.0
    %4040 = vmatpush1.xpose.msra.mxu0 0.0
    %4041 = vmatprep.subr.mxu0 0.0
    %4042 = vmatpush1.xpose.msra.mxu0 0.0
    %4043 = vmatprep.subr.mxu0 0.0
    %4044 = vmatpush1.xpose.msra.mxu0 0.0
    %4045 = vmatprep.subr.mxu0 0.0
    %4046 = vmatpush1.xpose.msra.mxu0 0.0
    %4047 = vmatprep.subr.mxu0 0.0
    %4048 = vmatpush1.xpose.msra.mxu0 0.0
    %4049 = vmatprep.subr.mxu0 0.0
    %4050 = vmatpush1.xpose.msra.mxu0 0.0
    %4051 = vmatprep.mubr.f32.mxu0 0.0
    %v4052 = vand.u32 %v3801, 4294901760
    %v4053 = vsub.f32 %v3801, %v4052
    %4054 = vmatmul.mubr.f32.gmra.mrb[0].mxu0 %v4053
    %v4055 = vpop.f32.mrb[0].mxu0
    %v4056 = vadd.f32 %v3974, %v4055
    %v4057 = vpop.f32.mrb[0].mxu0
    %4058 = vmatprep.mubr.f32.mxu0 0.0
    %v4059 = vand.u32 %v3803, 4294901760
    %v4060 = vsub.f32 %v3803, %v4059
    %4061 = vmatmul.mubr.f32.gmra.mrb[0].mxu0 %v4060
    %v4062 = vpop.f32.mrb[0].mxu0
    %v4063 = vadd.f32 %v3980, %v4062
    %v4064 = vpop.f32.mrb[0].mxu0
    %4065 = vdwg.mxu0
    %4066 = vmatprep.subr.mxu0 0.0
    %v4067 = vand.u32 %v3805, 4294901760
    %4068 = vmatpush1.xpose.msra.mxu0 %v4067
    %4069 = vmatprep.subr.mxu0 0.0
    %v4070 = vand.u32 %v3807, 4294901760
    %4071 = vmatpush1.xpose.msra.mxu0 %v4070
    %4072 = vmatprep.subr.mxu0 0.0
    %4073 = vmatpush1.xpose.msra.mxu0 0.0
    %4074 = vmatprep.subr.mxu0 0.0
    %4075 = vmatpush1.xpose.msra.mxu0 0.0
    %4076 = vmatprep.subr.mxu0 0.0
    %4077 = vmatpush1.xpose.msra.mxu0 0.0
    %4078 = vmatprep.subr.mxu0 0.0
    %4079 = vmatpush1.xpose.msra.mxu0 0.0
    %4080 = vmatprep.subr.mxu0 0.0
    %4081 = vmatpush1.xpose.msra.mxu0 0.0
    %4082 = vmatprep.subr.mxu0 0.0
    %4083 = vmatpush1.xpose.msra.mxu0 0.0
    %4084 = vmatprep.subr.mxu0 0.0
    %4085 = vmatpush1.xpose.msra.mxu0 0.0
    %4086 = vmatprep.subr.mxu0 0.0
    %4087 = vmatpush1.xpose.msra.mxu0 0.0
    %4088 = vmatprep.subr.mxu0 0.0
    %4089 = vmatpush1.xpose.msra.mxu0 0.0
    %4090 = vmatprep.subr.mxu0 0.0
    %4091 = vmatpush1.xpose.msra.mxu0 0.0
    %4092 = vmatprep.subr.mxu0 0.0
    %4093 = vmatpush1.xpose.msra.mxu0 0.0
    %4094 = vmatprep.subr.mxu0 0.0
    %4095 = vmatpush1.xpose.msra.mxu0 0.0
    %4096 = vmatprep.subr.mxu0 0.0
    %4097 = vmatpush1.xpose.msra.mxu0 0.0
    %4098 = vmatprep.subr.mxu0 0.0
    %4099 = vmatpush1.xpose.msra.mxu0 0.0
    %4100 = vmatprep.subr.mxu0 0.0
    %4101 = vmatpush1.xpose.msra.mxu0 0.0
    %4102 = vmatprep.subr.mxu0 0.0
    %4103 = vmatpush1.xpose.msra.mxu0 0.0
    %4104 = vmatprep.subr.mxu0 0.0
    %4105 = vmatpush1.xpose.msra.mxu0 0.0
    %4106 = vmatprep.subr.mxu0 0.0
    %4107 = vmatpush1.xpose.msra.mxu0 0.0
    %4108 = vmatprep.subr.mxu0 0.0
    %4109 = vmatpush1.xpose.msra.mxu0 0.0
    %4110 = vmatprep.subr.mxu0 0.0
    %4111 = vmatpush1.xpose.msra.mxu0 0.0
    %4112 = vmatprep.subr.mxu0 0.0
    %4113 = vmatpush1.xpose.msra.mxu0 0.0
    %4114 = vmatprep.subr.mxu0 0.0
    %4115 = vmatpush1.xpose.msra.mxu0 0.0
    %4116 = vmatprep.subr.mxu0 0.0
    %4117 = vmatpush1.xpose.msra.mxu0 0.0
    %4118 = vmatprep.subr.mxu0 0.0
    %4119 = vmatpush1.xpose.msra.mxu0 0.0
    %4120 = vmatprep.subr.mxu0 0.0
    %4121 = vmatpush1.xpose.msra.mxu0 0.0
    %4122 = vmatprep.subr.mxu0 0.0
    %4123 = vmatpush1.xpose.msra.mxu0 0.0
    %4124 = vmatprep.subr.mxu0 0.0
    %4125 = vmatpush1.xpose.msra.mxu0 0.0
    %4126 = vmatprep.subr.mxu0 0.0
    %4127 = vmatpush1.xpose.msra.mxu0 0.0
    %4128 = vmatprep.subr.mxu0 0.0
    %4129 = vmatpush1.xpose.msra.mxu0 0.0
    %4130 = vmatprep.subr.mxu0 0.0
    %4131 = vmatpush1.xpose.msra.mxu0 0.0
    %4132 = vmatprep.mubr.f32.mxu0 0.0
    %v4133 = vand.u32 %v3801, 4294901760
    %v4134 = vsub.f32 %v3801, %v4133
    %v4135 = vand.u32 %v4134, 4294901760
    %4136 = vmatmul.mubr.f32.gmra.mrb[0].mxu0 %v4135
    %v4137 = vpop.f32.mrb[0].mxu0
    %v4138 = vadd.f32 %v4056, %v4137
    %v4139 = vpop.f32.mrb[0].mxu0
    %4140 = vmatprep.mubr.f32.mxu0 0.0
    %v4141 = vand.u32 %v3803, 4294901760
    %v4142 = vsub.f32 %v3803, %v4141
    %v4143 = vand.u32 %v4142, 4294901760
    %4144 = vmatmul.mubr.f32.gmra.mrb[0].mxu0 %v4143
    %v4145 = vpop.f32.mrb[0].mxu0
    %v4146 = vadd.f32 %v4063, %v4145
    %v4147 = vpop.f32.mrb[0].mxu0
    %4148 = vdwg.mxu0
    %4149 = vmatprep.subr.mxu0 0.0
    %v4150 = vand.u32 %v3805, 4294901760
    %v4151 = vsub.f32 %v3805, %v4150
    %v4152 = vand.u32 %v4151, 4294901760
    %4153 = vmatpush1.xpose.msra.mxu0 %v4152
    %4154 = vmatprep.subr.mxu0 0.0
    %v4155 = vand.u32 %v3807, 4294901760
    %v4156 = vsub.f32 %v3807, %v4155
    %v4157 = vand.u32 %v4156, 4294901760
    %4158 = vmatpush1.xpose.msra.mxu0 %v4157
    %4159 = vmatprep.subr.mxu0 0.0
    %4160 = vmatpush1.xpose.msra.mxu0 0.0
    %4161 = vmatprep.subr.mxu0 0.0
    %4162 = vmatpush1.xpose.msra.mxu0 0.0
    %4163 = vmatprep.subr.mxu0 0.0
    %4164 = vmatpush1.xpose.msra.mxu0 0.0
    %4165 = vmatprep.subr.mxu0 0.0
    %4166 = vmatpush1.xpose.msra.mxu0 0.0
    %4167 = vmatprep.subr.mxu0 0.0
    %4168 = vmatpush1.xpose.msra.mxu0 0.0
    %4169 = vmatprep.subr.mxu0 0.0
    %4170 = vmatpush1.xpose.msra.mxu0 0.0
    %4171 = vmatprep.subr.mxu0 0.0
    %4172 = vmatpush1.xpose.msra.mxu0 0.0
    %4173 = vmatprep.subr.mxu0 0.0
    %4174 = vmatpush1.xpose.msra.mxu0 0.0
    %4175 = vmatprep.subr.mxu0 0.0
    %4176 = vmatpush1.xpose.msra.mxu0 0.0
    %4177 = vmatprep.subr.mxu0 0.0
    %4178 = vmatpush1.xpose.msra.mxu0 0.0
    %4179 = vmatprep.subr.mxu0 0.0
    %4180 = vmatpush1.xpose.msra.mxu0 0.0
    %4181 = vmatprep.subr.mxu0 0.0
    %4182 = vmatpush1.xpose.msra.mxu0 0.0
    %4183 = vmatprep.subr.mxu0 0.0
    %4184 = vmatpush1.xpose.msra.mxu0 0.0
    %4185 = vmatprep.subr.mxu0 0.0
    %4186 = vmatpush1.xpose.msra.mxu0 0.0
    %4187 = vmatprep.subr.mxu0 0.0
    %4188 = vmatpush1.xpose.msra.mxu0 0.0
    %4189 = vmatprep.subr.mxu0 0.0
    %4190 = vmatpush1.xpose.msra.mxu0 0.0
    %4191 = vmatprep.subr.mxu0 0.0
    %4192 = vmatpush1.xpose.msra.mxu0 0.0
    %4193 = vmatprep.subr.mxu0 0.0
    %4194 = vmatpush1.xpose.msra.mxu0 0.0
    %4195 = vmatprep.subr.mxu0 0.0
    %4196 = vmatpush1.xpose.msra.mxu0 0.0
    %4197 = vmatprep.subr.mxu0 0.0
    %4198 = vmatpush1.xpose.msra.mxu0 0.0
    %4199 = vmatprep.subr.mxu0 0.0
    %4200 = vmatpush1.xpose.msra.mxu0 0.0
    %4201 = vmatprep.subr.mxu0 0.0
    %4202 = vmatpush1.xpose.msra.mxu0 0.0
    %4203 = vmatprep.subr.mxu0 0.0
    %4204 = vmatpush1.xpose.msra.mxu0 0.0
    %4205 = vmatprep.subr.mxu0 0.0
    %4206 = vmatpush1.xpose.msra.mxu0 0.0
    %4207 = vmatprep.subr.mxu0 0.0
    %4208 = vmatpush1.xpose.msra.mxu0 0.0
    %4209 = vmatprep.subr.mxu0 0.0
    %4210 = vmatpush1.xpose.msra.mxu0 0.0
    %4211 = vmatprep.subr.mxu0 0.0
    %4212 = vmatpush1.xpose.msra.mxu0 0.0
    %4213 = vmatprep.subr.mxu0 0.0
    %4214 = vmatpush1.xpose.msra.mxu0 0.0
    %4215 = vmatprep.subr.mxu0 0.0
    %4216 = vmatpush1.xpose.msra.mxu0 0.0
    %4217 = vmatprep.subr.mxu0 0.0
    %4218 = vmatpush1.xpose.msra.mxu0 0.0
    %4219 = vmatprep.mubr.f32.mxu0 0.0
    %v4220 = vand.u32 %v3801, 4294901760
    %4221 = vmatmul.mubr.f32.gmra.mrb[0].mxu0 %v4220
    %v4222 = vpop.f32.mrb[0].mxu0
    %v4223 = vadd.f32 %v4138, %v4222
    %v4224 = vpop.f32.mrb[0].mxu0
    %4225 = vmatprep.mubr.f32.mxu0 0.0
    %v4226 = vand.u32 %v3803, 4294901760
    %4227 = vmatmul.mubr.f32.gmra.mrb[0].mxu0 %v4226
    %v4228 = vpop.f32.mrb[0].mxu0
    %v4229 = vadd.f32 %v4146, %v4228
    %v4230 = vpop.f32.mrb[0].mxu0
    %4231 = vdwg.mxu0
    %4232 = vmatprep.subr.mxu0 0.0
    %v4233 = vand.u32 %v3805, 4294901760
    %4234 = vmatpush1.xpose.msra.mxu0 %v4233
    %4235 = vmatprep.subr.mxu0 0.0
    %v4236 = vand.u32 %v3807, 4294901760
    %4237 = vmatpush1.xpose.msra.mxu0 %v4236
    %4238 = vmatprep.subr.mxu0 0.0
    %4239 = vmatpush1.xpose.msra.mxu0 0.0
    %4240 = vmatprep.subr.mxu0 0.0
    %4241 = vmatpush1.xpose.msra.mxu0 0.0
    %4242 = vmatprep.subr.mxu0 0.0
    %4243 = vmatpush1.xpose.msra.mxu0 0.0
    %4244 = vmatprep.subr.mxu0 0.0
    %4245 = vmatpush1.xpose.msra.mxu0 0.0
    %4246 = vmatprep.subr.mxu0 0.0
    %4247 = vmatpush1.xpose.msra.mxu0 0.0
    %4248 = vmatprep.subr.mxu0 0.0
    %4249 = vmatpush1.xpose.msra.mxu0 0.0
    %4250 = vmatprep.subr.mxu0 0.0
    %4251 = vmatpush1.xpose.msra.mxu0 0.0
    %4252 = vmatprep.subr.mxu0 0.0
    %4253 = vmatpush1.xpose.msra.mxu0 0.0
    %4254 = vmatprep.subr.mxu0 0.0
    %4255 = vmatpush1.xpose.msra.mxu0 0.0
    %4256 = vmatprep.subr.mxu0 0.0
    %4257 = vmatpush1.xpose.msra.mxu0 0.0
    %4258 = vmatprep.subr.mxu0 0.0
    %4259 = vmatpush1.xpose.msra.mxu0 0.0
    %4260 = vmatprep.subr.mxu0 0.0
    %4261 = vmatpush1.xpose.msra.mxu0 0.0
    %4262 = vmatprep.subr.mxu0 0.0
    %4263 = vmatpush1.xpose.msra.mxu0 0.0
    %4264 = vmatprep.subr.mxu0 0.0
    %4265 = vmatpush1.xpose.msra.mxu0 0.0
    %4266 = vmatprep.subr.mxu0 0.0
    %4267 = vmatpush1.xpose.msra.mxu0 0.0
    %4268 = vmatprep.subr.mxu0 0.0
    %4269 = vmatpush1.xpose.msra.mxu0 0.0
    %4270 = vmatprep.subr.mxu0 0.0
    %4271 = vmatpush1.xpose.msra.mxu0 0.0
    %4272 = vmatprep.subr.mxu0 0.0
    %4273 = vmatpush1.xpose.msra.mxu0 0.0
    %4274 = vmatprep.subr.mxu0 0.0
    %4275 = vmatpush1.xpose.msra.mxu0 0.0
    %4276 = vmatprep.subr.mxu0 0.0
    %4277 = vmatpush1.xpose.msra.mxu0 0.0
    %4278 = vmatprep.subr.mxu0 0.0
    %4279 = vmatpush1.xpose.msra.mxu0 0.0
    %4280 = vmatprep.subr.mxu0 0.0
    %4281 = vmatpush1.xpose.msra.mxu0 0.0
    %4282 = vmatprep.subr.mxu0 0.0
    %4283 = vmatpush1.xpose.msra.mxu0 0.0
    %4284 = vmatprep.subr.mxu0 0.0
    %4285 = vmatpush1.xpose.msra.mxu0 0.0
    %4286 = vmatprep.subr.mxu0 0.0
    %4287 = vmatpush1.xpose.msra.mxu0 0.0
    %4288 = vmatprep.subr.mxu0 0.0
    %4289 = vmatpush1.xpose.msra.mxu0 0.0
    %4290 = vmatprep.subr.mxu0 0.0
    %4291 = vmatpush1.xpose.msra.mxu0 0.0
    %4292 = vmatprep.subr.mxu0 0.0
    %4293 = vmatpush1.xpose.msra.mxu0 0.0
    %4294 = vmatprep.subr.mxu0 0.0
    %4295 = vmatpush1.xpose.msra.mxu0 0.0
    %4296 = vmatprep.subr.mxu0 0.0
    %4297 = vmatpush1.xpose.msra.mxu0 0.0
    %4298 = vmatprep.mubr.f32.mxu0 0.0
    %v4299 = vand.u32 %v3801, 4294901760
    %4300 = vmatmul.mubr.f32.gmra.mrb[0].mxu0 %v4299
    %v4301 = vpop.f32.mrb[0].mxu0
    %v4302 = vadd.f32 %v4223, %v4301
    %v4303 = vpop.f32.mrb[0].mxu0
    %4304 = vmatprep.mubr.f32.mxu0 0.0
    %v4305 = vand.u32 %v3803, 4294901760
    %4306 = vmatmul.mubr.f32.gmra.mrb[0].mxu0 %v4305
    %v4307 = vpop.f32.mrb[0].mxu0
    %v4308 = vadd.f32 %v4229, %v4307
    %v4309 = vpop.f32.mrb[0].mxu0
    %4310 = vdwg.mxu0
    %v4311 = vsel %vm640, %v4302, -inf
    %4312 = vmax.xlane.f32.xlu0 %v4311
    %v4313 = vpop.xlane.xlu0 %4312
    %v4314 = vsel %vm640, %v4308, -inf
    %4315 = vmax.xlane.f32.xlu0 %v4314
    %v4316 = vpop.xlane.xlu0 %4315
    %v4317 = vsub.f32 %v4302, %v4313
    %v4318 = vsub.f32 %v4308, %v4316
    %v4319 = vmul.f32 %v4317, 1.442695
    %v4320 = vpow.pop %v4319
    %v4321 = vmul.f32 %v4318, 1.442695
    %v4322 = vpow.pop %v4321
    %v4323 = vsel %vm640, %v4320, 0.0
    %4324 = vadd.xlane.f32.xlu0 %v4323
    %v4325 = vpop.xlane.xlu0 %4324
    %v4326 = vsel %vm640, %v4322, 0.0
    %4327 = vadd.xlane.f32.xlu0 %v4326
    %v4328 = vpop.xlane.xlu0 %4327
    %v4329 = vrcp.pop %v4325
    %v4330 = vmul.f32 %v4320, %v4329
    %v4331 = vrcp.pop %v4328
    %v4332 = vmul.f32 %v4322, %v4331
    %4333 = vrot.lane.b32.xlu0 %v621, 80
    %v4334 = vpop.permute.xlu0 %4333
    %4335 = vrot.lane.b32.xlu0 %v628, 80
    %v4336 = vpop.permute.xlu0 %4335
    %v4340 = vsel %vm640, %v4330, 0
    %v4343 = vsel %vm640, %v4332, 0
    %4345 = vmatprep.subr.mxu0 0.0
    %v4346 = vand.u32 %v4334, 4294901760
    %4347 = vmatpush1.msra.mxu0 %v4346
    %4348 = vmatprep.subr.mxu0 0.0
    %v4349 = vand.u32 %v4336, 4294901760
    %4350 = vmatpush1.msra.mxu0 %v4349
    %4351 = vmatprep.subr.mxu0 0.0
    %4352 = vmatpush1.msra.mxu0 0.0
    %4353 = vmatprep.subr.mxu0 0.0
    %4354 = vmatpush1.msra.mxu0 0.0
    %4355 = vmatprep.subr.mxu0 0.0
    %4356 = vmatpush1.msra.mxu0 0.0
    %4357 = vmatprep.subr.mxu0 0.0
    %4358 = vmatpush1.msra.mxu0 0.0
    %4359 = vmatprep.subr.mxu0 0.0
    %4360 = vmatpush1.msra.mxu0 0.0
    %4361 = vmatprep.subr.mxu0 0.0
    %4362 = vmatpush1.msra.mxu0 0.0
    %4363 = vmatprep.subr.mxu0 0.0
    %4364 = vmatpush1.msra.mxu0 0.0
    %4365 = vmatprep.subr.mxu0 0.0
    %4366 = vmatpush1.msra.mxu0 0.0
    %4367 = vmatprep.subr.mxu0 0.0
    %4368 = vmatpush1.msra.mxu0 0.0
    %4369 = vmatprep.subr.mxu0 0.0
    %4370 = vmatpush1.msra.mxu0 0.0
    %4371 = vmatprep.subr.mxu0 0.0
    %4372 = vmatpush1.msra.mxu0 0.0
    %4373 = vmatprep.subr.mxu0 0.0
    %4374 = vmatpush1.msra.mxu0 0.0
    %4375 = vmatprep.subr.mxu0 0.0
    %4376 = vmatpush1.msra.mxu0 0.0
    %4377 = vmatprep.subr.mxu0 0.0
    %4378 = vmatpush1.msra.mxu0 0.0
    %4379 = vmatprep.subr.mxu0 0.0
    %4380 = vmatpush1.msra.mxu0 0.0
    %4381 = vmatprep.subr.mxu0 0.0
    %4382 = vmatpush1.msra.mxu0 0.0
    %4383 = vmatprep.subr.mxu0 0.0
    %4384 = vmatpush1.msra.mxu0 0.0
    %4385 = vmatprep.subr.mxu0 0.0
    %4386 = vmatpush1.msra.mxu0 0.0
    %4387 = vmatprep.subr.mxu0 0.0
    %4388 = vmatpush1.msra.mxu0 0.0
    %4389 = vmatprep.subr.mxu0 0.0
    %4390 = vmatpush1.msra.mxu0 0.0
    %4391 = vmatprep.subr.mxu0 0.0
    %4392 = vmatpush1.msra.mxu0 0.0
    %4393 = vmatprep.subr.mxu0 0.0
    %4394 = vmatpush1.msra.mxu0 0.0
    %4395 = vmatprep.subr.mxu0 0.0
    %4396 = vmatpush1.msra.mxu0 0.0
    %4397 = vmatprep.subr.mxu0 0.0
    %4398 = vmatpush1.msra.mxu0 0.0
    %4399 = vmatprep.subr.mxu0 0.0
    %4400 = vmatpush1.msra.mxu0 0.0
    %4401 = vmatprep.subr.mxu0 0.0
    %4402 = vmatpush1.msra.mxu0 0.0
    %4403 = vmatprep.subr.mxu0 0.0
    %4404 = vmatpush1.msra.mxu0 0.0
    %4405 = vmatprep.subr.mxu0 0.0
    %4406 = vmatpush1.msra.mxu0 0.0
    %4407 = vmatprep.subr.mxu0 0.0
    %4408 = vmatpush1.msra.mxu0 0.0
    %4409 = vmatprep.subr.mxu0 0.0
    %4410 = vmatpush1.msra.mxu0 0.0
    %4411 = vmatprep.mubr.f32.mxu0 0.0
    %v4412 = vand.u32 %v4340, 4294901760
    %v4413 = vsub.f32 %v4340, %v4412
    %v4414 = vand.u32 %v4413, 4294901760
    %v4415 = vsub.f32 %v4413, %v4414
    %v4416 = vand.u32 %v4415, 4294901760
    %4417 = vmatmul.mubr.f32.gmra.mrb[0].mxu0 %v4416
    %v4418 = vpop.f32.mrb[0].mxu0
    %v4419 = vadd.f32 0.0, %v4418
    %v4420 = vpop.f32.mrb[0].mxu0
    %4421 = vmatprep.mubr.f32.mxu0 0.0
    %v4422 = vand.u32 %v4343, 4294901760
    %v4423 = vsub.f32 %v4343, %v4422
    %v4424 = vand.u32 %v4423, 4294901760
    %v4425 = vsub.f32 %v4423, %v4424
    %v4426 = vand.u32 %v4425, 4294901760
    %4427 = vmatmul.mubr.f32.gmra.mrb[0].mxu0 %v4426
    %v4428 = vpop.f32.mrb[0].mxu0
    %v4429 = vadd.f32 0.0, %v4428
    %v4430 = vpop.f32.mrb[0].mxu0
    %4431 = vdwg.mxu0
    %4432 = vmatprep.subr.mxu0 0.0
    %v4433 = vand.u32 %v4334, 4294901760
    %v4434 = vsub.f32 %v4334, %v4433
    %v4435 = vand.u32 %v4434, 4294901760
    %v4436 = vsub.f32 %v4434, %v4435
    %v4437 = vand.u32 %v4436, 4294901760
    %4438 = vmatpush1.msra.mxu0 %v4437
    %4439 = vmatprep.subr.mxu0 0.0
    %v4440 = vand.u32 %v4336, 4294901760
    %v4441 = vsub.f32 %v4336, %v4440
    %v4442 = vand.u32 %v4441, 4294901760
    %v4443 = vsub.f32 %v4441, %v4442
    %v4444 = vand.u32 %v4443, 4294901760
    %4445 = vmatpush1.msra.mxu0 %v4444
    %4446 = vmatprep.subr.mxu0 0.0
    %4447 = vmatpush1.msra.mxu0 0.0
    %4448 = vmatprep.subr.mxu0 0.0
    %4449 = vmatpush1.msra.mxu0 0.0
    %4450 = vmatprep.subr.mxu0 0.0
    %4451 = vmatpush1.msra.mxu0 0.0
    %4452 = vmatprep.subr.mxu0 0.0
    %4453 = vmatpush1.msra.mxu0 0.0
    %4454 = vmatprep.subr.mxu0 0.0
    %4455 = vmatpush1.msra.mxu0 0.0
    %4456 = vmatprep.subr.mxu0 0.0
    %4457 = vmatpush1.msra.mxu0 0.0
    %4458 = vmatprep.subr.mxu0 0.0
    %4459 = vmatpush1.msra.mxu0 0.0
    %4460 = vmatprep.subr.mxu0 0.0
    %4461 = vmatpush1.msra.mxu0 0.0
    %4462 = vmatprep.subr.mxu0 0.0
    %4463 = vmatpush1.msra.mxu0 0.0
    %4464 = vmatprep.subr.mxu0 0.0
    %4465 = vmatpush1.msra.mxu0 0.0
    %4466 = vmatprep.subr.mxu0 0.0
    %4467 = vmatpush1.msra.mxu0 0.0
    %4468 = vmatprep.subr.mxu0 0.0
    %4469 = vmatpush1.msra.mxu0 0.0
    %4470 = vmatprep.subr.mxu0 0.0
    %4471 = vmatpush1.msra.mxu0 0.0
    %4472 = vmatprep.subr.mxu0 0.0
    %4473 = vmatpush1.msra.mxu0 0.0
    %4474 = vmatprep.subr.mxu0 0.0
    %4475 = vmatpush1.msra.mxu0 0.0
    %4476 = vmatprep.subr.mxu0 0.0
    %4477 = vmatpush1.msra.mxu0 0.0
    %4478 = vmatprep.subr.mxu0 0.0
    %4479 = vmatpush1.msra.mxu0 0.0
    %4480 = vmatprep.subr.mxu0 0.0
    %4481 = vmatpush1.msra.mxu0 0.0
    %4482 = vmatprep.subr.mxu0 0.0
    %4483 = vmatpush1.msra.mxu0 0.0
    %4484 = vmatprep.subr.mxu0 0.0
    %4485 = vmatpush1.msra.mxu0 0.0
    %4486 = vmatprep.subr.mxu0 0.0
    %4487 = vmatpush1.msra.mxu0 0.0
    %4488 = vmatprep.subr.mxu0 0.0
    %4489 = vmatpush1.msra.mxu0 0.0
    %4490 = vmatprep.subr.mxu0 0.0
    %4491 = vmatpush1.msra.mxu0 0.0
    %4492 = vmatprep.subr.mxu0 0.0
    %4493 = vmatpush1.msra.mxu0 0.0
    %4494 = vmatprep.subr.mxu0 0.0
    %4495 = vmatpush1.msra.mxu0 0.0
    %4496 = vmatprep.subr.mxu0 0.0
    %4497 = vmatpush1.msra.mxu0 0.0
    %4498 = vmatprep.subr.mxu0 0.0
    %4499 = vmatpush1.msra.mxu0 0.0
    %4500 = vmatprep.subr.mxu0 0.0
    %4501 = vmatpush1.msra.mxu0 0.0
    %4502 = vmatprep.subr.mxu0 0.0
    %4503 = vmatpush1.msra.mxu0 0.0
    %4504 = vmatprep.subr.mxu0 0.0
    %4505 = vmatpush1.msra.mxu0 0.0
    %4506 = vmatprep.mubr.f32.mxu0 0.0
    %v4507 = vand.u32 %v4340, 4294901760
    %4508 = vmatmul.mubr.f32.gmra.mrb[0].mxu0 %v4507
    %v4509 = vpop.f32.mrb[0].mxu0
    %v4510 = vadd.f32 %v4419, %v4509
    %v4511 = vpop.f32.mrb[0].mxu0
    %4512 = vmatprep.mubr.f32.mxu0 0.0
    %v4513 = vand.u32 %v4343, 4294901760
    %4514 = vmatmul.mubr.f32.gmra.mrb[0].mxu0 %v4513
    %v4515 = vpop.f32.mrb[0].mxu0
    %v4516 = vadd.f32 %v4429, %v4515
    %v4517 = vpop.f32.mrb[0].mxu0
    %4518 = vdwg.mxu0
    %4519 = vmatprep.subr.mxu0 0.0
    %v4520 = vand.u32 %v4334, 4294901760
    %v4521 = vsub.f32 %v4334, %v4520
    %4522 = vmatpush1.msra.mxu0 %v4521
    %4523 = vmatprep.subr.mxu0 0.0
    %v4524 = vand.u32 %v4336, 4294901760
    %v4525 = vsub.f32 %v4336, %v4524
    %4526 = vmatpush1.msra.mxu0 %v4525
    %4527 = vmatprep.subr.mxu0 0.0
    %4528 = vmatpush1.msra.mxu0 0.0
    %4529 = vmatprep.subr.mxu0 0.0
    %4530 = vmatpush1.msra.mxu0 0.0
    %4531 = vmatprep.subr.mxu0 0.0
    %4532 = vmatpush1.msra.mxu0 0.0
    %4533 = vmatprep.subr.mxu0 0.0
    %4534 = vmatpush1.msra.mxu0 0.0
    %4535 = vmatprep.subr.mxu0 0.0
    %4536 = vmatpush1.msra.mxu0 0.0
    %4537 = vmatprep.subr.mxu0 0.0
    %4538 = vmatpush1.msra.mxu0 0.0
    %4539 = vmatprep.subr.mxu0 0.0
    %4540 = vmatpush1.msra.mxu0 0.0
    %4541 = vmatprep.subr.mxu0 0.0
    %4542 = vmatpush1.msra.mxu0 0.0
    %4543 = vmatprep.subr.mxu0 0.0
    %4544 = vmatpush1.msra.mxu0 0.0
    %4545 = vmatprep.subr.mxu0 0.0
    %4546 = vmatpush1.msra.mxu0 0.0
    %4547 = vmatprep.subr.mxu0 0.0
    %4548 = vmatpush1.msra.mxu0 0.0
    %4549 = vmatprep.subr.mxu0 0.0
    %4550 = vmatpush1.msra.mxu0 0.0
    %4551 = vmatprep.subr.mxu0 0.0
    %4552 = vmatpush1.msra.mxu0 0.0
    %4553 = vmatprep.subr.mxu0 0.0
    %4554 = vmatpush1.msra.mxu0 0.0
    %4555 = vmatprep.subr.mxu0 0.0
    %4556 = vmatpush1.msra.mxu0 0.0
    %4557 = vmatprep.subr.mxu0 0.0
    %4558 = vmatpush1.msra.mxu0 0.0
    %4559 = vmatprep.subr.mxu0 0.0
    %4560 = vmatpush1.msra.mxu0 0.0
    %4561 = vmatprep.subr.mxu0 0.0
    %4562 = vmatpush1.msra.mxu0 0.0
    %4563 = vmatprep.subr.mxu0 0.0
    %4564 = vmatpush1.msra.mxu0 0.0
    %4565 = vmatprep.subr.mxu0 0.0
    %4566 = vmatpush1.msra.mxu0 0.0
    %4567 = vmatprep.subr.mxu0 0.0
    %4568 = vmatpush1.msra.mxu0 0.0
    %4569 = vmatprep.subr.mxu0 0.0
    %4570 = vmatpush1.msra.mxu0 0.0
    %4571 = vmatprep.subr.mxu0 0.0
    %4572 = vmatpush1.msra.mxu0 0.0
    %4573 = vmatprep.subr.mxu0 0.0
    %4574 = vmatpush1.msra.mxu0 0.0
    %4575 = vmatprep.subr.mxu0 0.0
    %4576 = vmatpush1.msra.mxu0 0.0
    %4577 = vmatprep.subr.mxu0 0.0
    %4578 = vmatpush1.msra.mxu0 0.0
    %4579 = vmatprep.subr.mxu0 0.0
    %4580 = vmatpush1.msra.mxu0 0.0
    %4581 = vmatprep.subr.mxu0 0.0
    %4582 = vmatpush1.msra.mxu0 0.0
    %4583 = vmatprep.subr.mxu0 0.0
    %4584 = vmatpush1.msra.mxu0 0.0
    %4585 = vmatprep.subr.mxu0 0.0
    %4586 = vmatpush1.msra.mxu0 0.0
    %4587 = vmatprep.mubr.f32.mxu0 0.0
    %v4588 = vand.u32 %v4340, 4294901760
    %v4589 = vsub.f32 %v4340, %v4588
    %4590 = vmatmul.mubr.f32.gmra.mrb[0].mxu0 %v4589
    %v4591 = vpop.f32.mrb[0].mxu0
    %v4592 = vadd.f32 %v4510, %v4591
    %v4593 = vpop.f32.mrb[0].mxu0
    %4594 = vmatprep.mubr.f32.mxu0 0.0
    %v4595 = vand.u32 %v4343, 4294901760
    %v4596 = vsub.f32 %v4343, %v4595
    %4597 = vmatmul.mubr.f32.gmra.mrb[0].mxu0 %v4596
    %v4598 = vpop.f32.mrb[0].mxu0
    %v4599 = vadd.f32 %v4516, %v4598
    %v4600 = vpop.f32.mrb[0].mxu0
    %4601 = vdwg.mxu0
    %4602 = vmatprep.subr.mxu0 0.0
    %v4603 = vand.u32 %v4334, 4294901760
    %4604 = vmatpush1.msra.mxu0 %v4603
    %4605 = vmatprep.subr.mxu0 0.0
    %v4606 = vand.u32 %v4336, 4294901760
    %4607 = vmatpush1.msra.mxu0 %v4606
    %4608 = vmatprep.subr.mxu0 0.0
    %4609 = vmatpush1.msra.mxu0 0.0
    %4610 = vmatprep.subr.mxu0 0.0
    %4611 = vmatpush1.msra.mxu0 0.0
    %4612 = vmatprep.subr.mxu0 0.0
    %4613 = vmatpush1.msra.mxu0 0.0
    %4614 = vmatprep.subr.mxu0 0.0
    %4615 = vmatpush1.msra.mxu0 0.0
    %4616 = vmatprep.subr.mxu0 0.0
    %4617 = vmatpush1.msra.mxu0 0.0
    %4618 = vmatprep.subr.mxu0 0.0
    %4619 = vmatpush1.msra.mxu0 0.0
    %4620 = vmatprep.subr.mxu0 0.0
    %4621 = vmatpush1.msra.mxu0 0.0
    %4622 = vmatprep.subr.mxu0 0.0
    %4623 = vmatpush1.msra.mxu0 0.0
    %4624 = vmatprep.subr.mxu0 0.0
    %4625 = vmatpush1.msra.mxu0 0.0
    %4626 = vmatprep.subr.mxu0 0.0
    %4627 = vmatpush1.msra.mxu0 0.0
    %4628 = vmatprep.subr.mxu0 0.0
    %4629 = vmatpush1.msra.mxu0 0.0
    %4630 = vmatprep.subr.mxu0 0.0
    %4631 = vmatpush1.msra.mxu0 0.0
    %4632 = vmatprep.subr.mxu0 0.0
    %4633 = vmatpush1.msra.mxu0 0.0
    %4634 = vmatprep.subr.mxu0 0.0
    %4635 = vmatpush1.msra.mxu0 0.0
    %4636 = vmatprep.subr.mxu0 0.0
    %4637 = vmatpush1.msra.mxu0 0.0
    %4638 = vmatprep.subr.mxu0 0.0
    %4639 = vmatpush1.msra.mxu0 0.0
    %4640 = vmatprep.subr.mxu0 0.0
    %4641 = vmatpush1.msra.mxu0 0.0
    %4642 = vmatprep.subr.mxu0 0.0
    %4643 = vmatpush1.msra.mxu0 0.0
    %4644 = vmatprep.subr.mxu0 0.0
    %4645 = vmatpush1.msra.mxu0 0.0
    %4646 = vmatprep.subr.mxu0 0.0
    %4647 = vmatpush1.msra.mxu0 0.0
    %4648 = vmatprep.subr.mxu0 0.0
    %4649 = vmatpush1.msra.mxu0 0.0
    %4650 = vmatprep.subr.mxu0 0.0
    %4651 = vmatpush1.msra.mxu0 0.0
    %4652 = vmatprep.subr.mxu0 0.0
    %4653 = vmatpush1.msra.mxu0 0.0
    %4654 = vmatprep.subr.mxu0 0.0
    %4655 = vmatpush1.msra.mxu0 0.0
    %4656 = vmatprep.subr.mxu0 0.0
    %4657 = vmatpush1.msra.mxu0 0.0
    %4658 = vmatprep.subr.mxu0 0.0
    %4659 = vmatpush1.msra.mxu0 0.0
    %4660 = vmatprep.subr.mxu0 0.0
    %4661 = vmatpush1.msra.mxu0 0.0
    %4662 = vmatprep.subr.mxu0 0.0
    %4663 = vmatpush1.msra.mxu0 0.0
    %4664 = vmatprep.subr.mxu0 0.0
    %4665 = vmatpush1.msra.mxu0 0.0
    %4666 = vmatprep.subr.mxu0 0.0
    %4667 = vmatpush1.msra.mxu0 0.0
    %4668 = vmatprep.mubr.f32.mxu0 0.0
    %v4669 = vand.u32 %v4340, 4294901760
    %v4670 = vsub.f32 %v4340, %v4669
    %v4671 = vand.u32 %v4670, 4294901760
    %4672 = vmatmul.mubr.f32.gmra.mrb[0].mxu0 %v4671
    %v4673 = vpop.f32.mrb[0].mxu0
    %v4674 = vadd.f32 %v4592, %v4673
    %v4675 = vpop.f32.mrb[0].mxu0
    %4676 = vmatprep.mubr.f32.mxu0 0.0
    %v4677 = vand.u32 %v4343, 4294901760
    %v4678 = vsub.f32 %v4343, %v4677
    %v4679 = vand.u32 %v4678, 4294901760
    %4680 = vmatmul.mubr.f32.gmra.mrb[0].mxu0 %v4679
    %v4681 = vpop.f32.mrb[0].mxu0
    %v4682 = vadd.f32 %v4599, %v4681
    %v4683 = vpop.f32.mrb[0].mxu0
    %4684 = vdwg.mxu0
    %4685 = vmatprep.subr.mxu0 0.0
    %v4686 = vand.u32 %v4334, 4294901760
    %v4687 = vsub.f32 %v4334, %v4686
    %v4688 = vand.u32 %v4687, 4294901760
    %4689 = vmatpush1.msra.mxu0 %v4688
    %4690 = vmatprep.subr.mxu0 0.0
    %v4691 = vand.u32 %v4336, 4294901760
    %v4692 = vsub.f32 %v4336, %v4691
    %v4693 = vand.u32 %v4692, 4294901760
    %4694 = vmatpush1.msra.mxu0 %v4693
    %4695 = vmatprep.subr.mxu0 0.0
    %4696 = vmatpush1.msra.mxu0 0.0
    %4697 = vmatprep.subr.mxu0 0.0
    %4698 = vmatpush1.msra.mxu0 0.0
    %4699 = vmatprep.subr.mxu0 0.0
    %4700 = vmatpush1.msra.mxu0 0.0
    %4701 = vmatprep.subr.mxu0 0.0
    %4702 = vmatpush1.msra.mxu0 0.0
    %4703 = vmatprep.subr.mxu0 0.0
    %4704 = vmatpush1.msra.mxu0 0.0
    %4705 = vmatprep.subr.mxu0 0.0
    %4706 = vmatpush1.msra.mxu0 0.0
    %4707 = vmatprep.subr.mxu0 0.0
    %4708 = vmatpush1.msra.mxu0 0.0
    %4709 = vmatprep.subr.mxu0 0.0
    %4710 = vmatpush1.msra.mxu0 0.0
    %4711 = vmatprep.subr.mxu0 0.0
    %4712 = vmatpush1.msra.mxu0 0.0
    %4713 = vmatprep.subr.mxu0 0.0
    %4714 = vmatpush1.msra.mxu0 0.0
    %4715 = vmatprep.subr.mxu0 0.0
    %4716 = vmatpush1.msra.mxu0 0.0
    %4717 = vmatprep.subr.mxu0 0.0
    %4718 = vmatpush1.msra.mxu0 0.0
    %4719 = vmatprep.subr.mxu0 0.0
    %4720 = vmatpush1.msra.mxu0 0.0
    %4721 = vmatprep.subr.mxu0 0.0
    %4722 = vmatpush1.msra.mxu0 0.0
    %4723 = vmatprep.subr.mxu0 0.0
    %4724 = vmatpush1.msra.mxu0 0.0
    %4725 = vmatprep.subr.mxu0 0.0
    %4726 = vmatpush1.msra.mxu0 0.0
    %4727 = vmatprep.subr.mxu0 0.0
    %4728 = vmatpush1.msra.mxu0 0.0
    %4729 = vmatprep.subr.mxu0 0.0
    %4730 = vmatpush1.msra.mxu0 0.0
    %4731 = vmatprep.subr.mxu0 0.0
    %4732 = vmatpush1.msra.mxu0 0.0
    %4733 = vmatprep.subr.mxu0 0.0
    %4734 = vmatpush1.msra.mxu0 0.0
    %4735 = vmatprep.subr.mxu0 0.0
    %4736 = vmatpush1.msra.mxu0 0.0
    %4737 = vmatprep.subr.mxu0 0.0
    %4738 = vmatpush1.msra.mxu0 0.0
    %4739 = vmatprep.subr.mxu0 0.0
    %4740 = vmatpush1.msra.mxu0 0.0
    %4741 = vmatprep.subr.mxu0 0.0
    %4742 = vmatpush1.msra.mxu0 0.0
    %4743 = vmatprep.subr.mxu0 0.0
    %4744 = vmatpush1.msra.mxu0 0.0
    %4745 = vmatprep.subr.mxu0 0.0
    %4746 = vmatpush1.msra.mxu0 0.0
    %4747 = vmatprep.subr.mxu0 0.0
    %4748 = vmatpush1.msra.mxu0 0.0
    %4749 = vmatprep.subr.mxu0 0.0
    %4750 = vmatpush1.msra.mxu0 0.0
    %4751 = vmatprep.subr.mxu0 0.0
    %4752 = vmatpush1.msra.mxu0 0.0
    %4753 = vmatprep.subr.mxu0 0.0
    %4754 = vmatpush1.msra.mxu0 0.0
    %4755 = vmatprep.mubr.f32.mxu0 0.0
    %v4756 = vand.u32 %v4340, 4294901760
    %4757 = vmatmul.mubr.f32.gmra.mrb[0].mxu0 %v4756
    %v4758 = vpop.f32.mrb[0].mxu0
    %v4759 = vadd.f32 %v4674, %v4758
    %v4760 = vpop.f32.mrb[0].mxu0
    %4761 = vmatprep.mubr.f32.mxu0 0.0
    %v4762 = vand.u32 %v4343, 4294901760
    %4763 = vmatmul.mubr.f32.gmra.mrb[0].mxu0 %v4762
    %v4764 = vpop.f32.mrb[0].mxu0
    %v4765 = vadd.f32 %v4682, %v4764
    %v4766 = vpop.f32.mrb[0].mxu0
    %4767 = vdwg.mxu0
    %4768 = vmatprep.subr.mxu0 0.0
    %v4769 = vand.u32 %v4334, 4294901760
    %4770 = vmatpush1.msra.mxu0 %v4769
    %4771 = vmatprep.subr.mxu0 0.0
    %v4772 = vand.u32 %v4336, 4294901760
    %4773 = vmatpush1.msra.mxu0 %v4772
    %4774 = vmatprep.subr.mxu0 0.0
    %4775 = vmatpush1.msra.mxu0 0.0
    %4776 = vmatprep.subr.mxu0 0.0
    %4777 = vmatpush1.msra.mxu0 0.0
    %4778 = vmatprep.subr.mxu0 0.0
    %4779 = vmatpush1.msra.mxu0 0.0
    %4780 = vmatprep.subr.mxu0 0.0
    %4781 = vmatpush1.msra.mxu0 0.0
    %4782 = vmatprep.subr.mxu0 0.0
    %4783 = vmatpush1.msra.mxu0 0.0
    %4784 = vmatprep.subr.mxu0 0.0
    %4785 = vmatpush1.msra.mxu0 0.0
    %4786 = vmatprep.subr.mxu0 0.0
    %4787 = vmatpush1.msra.mxu0 0.0
    %4788 = vmatprep.subr.mxu0 0.0
    %4789 = vmatpush1.msra.mxu0 0.0
    %4790 = vmatprep.subr.mxu0 0.0
    %4791 = vmatpush1.msra.mxu0 0.0
    %4792 = vmatprep.subr.mxu0 0.0
    %4793 = vmatpush1.msra.mxu0 0.0
    %4794 = vmatprep.subr.mxu0 0.0
    %4795 = vmatpush1.msra.mxu0 0.0
    %4796 = vmatprep.subr.mxu0 0.0
    %4797 = vmatpush1.msra.mxu0 0.0
    %4798 = vmatprep.subr.mxu0 0.0
    %4799 = vmatpush1.msra.mxu0 0.0
    %4800 = vmatprep.subr.mxu0 0.0
    %4801 = vmatpush1.msra.mxu0 0.0
    %4802 = vmatprep.subr.mxu0 0.0
    %4803 = vmatpush1.msra.mxu0 0.0
    %4804 = vmatprep.subr.mxu0 0.0
    %4805 = vmatpush1.msra.mxu0 0.0
    %4806 = vmatprep.subr.mxu0 0.0
    %4807 = vmatpush1.msra.mxu0 0.0
    %4808 = vmatprep.subr.mxu0 0.0
    %4809 = vmatpush1.msra.mxu0 0.0
    %4810 = vmatprep.subr.mxu0 0.0
    %4811 = vmatpush1.msra.mxu0 0.0
    %4812 = vmatprep.subr.mxu0 0.0
    %4813 = vmatpush1.msra.mxu0 0.0
    %4814 = vmatprep.subr.mxu0 0.0
    %4815 = vmatpush1.msra.mxu0 0.0
    %4816 = vmatprep.subr.mxu0 0.0
    %4817 = vmatpush1.msra.mxu0 0.0
    %4818 = vmatprep.subr.mxu0 0.0
    %4819 = vmatpush1.msra.mxu0 0.0
    %4820 = vmatprep.subr.mxu0 0.0
    %4821 = vmatpush1.msra.mxu0 0.0
    %4822 = vmatprep.subr.mxu0 0.0
    %4823 = vmatpush1.msra.mxu0 0.0
    %4824 = vmatprep.subr.mxu0 0.0
    %4825 = vmatpush1.msra.mxu0 0.0
    %4826 = vmatprep.subr.mxu0 0.0
    %4827 = vmatpush1.msra.mxu0 0.0
    %4828 = vmatprep.subr.mxu0 0.0
    %4829 = vmatpush1.msra.mxu0 0.0
    %4830 = vmatprep.subr.mxu0 0.0
    %4831 = vmatpush1.msra.mxu0 0.0
    %4832 = vmatprep.subr.mxu0 0.0
    %4833 = vmatpush1.msra.mxu0 0.0
    %4834 = vmatprep.mubr.f32.mxu0 0.0
    %v4835 = vand.u32 %v4340, 4294901760
    %4836 = vmatmul.mubr.f32.gmra.mrb[0].mxu0 %v4835
    %v4837 = vpop.f32.mrb[0].mxu0
    %v4838 = vadd.f32 %v4759, %v4837
    %v4839 = vpop.f32.mrb[0].mxu0
    %4840 = vmatprep.mubr.f32.mxu0 0.0
    %v4841 = vand.u32 %v4343, 4294901760
    %4842 = vmatmul.mubr.f32.gmra.mrb[0].mxu0 %v4841
    %v4843 = vpop.f32.mrb[0].mxu0
    %v4844 = vadd.f32 %v4765, %v4843
    %v4845 = vpop.f32.mrb[0].mxu0
    %4846 = vdwg.mxu0
    %4849 = vrot.lane.b32.xlu0 %v2730, 16
    %v4850 = vpop.permute.xlu0 %4849
    %4851 = vrot.lane.b32.xlu0 %v2736, 16
    %v4852 = vpop.permute.xlu0 %4851
    %4857 = vrot.lane.b32.xlu0 %v3784, 32
    %v4858 = vpop.permute.xlu0 %4857
    %4859 = vrot.lane.b32.xlu0 %v3790, 32
    %v4860 = vpop.permute.xlu0 %4859
    %4865 = vrot.lane.b32.xlu0 %v4838, 48
    %v4866 = vpop.permute.xlu0 %4865
    %4867 = vrot.lane.b32.xlu0 %v4844, 48
    %v4868 = vpop.permute.xlu0 %4867
    %v4871 = vsel %vm640, %v1674, %v4850
    %v4872 = vsel %vm640, %v1680, %v4852
    %v4873 = vsel %vm31, %v4871, %v4858
    %v4874 = vsel %vm31, %v4872, %v4860
    %vm4875 = vcmask 392192
    %v4876 = vsel %vm4875, %v4873, %v4866
    %v4877 = vsel %vm4875, %v4874, %v4868
    %v4878 = vld [vmem:[%s2] sm:$0xff]
    %v4879 = vld [vmem:[%s2 + $0x8] sm:$0xff]
    %v4880 = vld [vmem:[%s2 + $0x10] sm:$0xff]
    %v4881 = vld [vmem:[%s2 + $0x18] sm:$0xff]
    %v4882 = vld [vmem:[%s2 + $0x20] sm:$0xff]
    %v4883 = vld [vmem:[%s2 + $0x28] sm:$0xff]
    %v4884 = vld [vmem:[%s2 + $0x30] sm:$0xff]
    %v4885 = vld [vmem:[%s2 + $0x38] sm:$0xff]
    %v4886 = vld [vmem:[%s3] sm:$0x1]
    %v4888 = vlaneseq
    %v4889 = vshrl.u32 %v4888, 7
    %v4890 = vsub.s32 0, %v4889
    %v4891 = vrot.slane %v4886, %v4890
    %vm4893 = vcmask 523264
    %v4895 = vsel %vm4893, %v4876, 0
    %v4898 = vsel %vm4893, %v4877, 0
    %4900 = vmatprep.subr.mxu0 0.0
    %v4901 = vand.u32 %v4878, 4294901760
    %4902 = vmatpush1.msra.mxu0 %v4901
    %4903 = vmatprep.subr.mxu0 0.0
    %v4904 = vand.u32 %v4879, 4294901760
    %4905 = vmatpush1.msra.mxu0 %v4904
    %4906 = vmatprep.subr.mxu0 0.0
    %v4907 = vand.u32 %v4880, 4294901760
    %4908 = vmatpush1.msra.mxu0 %v4907
    %4909 = vmatprep.subr.mxu0 0.0
    %v4910 = vand.u32 %v4881, 4294901760
    %4911 = vmatpush1.msra.mxu0 %v4910
    %4912 = vmatprep.subr.mxu0 0.0
    %v4913 = vand.u32 %v4882, 4294901760
    %4914 = vmatpush1.msra.mxu0 %v4913
    %4915 = vmatprep.subr.mxu0 0.0
    %v4916 = vand.u32 %v4883, 4294901760
    %4917 = vmatpush1.msra.mxu0 %v4916
    %4918 = vmatprep.subr.mxu0 0.0
    %v4919 = vand.u32 %v4884, 4294901760
    %4920 = vmatpush1.msra.mxu0 %v4919
    %4921 = vmatprep.subr.mxu0 0.0
    %v4922 = vand.u32 %v4885, 4294901760
    %4923 = vmatpush1.msra.mxu0 %v4922
    %4924 = vmatprep.subr.mxu0 0.0
    %4925 = vmatpush1.msra.mxu0 0.0
    %4926 = vmatprep.subr.mxu0 0.0
    %4927 = vmatpush1.msra.mxu0 0.0
    %4928 = vmatprep.subr.mxu0 0.0
    %4929 = vmatpush1.msra.mxu0 0.0
    %4930 = vmatprep.subr.mxu0 0.0
    %4931 = vmatpush1.msra.mxu0 0.0
    %4932 = vmatprep.subr.mxu0 0.0
    %4933 = vmatpush1.msra.mxu0 0.0
    %4934 = vmatprep.subr.mxu0 0.0
    %4935 = vmatpush1.msra.mxu0 0.0
    %4936 = vmatprep.subr.mxu0 0.0
    %4937 = vmatpush1.msra.mxu0 0.0
    %4938 = vmatprep.subr.mxu0 0.0
    %4939 = vmatpush1.msra.mxu0 0.0
    %4940 = vmatprep.subr.mxu0 0.0
    %4941 = vmatpush1.msra.mxu0 0.0
    %4942 = vmatprep.subr.mxu0 0.0
    %4943 = vmatpush1.msra.mxu0 0.0
    %4944 = vmatprep.subr.mxu0 0.0
    %4945 = vmatpush1.msra.mxu0 0.0
    %4946 = vmatprep.subr.mxu0 0.0
    %4947 = vmatpush1.msra.mxu0 0.0
    %4948 = vmatprep.subr.mxu0 0.0
    %4949 = vmatpush1.msra.mxu0 0.0
    %4950 = vmatprep.subr.mxu0 0.0
    %4951 = vmatpush1.msra.mxu0 0.0
    %4952 = vmatprep.subr.mxu0 0.0
    %4953 = vmatpush1.msra.mxu0 0.0
    %4954 = vmatprep.subr.mxu0 0.0
    %4955 = vmatpush1.msra.mxu0 0.0
    %4956 = vmatprep.subr.mxu0 0.0
    %4957 = vmatpush1.msra.mxu0 0.0
    %4958 = vmatprep.subr.mxu0 0.0
    %4959 = vmatpush1.msra.mxu0 0.0
    %4960 = vmatprep.subr.mxu0 0.0
    %4961 = vmatpush1.msra.mxu0 0.0
    %4962 = vmatprep.subr.mxu0 0.0
    %4963 = vmatpush1.msra.mxu0 0.0
    %4964 = vmatprep.subr.mxu0 0.0
    %4965 = vmatpush1.msra.mxu0 0.0
    %4966 = vmatprep.subr.mxu0 0.0
    %4967 = vmatpush1.msra.mxu0 0.0
    %4968 = vmatprep.subr.mxu0 0.0
    %4969 = vmatpush1.msra.mxu0 0.0
    %4970 = vmatprep.subr.mxu0 0.0
    %4971 = vmatpush1.msra.mxu0 0.0
    %4972 = vmatprep.mubr.f32.mxu0 0.0
    %v4973 = vand.u32 %v4895, 4294901760
    %v4974 = vsub.f32 %v4895, %v4973
    %v4975 = vand.u32 %v4974, 4294901760
    %v4976 = vsub.f32 %v4974, %v4975
    %v4977 = vand.u32 %v4976, 4294901760
    %4978 = vmatmul.mubr.f32.gmra.mrb[0].mxu0 %v4977
    %v4979 = vpop.f32.mrb[0].mxu0
    %v4980 = vadd.f32 %v4891, %v4979
    %v4981 = vpop.f32.mrb[0].mxu0
    %4982 = vmatprep.mubr.f32.mxu0 0.0
    %v4983 = vand.u32 %v4898, 4294901760
    %v4984 = vsub.f32 %v4898, %v4983
    %v4985 = vand.u32 %v4984, 4294901760
    %v4986 = vsub.f32 %v4984, %v4985
    %v4987 = vand.u32 %v4986, 4294901760
    %4988 = vmatmul.mubr.f32.gmra.mrb[0].mxu0 %v4987
    %v4989 = vpop.f32.mrb[0].mxu0
    %v4990 = vadd.f32 %v4891, %v4989
    %v4991 = vpop.f32.mrb[0].mxu0
    %4992 = vdwg.mxu0
    %4993 = vmatprep.subr.mxu0 0.0
    %v4994 = vand.u32 %v4878, 4294901760
    %v4995 = vsub.f32 %v4878, %v4994
    %v4996 = vand.u32 %v4995, 4294901760
    %v4997 = vsub.f32 %v4995, %v4996
    %v4998 = vand.u32 %v4997, 4294901760
    %4999 = vmatpush1.msra.mxu0 %v4998
    %5000 = vmatprep.subr.mxu0 0.0
    %v5001 = vand.u32 %v4879, 4294901760
    %v5002 = vsub.f32 %v4879, %v5001
    %v5003 = vand.u32 %v5002, 4294901760
    %v5004 = vsub.f32 %v5002, %v5003
    %v5005 = vand.u32 %v5004, 4294901760
    %5006 = vmatpush1.msra.mxu0 %v5005
    %5007 = vmatprep.subr.mxu0 0.0
    %v5008 = vand.u32 %v4880, 4294901760
    %v5009 = vsub.f32 %v4880, %v5008
    %v5010 = vand.u32 %v5009, 4294901760
    %v5011 = vsub.f32 %v5009, %v5010
    %v5012 = vand.u32 %v5011, 4294901760
    %5013 = vmatpush1.msra.mxu0 %v5012
    %5014 = vmatprep.subr.mxu0 0.0
    %v5015 = vand.u32 %v4881, 4294901760
    %v5016 = vsub.f32 %v4881, %v5015
    %v5017 = vand.u32 %v5016, 4294901760
    %v5018 = vsub.f32 %v5016, %v5017
    %v5019 = vand.u32 %v5018, 4294901760
    %5020 = vmatpush1.msra.mxu0 %v5019
    %5021 = vmatprep.subr.mxu0 0.0
    %v5022 = vand.u32 %v4882, 4294901760
    %v5023 = vsub.f32 %v4882, %v5022
    %v5024 = vand.u32 %v5023, 4294901760
    %v5025 = vsub.f32 %v5023, %v5024
    %v5026 = vand.u32 %v5025, 4294901760
    %5027 = vmatpush1.msra.mxu0 %v5026
    %5028 = vmatprep.subr.mxu0 0.0
    %v5029 = vand.u32 %v4883, 4294901760
    %v5030 = vsub.f32 %v4883, %v5029
    %v5031 = vand.u32 %v5030, 4294901760
    %v5032 = vsub.f32 %v5030, %v5031
    %v5033 = vand.u32 %v5032, 4294901760
    %5034 = vmatpush1.msra.mxu0 %v5033
    %5035 = vmatprep.subr.mxu0 0.0
    %v5036 = vand.u32 %v4884, 4294901760
    %v5037 = vsub.f32 %v4884, %v5036
    %v5038 = vand.u32 %v5037, 4294901760
    %v5039 = vsub.f32 %v5037, %v5038
    %v5040 = vand.u32 %v5039, 4294901760
    %5041 = vmatpush1.msra.mxu0 %v5040
    %5042 = vmatprep.subr.mxu0 0.0
    %v5043 = vand.u32 %v4885, 4294901760
    %v5044 = vsub.f32 %v4885, %v5043
    %v5045 = vand.u32 %v5044, 4294901760
    %v5046 = vsub.f32 %v5044, %v5045
    %v5047 = vand.u32 %v5046, 4294901760
    %5048 = vmatpush1.msra.mxu0 %v5047
    %5049 = vmatprep.subr.mxu0 0.0
    %5050 = vmatpush1.msra.mxu0 0.0
    %5051 = vmatprep.subr.mxu0 0.0
    %5052 = vmatpush1.msra.mxu0 0.0
    %5053 = vmatprep.subr.mxu0 0.0
    %5054 = vmatpush1.msra.mxu0 0.0
    %5055 = vmatprep.subr.mxu0 0.0
    %5056 = vmatpush1.msra.mxu0 0.0
    %5057 = vmatprep.subr.mxu0 0.0
    %5058 = vmatpush1.msra.mxu0 0.0
    %5059 = vmatprep.subr.mxu0 0.0
    %5060 = vmatpush1.msra.mxu0 0.0
    %5061 = vmatprep.subr.mxu0 0.0
    %5062 = vmatpush1.msra.mxu0 0.0
    %5063 = vmatprep.subr.mxu0 0.0
    %5064 = vmatpush1.msra.mxu0 0.0
    %5065 = vmatprep.subr.mxu0 0.0
    %5066 = vmatpush1.msra.mxu0 0.0
    %5067 = vmatprep.subr.mxu0 0.0
    %5068 = vmatpush1.msra.mxu0 0.0
    %5069 = vmatprep.subr.mxu0 0.0
    %5070 = vmatpush1.msra.mxu0 0.0
    %5071 = vmatprep.subr.mxu0 0.0
    %5072 = vmatpush1.msra.mxu0 0.0
    %5073 = vmatprep.subr.mxu0 0.0
    %5074 = vmatpush1.msra.mxu0 0.0
    %5075 = vmatprep.subr.mxu0 0.0
    %5076 = vmatpush1.msra.mxu0 0.0
    %5077 = vmatprep.subr.mxu0 0.0
    %5078 = vmatpush1.msra.mxu0 0.0
    %5079 = vmatprep.subr.mxu0 0.0
    %5080 = vmatpush1.msra.mxu0 0.0
    %5081 = vmatprep.subr.mxu0 0.0
    %5082 = vmatpush1.msra.mxu0 0.0
    %5083 = vmatprep.subr.mxu0 0.0
    %5084 = vmatpush1.msra.mxu0 0.0
    %5085 = vmatprep.subr.mxu0 0.0
    %5086 = vmatpush1.msra.mxu0 0.0
    %5087 = vmatprep.subr.mxu0 0.0
    %5088 = vmatpush1.msra.mxu0 0.0
    %5089 = vmatprep.subr.mxu0 0.0
    %5090 = vmatpush1.msra.mxu0 0.0
    %5091 = vmatprep.subr.mxu0 0.0
    %5092 = vmatpush1.msra.mxu0 0.0
    %5093 = vmatprep.subr.mxu0 0.0
    %5094 = vmatpush1.msra.mxu0 0.0
    %5095 = vmatprep.subr.mxu0 0.0
    %5096 = vmatpush1.msra.mxu0 0.0
    %5097 = vmatprep.mubr.f32.mxu0 0.0
    %v5098 = vand.u32 %v4895, 4294901760
    %5099 = vmatmul.mubr.f32.gmra.mrb[0].mxu0 %v5098
    %v5100 = vpop.f32.mrb[0].mxu0
    %v5101 = vadd.f32 %v4980, %v5100
    %v5102 = vpop.f32.mrb[0].mxu0
    %5103 = vmatprep.mubr.f32.mxu0 0.0
    %v5104 = vand.u32 %v4898, 4294901760
    %5105 = vmatmul.mubr.f32.gmra.mrb[0].mxu0 %v5104
    %v5106 = vpop.f32.mrb[0].mxu0
    %v5107 = vadd.f32 %v4990, %v5106
    %v5108 = vpop.f32.mrb[0].mxu0
    %5109 = vdwg.mxu0
    %5110 = vmatprep.subr.mxu0 0.0
    %v5111 = vand.u32 %v4878, 4294901760
    %v5112 = vsub.f32 %v4878, %v5111
    %5113 = vmatpush1.msra.mxu0 %v5112
    %5114 = vmatprep.subr.mxu0 0.0
    %v5115 = vand.u32 %v4879, 4294901760
    %v5116 = vsub.f32 %v4879, %v5115
    %5117 = vmatpush1.msra.mxu0 %v5116
    %5118 = vmatprep.subr.mxu0 0.0
    %v5119 = vand.u32 %v4880, 4294901760
    %v5120 = vsub.f32 %v4880, %v5119
    %5121 = vmatpush1.msra.mxu0 %v5120
    %5122 = vmatprep.subr.mxu0 0.0
    %v5123 = vand.u32 %v4881, 4294901760
    %v5124 = vsub.f32 %v4881, %v5123
    %5125 = vmatpush1.msra.mxu0 %v5124
    %5126 = vmatprep.subr.mxu0 0.0
    %v5127 = vand.u32 %v4882, 4294901760
    %v5128 = vsub.f32 %v4882, %v5127
    %5129 = vmatpush1.msra.mxu0 %v5128
    %5130 = vmatprep.subr.mxu0 0.0
    %v5131 = vand.u32 %v4883, 4294901760
    %v5132 = vsub.f32 %v4883, %v5131
    %5133 = vmatpush1.msra.mxu0 %v5132
    %5134 = vmatprep.subr.mxu0 0.0
    %v5135 = vand.u32 %v4884, 4294901760
    %v5136 = vsub.f32 %v4884, %v5135
    %5137 = vmatpush1.msra.mxu0 %v5136
    %5138 = vmatprep.subr.mxu0 0.0
    %v5139 = vand.u32 %v4885, 4294901760
    %v5140 = vsub.f32 %v4885, %v5139
    %5141 = vmatpush1.msra.mxu0 %v5140
    %5142 = vmatprep.subr.mxu0 0.0
    %5143 = vmatpush1.msra.mxu0 0.0
    %5144 = vmatprep.subr.mxu0 0.0
    %5145 = vmatpush1.msra.mxu0 0.0
    %5146 = vmatprep.subr.mxu0 0.0
    %5147 = vmatpush1.msra.mxu0 0.0
    %5148 = vmatprep.subr.mxu0 0.0
    %5149 = vmatpush1.msra.mxu0 0.0
    %5150 = vmatprep.subr.mxu0 0.0
    %5151 = vmatpush1.msra.mxu0 0.0
    %5152 = vmatprep.subr.mxu0 0.0
    %5153 = vmatpush1.msra.mxu0 0.0
    %5154 = vmatprep.subr.mxu0 0.0
    %5155 = vmatpush1.msra.mxu0 0.0
    %5156 = vmatprep.subr.mxu0 0.0
    %5157 = vmatpush1.msra.mxu0 0.0
    %5158 = vmatprep.subr.mxu0 0.0
    %5159 = vmatpush1.msra.mxu0 0.0
    %5160 = vmatprep.subr.mxu0 0.0
    %5161 = vmatpush1.msra.mxu0 0.0
    %5162 = vmatprep.subr.mxu0 0.0
    %5163 = vmatpush1.msra.mxu0 0.0
    %5164 = vmatprep.subr.mxu0 0.0
    %5165 = vmatpush1.msra.mxu0 0.0
    %5166 = vmatprep.subr.mxu0 0.0
    %5167 = vmatpush1.msra.mxu0 0.0
    %5168 = vmatprep.subr.mxu0 0.0
    %5169 = vmatpush1.msra.mxu0 0.0
    %5170 = vmatprep.subr.mxu0 0.0
    %5171 = vmatpush1.msra.mxu0 0.0
    %5172 = vmatprep.subr.mxu0 0.0
    %5173 = vmatpush1.msra.mxu0 0.0
    %5174 = vmatprep.subr.mxu0 0.0
    %5175 = vmatpush1.msra.mxu0 0.0
    %5176 = vmatprep.subr.mxu0 0.0
    %5177 = vmatpush1.msra.mxu0 0.0
    %5178 = vmatprep.subr.mxu0 0.0
    %5179 = vmatpush1.msra.mxu0 0.0
    %5180 = vmatprep.subr.mxu0 0.0
    %5181 = vmatpush1.msra.mxu0 0.0
    %5182 = vmatprep.subr.mxu0 0.0
    %5183 = vmatpush1.msra.mxu0 0.0
    %5184 = vmatprep.subr.mxu0 0.0
    %5185 = vmatpush1.msra.mxu0 0.0
    %5186 = vmatprep.subr.mxu0 0.0
    %5187 = vmatpush1.msra.mxu0 0.0
    %5188 = vmatprep.subr.mxu0 0.0
    %5189 = vmatpush1.msra.mxu0 0.0
    %5190 = vmatprep.mubr.f32.mxu0 0.0
    %v5191 = vand.u32 %v4895, 4294901760
    %v5192 = vsub.f32 %v4895, %v5191
    %5193 = vmatmul.mubr.f32.gmra.mrb[0].mxu0 %v5192
    %v5194 = vpop.f32.mrb[0].mxu0
    %v5195 = vadd.f32 %v5101, %v5194
    %v5196 = vpop.f32.mrb[0].mxu0
    %5197 = vmatprep.mubr.f32.mxu0 0.0
    %v5198 = vand.u32 %v4898, 4294901760
    %v5199 = vsub.f32 %v4898, %v5198
    %5200 = vmatmul.mubr.f32.gmra.mrb[0].mxu0 %v5199
    %v5201 = vpop.f32.mrb[0].mxu0
    %v5202 = vadd.f32 %v5107, %v5201
    %v5203 = vpop.f32.mrb[0].mxu0
    %5204 = vdwg.mxu0
    %5205 = vmatprep.subr.mxu0 0.0
    %v5206 = vand.u32 %v4878, 4294901760
    %5207 = vmatpush1.msra.mxu0 %v5206
    %5208 = vmatprep.subr.mxu0 0.0
    %v5209 = vand.u32 %v4879, 4294901760
    %5210 = vmatpush1.msra.mxu0 %v5209
    %5211 = vmatprep.subr.mxu0 0.0
    %v5212 = vand.u32 %v4880, 4294901760
    %5213 = vmatpush1.msra.mxu0 %v5212
    %5214 = vmatprep.subr.mxu0 0.0
    %v5215 = vand.u32 %v4881, 4294901760
    %5216 = vmatpush1.msra.mxu0 %v5215
    %5217 = vmatprep.subr.mxu0 0.0
    %v5218 = vand.u32 %v4882, 4294901760
    %5219 = vmatpush1.msra.mxu0 %v5218
    %5220 = vmatprep.subr.mxu0 0.0
    %v5221 = vand.u32 %v4883, 4294901760
    %5222 = vmatpush1.msra.mxu0 %v5221
    %5223 = vmatprep.subr.mxu0 0.0
    %v5224 = vand.u32 %v4884, 4294901760
    %5225 = vmatpush1.msra.mxu0 %v5224
    %5226 = vmatprep.subr.mxu0 0.0
    %v5227 = vand.u32 %v4885, 4294901760
    %5228 = vmatpush1.msra.mxu0 %v5227
    %5229 = vmatprep.subr.mxu0 0.0
    %5230 = vmatpush1.msra.mxu0 0.0
    %5231 = vmatprep.subr.mxu0 0.0
    %5232 = vmatpush1.msra.mxu0 0.0
    %5233 = vmatprep.subr.mxu0 0.0
    %5234 = vmatpush1.msra.mxu0 0.0
    %5235 = vmatprep.subr.mxu0 0.0
    %5236 = vmatpush1.msra.mxu0 0.0
    %5237 = vmatprep.subr.mxu0 0.0
    %5238 = vmatpush1.msra.mxu0 0.0
    %5239 = vmatprep.subr.mxu0 0.0
    %5240 = vmatpush1.msra.mxu0 0.0
    %5241 = vmatprep.subr.mxu0 0.0
    %5242 = vmatpush1.msra.mxu0 0.0
    %5243 = vmatprep.subr.mxu0 0.0
    %5244 = vmatpush1.msra.mxu0 0.0
    %5245 = vmatprep.subr.mxu0 0.0
    %5246 = vmatpush1.msra.mxu0 0.0
    %5247 = vmatprep.subr.mxu0 0.0
    %5248 = vmatpush1.msra.mxu0 0.0
    %5249 = vmatprep.subr.mxu0 0.0
    %5250 = vmatpush1.msra.mxu0 0.0
    %5251 = vmatprep.subr.mxu0 0.0
    %5252 = vmatpush1.msra.mxu0 0.0
    %5253 = vmatprep.subr.mxu0 0.0
    %5254 = vmatpush1.msra.mxu0 0.0
    %5255 = vmatprep.subr.mxu0 0.0
    %5256 = vmatpush1.msra.mxu0 0.0
    %5257 = vmatprep.subr.mxu0 0.0
    %5258 = vmatpush1.msra.mxu0 0.0
    %5259 = vmatprep.subr.mxu0 0.0
    %5260 = vmatpush1.msra.mxu0 0.0
    %5261 = vmatprep.subr.mxu0 0.0
    %5262 = vmatpush1.msra.mxu0 0.0
    %5263 = vmatprep.subr.mxu0 0.0
    %5264 = vmatpush1.msra.mxu0 0.0
    %5265 = vmatprep.subr.mxu0 0.0
    %5266 = vmatpush1.msra.mxu0 0.0
    %5267 = vmatprep.subr.mxu0 0.0
    %5268 = vmatpush1.msra.mxu0 0.0
    %5269 = vmatprep.subr.mxu0 0.0
    %5270 = vmatpush1.msra.mxu0 0.0
    %5271 = vmatprep.subr.mxu0 0.0
    %5272 = vmatpush1.msra.mxu0 0.0
    %5273 = vmatprep.subr.mxu0 0.0
    %5274 = vmatpush1.msra.mxu0 0.0
    %5275 = vmatprep.subr.mxu0 0.0
    %5276 = vmatpush1.msra.mxu0 0.0
    %5277 = vmatprep.mubr.f32.mxu0 0.0
    %v5278 = vand.u32 %v4895, 4294901760
    %v5279 = vsub.f32 %v4895, %v5278
    %v5280 = vand.u32 %v5279, 4294901760
    %5281 = vmatmul.mubr.f32.gmra.mrb[0].mxu0 %v5280
    %v5282 = vpop.f32.mrb[0].mxu0
    %v5283 = vadd.f32 %v5195, %v5282
    %v5284 = vpop.f32.mrb[0].mxu0
    %5285 = vmatprep.mubr.f32.mxu0 0.0
    %v5286 = vand.u32 %v4898, 4294901760
    %v5287 = vsub.f32 %v4898, %v5286
    %v5288 = vand.u32 %v5287, 4294901760
    %5289 = vmatmul.mubr.f32.gmra.mrb[0].mxu0 %v5288
    %v5290 = vpop.f32.mrb[0].mxu0
    %v5291 = vadd.f32 %v5202, %v5290
    %v5292 = vpop.f32.mrb[0].mxu0
    %5293 = vdwg.mxu0
    %5294 = vmatprep.subr.mxu0 0.0
    %v5295 = vand.u32 %v4878, 4294901760
    %v5296 = vsub.f32 %v4878, %v5295
    %v5297 = vand.u32 %v5296, 4294901760
    %5298 = vmatpush1.msra.mxu0 %v5297
    %5299 = vmatprep.subr.mxu0 0.0
    %v5300 = vand.u32 %v4879, 4294901760
    %v5301 = vsub.f32 %v4879, %v5300
    %v5302 = vand.u32 %v5301, 4294901760
    %5303 = vmatpush1.msra.mxu0 %v5302
    %5304 = vmatprep.subr.mxu0 0.0
    %v5305 = vand.u32 %v4880, 4294901760
    %v5306 = vsub.f32 %v4880, %v5305
    %v5307 = vand.u32 %v5306, 4294901760
    %5308 = vmatpush1.msra.mxu0 %v5307
    %5309 = vmatprep.subr.mxu0 0.0
    %v5310 = vand.u32 %v4881, 4294901760
    %v5311 = vsub.f32 %v4881, %v5310
    %v5312 = vand.u32 %v5311, 4294901760
    %5313 = vmatpush1.msra.mxu0 %v5312
    %5314 = vmatprep.subr.mxu0 0.0
    %v5315 = vand.u32 %v4882, 4294901760
    %v5316 = vsub.f32 %v4882, %v5315
    %v5317 = vand.u32 %v5316, 4294901760
    %5318 = vmatpush1.msra.mxu0 %v5317
    %5319 = vmatprep.subr.mxu0 0.0
    %v5320 = vand.u32 %v4883, 4294901760
    %v5321 = vsub.f32 %v4883, %v5320
    %v5322 = vand.u32 %v5321, 4294901760
    %5323 = vmatpush1.msra.mxu0 %v5322
    %5324 = vmatprep.subr.mxu0 0.0
    %v5325 = vand.u32 %v4884, 4294901760
    %v5326 = vsub.f32 %v4884, %v5325
    %v5327 = vand.u32 %v5326, 4294901760
    %5328 = vmatpush1.msra.mxu0 %v5327
    %5329 = vmatprep.subr.mxu0 0.0
    %v5330 = vand.u32 %v4885, 4294901760
    %v5331 = vsub.f32 %v4885, %v5330
    %v5332 = vand.u32 %v5331, 4294901760
    %5333 = vmatpush1.msra.mxu0 %v5332
    %5334 = vmatprep.subr.mxu0 0.0
    %5335 = vmatpush1.msra.mxu0 0.0
    %5336 = vmatprep.subr.mxu0 0.0
    %5337 = vmatpush1.msra.mxu0 0.0
    %5338 = vmatprep.subr.mxu0 0.0
    %5339 = vmatpush1.msra.mxu0 0.0
    %5340 = vmatprep.subr.mxu0 0.0
    %5341 = vmatpush1.msra.mxu0 0.0
    %5342 = vmatprep.subr.mxu0 0.0
    %5343 = vmatpush1.msra.mxu0 0.0
    %5344 = vmatprep.subr.mxu0 0.0
    %5345 = vmatpush1.msra.mxu0 0.0
    %5346 = vmatprep.subr.mxu0 0.0
    %5347 = vmatpush1.msra.mxu0 0.0
    %5348 = vmatprep.subr.mxu0 0.0
    %5349 = vmatpush1.msra.mxu0 0.0
    %5350 = vmatprep.subr.mxu0 0.0
    %5351 = vmatpush1.msra.mxu0 0.0
    %5352 = vmatprep.subr.mxu0 0.0
    %5353 = vmatpush1.msra.mxu0 0.0
    %5354 = vmatprep.subr.mxu0 0.0
    %5355 = vmatpush1.msra.mxu0 0.0
    %5356 = vmatprep.subr.mxu0 0.0
    %5357 = vmatpush1.msra.mxu0 0.0
    %5358 = vmatprep.subr.mxu0 0.0
    %5359 = vmatpush1.msra.mxu0 0.0
    %5360 = vmatprep.subr.mxu0 0.0
    %5361 = vmatpush1.msra.mxu0 0.0
    %5362 = vmatprep.subr.mxu0 0.0
    %5363 = vmatpush1.msra.mxu0 0.0
    %5364 = vmatprep.subr.mxu0 0.0
    %5365 = vmatpush1.msra.mxu0 0.0
    %5366 = vmatprep.subr.mxu0 0.0
    %5367 = vmatpush1.msra.mxu0 0.0
    %5368 = vmatprep.subr.mxu0 0.0
    %5369 = vmatpush1.msra.mxu0 0.0
    %5370 = vmatprep.subr.mxu0 0.0
    %5371 = vmatpush1.msra.mxu0 0.0
    %5372 = vmatprep.subr.mxu0 0.0
    %5373 = vmatpush1.msra.mxu0 0.0
    %5374 = vmatprep.subr.mxu0 0.0
    %5375 = vmatpush1.msra.mxu0 0.0
    %5376 = vmatprep.subr.mxu0 0.0
    %5377 = vmatpush1.msra.mxu0 0.0
    %5378 = vmatprep.subr.mxu0 0.0
    %5379 = vmatpush1.msra.mxu0 0.0
    %5380 = vmatprep.subr.mxu0 0.0
    %5381 = vmatpush1.msra.mxu0 0.0
    %5382 = vmatprep.mubr.f32.mxu0 0.0
    %v5383 = vand.u32 %v4895, 4294901760
    %5384 = vmatmul.mubr.f32.gmra.mrb[0].mxu0 %v5383
    %v5385 = vpop.f32.mrb[0].mxu0
    %v5386 = vadd.f32 %v5283, %v5385
    %v5387 = vpop.f32.mrb[0].mxu0
    %5388 = vmatprep.mubr.f32.mxu0 0.0
    %v5389 = vand.u32 %v4898, 4294901760
    %5390 = vmatmul.mubr.f32.gmra.mrb[0].mxu0 %v5389
    %v5391 = vpop.f32.mrb[0].mxu0
    %v5392 = vadd.f32 %v5291, %v5391
    %v5393 = vpop.f32.mrb[0].mxu0
    %5394 = vdwg.mxu0
    %5395 = vmatprep.subr.mxu0 0.0
    %v5396 = vand.u32 %v4878, 4294901760
    %5397 = vmatpush1.msra.mxu0 %v5396
    %5398 = vmatprep.subr.mxu0 0.0
    %v5399 = vand.u32 %v4879, 4294901760
    %5400 = vmatpush1.msra.mxu0 %v5399
    %5401 = vmatprep.subr.mxu0 0.0
    %v5402 = vand.u32 %v4880, 4294901760
    %5403 = vmatpush1.msra.mxu0 %v5402
    %5404 = vmatprep.subr.mxu0 0.0
    %v5405 = vand.u32 %v4881, 4294901760
    %5406 = vmatpush1.msra.mxu0 %v5405
    %5407 = vmatprep.subr.mxu0 0.0
    %v5408 = vand.u32 %v4882, 4294901760
    %5409 = vmatpush1.msra.mxu0 %v5408
    %5410 = vmatprep.subr.mxu0 0.0
    %v5411 = vand.u32 %v4883, 4294901760
    %5412 = vmatpush1.msra.mxu0 %v5411
    %5413 = vmatprep.subr.mxu0 0.0
    %v5414 = vand.u32 %v4884, 4294901760
    %5415 = vmatpush1.msra.mxu0 %v5414
    %5416 = vmatprep.subr.mxu0 0.0
    %v5417 = vand.u32 %v4885, 4294901760
    %5418 = vmatpush1.msra.mxu0 %v5417
    %5419 = vmatprep.subr.mxu0 0.0
    %5420 = vmatpush1.msra.mxu0 0.0
    %5421 = vmatprep.subr.mxu0 0.0
    %5422 = vmatpush1.msra.mxu0 0.0
    %5423 = vmatprep.subr.mxu0 0.0
    %5424 = vmatpush1.msra.mxu0 0.0
    %5425 = vmatprep.subr.mxu0 0.0
    %5426 = vmatpush1.msra.mxu0 0.0
    %5427 = vmatprep.subr.mxu0 0.0
    %5428 = vmatpush1.msra.mxu0 0.0
    %5429 = vmatprep.subr.mxu0 0.0
    %5430 = vmatpush1.msra.mxu0 0.0
    %5431 = vmatprep.subr.mxu0 0.0
    %5432 = vmatpush1.msra.mxu0 0.0
    %5433 = vmatprep.subr.mxu0 0.0
    %5434 = vmatpush1.msra.mxu0 0.0
    %5435 = vmatprep.subr.mxu0 0.0
    %5436 = vmatpush1.msra.mxu0 0.0
    %5437 = vmatprep.subr.mxu0 0.0
    %5438 = vmatpush1.msra.mxu0 0.0
    %5439 = vmatprep.subr.mxu0 0.0
    %5440 = vmatpush1.msra.mxu0 0.0
    %5441 = vmatprep.subr.mxu0 0.0
    %5442 = vmatpush1.msra.mxu0 0.0
    %5443 = vmatprep.subr.mxu0 0.0
    %5444 = vmatpush1.msra.mxu0 0.0
    %5445 = vmatprep.subr.mxu0 0.0
    %5446 = vmatpush1.msra.mxu0 0.0
    %5447 = vmatprep.subr.mxu0 0.0
    %5448 = vmatpush1.msra.mxu0 0.0
    %5449 = vmatprep.subr.mxu0 0.0
    %5450 = vmatpush1.msra.mxu0 0.0
    %5451 = vmatprep.subr.mxu0 0.0
    %5452 = vmatpush1.msra.mxu0 0.0
    %5453 = vmatprep.subr.mxu0 0.0
    %5454 = vmatpush1.msra.mxu0 0.0
    %5455 = vmatprep.subr.mxu0 0.0
    %5456 = vmatpush1.msra.mxu0 0.0
    %5457 = vmatprep.subr.mxu0 0.0
    %5458 = vmatpush1.msra.mxu0 0.0
    %5459 = vmatprep.subr.mxu0 0.0
    %5460 = vmatpush1.msra.mxu0 0.0
    %5461 = vmatprep.subr.mxu0 0.0
    %5462 = vmatpush1.msra.mxu0 0.0
    %5463 = vmatprep.subr.mxu0 0.0
    %5464 = vmatpush1.msra.mxu0 0.0
    %5465 = vmatprep.subr.mxu0 0.0
    %5466 = vmatpush1.msra.mxu0 0.0
    %5467 = vmatprep.mubr.f32.mxu0 0.0
    %v5468 = vand.u32 %v4895, 4294901760
    %5469 = vmatmul.mubr.f32.gmra.mrb[0].mxu0 %v5468
    %v5470 = vpop.f32.mrb[0].mxu0
    %v5471 = vadd.f32 %v5386, %v5470
    %v5472 = vpop.f32.mrb[0].mxu0
    %5473 = vmatprep.mubr.f32.mxu0 0.0
    %v5474 = vand.u32 %v4898, 4294901760
    %5475 = vmatmul.mubr.f32.gmra.mrb[0].mxu0 %v5474
    %v5476 = vpop.f32.mrb[0].mxu0
    %v5477 = vadd.f32 %v5392, %v5476
    %v5478 = vpop.f32.mrb[0].mxu0
    %5479 = vdwg.mxu0
    %5480 = vst.msk [vmem:[#allocation2] sm:$0xff] %vm31, %v5471
    %5481 = vst.msk [vmem:[#allocation2 + $0x8] sm:$0xff] %vm31, %v5477
    // Predicated region
    $region22: #{tpu_custom_call.1} parent=1 // pred_check
      _
    $region23: #{tpu_custom_call.1} parent=1 // pred_check_branch
      %5483 = sbr.rel (0) target = $region25
    $region24: #{tpu_custom_call.1} parent=1 // pred_region
      %s5485 = ssub.s32 256, 256
      %5486 = vsyncadd [#allocation3], %s5485
      %s5487 = sshll.u32 [#allocation2], 4
      %s5488 = int_to_ptr.vmem [resolvable:$true] %s5487
      %5493 = dma.vmem_to_hbm [thread:$0]  %s5488, 256, %s5, [#allocation3], 128, 128, 8
    $region25: #{tpu_custom_call.1} parent=1 // pred_fallthru
      _
    // Predicated region
    $region26: #{tpu_custom_call.1} parent=1 // pred_check
      _
    $region27: #{tpu_custom_call.1} parent=1 // pred_check_branch
      %5495 = sbr.rel (0) target = $region29
    $region28: #{tpu_custom_call.1} parent=1 // pred_region
      %5496 = dma.done [#allocation3], 256
    $region29: #{tpu_custom_call.1} parent=1 // pred_fallthru
      _
    %5497 = vsyncpa [#allocation3], 1

</llo_original>
